<compile_context>
chip_gen: v5e
topology: v5e:2x2
jax: 0.10.0
libtpu: 0.0.40
codegen_flags: <defaults>
</compile_context>

<pallas_src>
import math

import jax
import jax.numpy as jnp
from jax import lax
from jax.experimental import pallas as pl
from jax.experimental.pallas import tpu as pltpu


# ---------------------------------------------------------------------------
# Small helpers
# ---------------------------------------------------------------------------
def _round_up(v, m):
    return ((v + m - 1) // m) * m


def _nbytes(shape, dtype):
    return math.prod(shape) * jnp.dtype(dtype).itemsize


# ---------------------------------------------------------------------------
# Kernel
# ---------------------------------------------------------------------------
def _make_kernel(dilation_rate: int):
    def kernel(x_ref, m_ref, pre_w_ref, pre_b_ref, in_w_ref, in_b_ref,
               rs_w_ref, rs_b_ref, rsl_w_ref, rsl_b_ref,
               post_w_ref, post_b_ref, o_ref, hp_ref):
        # x_ref      : (1, 1, Wext, C)   input window (time x channel), C = channels
        # m_ref      : (1, 1, Wext, 1)   mask window
        # pre_w_ref  : (half, H)         pre 1x1-conv weight              [mxu dtype]
        # pre_b_ref  : (1, H)
        # in_w_ref   : (L, K, H, 2H) per-tap  OR  (L, K*H, 2H) im2col    [mxu dtype]
        # in_b_ref   : (L, 1, 2H)
        # rs_w_ref   : (max(L-1,1), H, 2H)  res/skip 1x1 weights          [mxu dtype]
        # rs_b_ref   : (max(L-1,1), 1, 2H)
        # rsl_w_ref  : (H, H)            last layer: skip-only 1x1        [mxu dtype]
        # rsl_b_ref  : (1, H)
        # post_w_ref : (H, OP)           post 1x1 weight, zero-padded to OP lanes
        # post_b_ref : (1, OP)
        # o_ref      : (1, Tt, OP)       lanes [0,half)=new x1, [half,2*half)=logs
        # hp_ref     : (Wext + 2*padmax, H)  zero-halo time scratch       [mxu dtype]
        Wext = x_ref.shape[2]
        C = x_ref.shape[3]
        half = C // 2
        Tt = o_ref.shape[1]
        OP = o_ref.shape[2]
        halo = (Wext - Tt) // 2
        H = rsl_w_ref.shape[0]
        n_layers = in_w_ref.shape[0]
        per_tap = (in_w_ref.ndim == 4)
        K = in_w_ref.shape[1] if per_tap else in_w_ref.shape[1] // H
        pad_taps = (K - 1) // 2
        padmax = (hp_ref.shape[0] - Wext) // 2
        cdt = hp_ref.dtype                  # MXU operand dtype (bf16 or f32)

        x = x_ref[0, 0]                     # (Wext, C)  f32
        mask = m_ref[0, 0]                  # (Wext, 1)  f32
        x0 = x[:, :half]
        x1c = x[halo:halo + Tt, half:]      # (Tt, half)  centre rows only
        mask_c = mask[halo:halo + Tt]       # (Tt, 1)

        # Only the halo rows of the scratch must be zero (they are never written
        # elsewhere; centre rows are fully rewritten every layer).  Re-zero each
        # step: with megacore each core has its own scratch, so a one-time
        # program_id==0 init would leave the second core stale.
        if padmax > 0:
            zero_halo = jnp.zeros((padmax, H), cdt)
            hp_ref[pl.ds(0, padmax), :] = zero_halo
            hp_ref[pl.ds(padmax + Wext, padmax), :] = zero_halo

        # pre: 1x1 conv + mask -> running WN activation (carried in f32)
        xw = (jnp.dot(x0.astype(cdt), pre_w_ref[...],
                      preferred_element_type=jnp.float32)
              + pre_b_ref[...]) * mask                           # (Wext, H)

        skip = jnp.zeros((Tt, H), jnp.float32)

        for i in range(n_layers):
            dil = dilation_rate ** i
            # write the (already masked) activation into the scratch centre
            hp_ref[pl.ds(padmax, Wext), :] = xw.astype(cdt)
            if per_tap:
                # K accumulating dots (H not a multiple of 128: avoids lane
                # stitching of misaligned concatenated slabs).
                x_in = jnp.zeros((Wext, 2 * H), jnp.float32)
                for j in range(K):
                    tap = hp_ref[pl.ds(padmax + (j - pad_taps) * dil, Wext), :]
                    x_in = x_in + jnp.dot(tap, in_w_ref[i, j],
                                          preferred_element_type=jnp.float32)
            else:
                # im2col: K static shifted slices -> one wide-contraction matmul
                taps = [hp_ref[pl.ds(padmax + (j - pad_taps) * dil, Wext), :]
                        for j in range(K)]
                slab = taps[0] if K == 1 else jnp.concatenate(taps, axis=-1)
                x_in = jnp.dot(slab, in_w_ref[i],
                               preferred_element_type=jnp.float32)
            x_in = x_in + in_b_ref[i]                            # (Wext, 2H) f32
            # fused_add_tanh_sigmoid_multiply with g = 0; sigmoid -> EUP slot
            acts = jnp.tanh(x_in[:, :H]) * jax.nn.sigmoid(x_in[:, H:])
            if i < n_layers - 1:
                rs = (jnp.dot(acts.astype(cdt), rs_w_ref[i],
                              preferred_element_type=jnp.float32)
                      + rs_b_ref[i])                             # (Wext, 2H)
                xw = (xw + rs[:, :H]) * mask                     # residual path
                skip = skip + rs[halo:halo + Tt, H:]             # skip (centre)
            else:
                # last layer: skip-only, unpadded (H, H) matmul on centre rows
                rs = (jnp.dot(acts[halo:halo + Tt].astype(cdt), rsl_w_ref[...],
                              preferred_element_type=jnp.float32)
                      + rsl_b_ref[...])                          # (Tt, H)
                skip = skip + rs

        skip = skip * mask_c                                     # WN output
        # post 1x1 conv into a lane-dense OP-wide block:
        #   lanes [0, half) -> m, [half, 2*half) -> logs, rest -> 0 (padded w/b)
        stats = (jnp.dot(skip.astype(cdt), post_w_ref[...],
                         preferred_element_type=jnp.float32)
                 + post_b_ref[...]) * mask_c                     # (Tt, OP)
        logs = stats[:, half:2 * half]                           # (Tt, half)
        x1_term = x1c * jnp.exp(logs) * mask_c                   # (Tt, half)
        out = stats + jnp.concatenate(
            [x1_term, jnp.zeros((Tt, OP - half), jnp.float32)], axis=-1)
        o_ref[0] = out.astype(o_ref.dtype)

    return kernel


# ---------------------------------------------------------------------------
# Parameter packing
# ---------------------------------------------------------------------------
def pack_params(params, mxu_dtype, op_width):
    """Math-layout params -> stacked kernel tensors (see kernel docstring)."""
    pre_w, pre_b, in_w, in_b, rs_w, rs_b, post_w, post_b = params
    n_layers = len(in_w)
    K, H, H2 = in_w[0].shape
    half2 = post_w.shape[1]
    assert op_width >= half2

    fuse_taps = (H % 128 == 0)
    if fuse_taps:
        in_w_k = jnp.stack([w.reshape(K * H, H2) for w in in_w]).astype(mxu_dtype)
    else:
        in_w_k = jnp.stack(in_w).astype(mxu_dtype)                 # (L, K, H, 2H)
    in_b_k = jnp.stack([b[None, :] for b in in_b]).astype(jnp.float32)

    if n_layers > 1:
        rs_w_k = jnp.stack(rs_w[:-1]).astype(mxu_dtype)            # (L-1, H, 2H)
        rs_b_k = jnp.stack([b[None, :] for b in rs_b[:-1]]).astype(jnp.float32)
    else:  # dummy (never indexed)
        rs_w_k = jnp.zeros((1, H, H2), mxu_dtype)
        rs_b_k = jnp.zeros((1, 1, H2), jnp.float32)
    rsl_w_k = rs_w[-1].astype(mxu_dtype)                           # (H, H)
    rsl_b_k = rs_b[-1][None, :].astype(jnp.float32)                # (1, H)

    post_w_k = jnp.zeros((H, op_width), jnp.float32).at[:, :half2].set(post_w)
    post_b_k = jnp.zeros((1, op_width), jnp.float32).at[:, :half2].set(post_b[None, :])
    return (pre_w.astype(mxu_dtype), pre_b[None, :].astype(jnp.float32),
            in_w_k, in_b_k, rs_w_k, rs_b_k, rsl_w_k, rsl_b_k,
            post_w_k.astype(mxu_dtype), post_b_k)


# ---------------------------------------------------------------------------
# Wrapper
# ---------------------------------------------------------------------------
def residual_coupling_forward(x, x_mask, params, *, dilation_rate=1,
                              mxu_dtype=jnp.bfloat16, t_tile=256,
                              single_buffer_weights=True):
    """ResidualCouplingLayer.forward (reverse=False, g=None, mean_only=False).

    x: (B, channels, T), x_mask: (B, 1, T) -> (x_out (B, channels, T), logdet (B,))
    """
    B, C, T = x.shape
    assert C % 2 == 0, "channels should be divisible by 2"
    half = C // 2
    op_width = max(128, _round_up(2 * half, 128))           # lane-dense output

    packed = pack_params(params, mxu_dtype, op_width)
    (pre_w_k, pre_b_k, in_w_k, in_b_k, rs_w_k, rs_b_k,
     rsl_w_k, rsl_b_k, post_w_k, post_b_k) = packed
    n_layers = in_w_k.shape[0]
    H = rsl_w_k.shape[0]
    per_tap = (in_w_k.ndim == 4)
    K = in_w_k.shape[1] if per_tap else in_w_k.shape[1] // H
    pad_taps = (K - 1) // 2
    padmax = pad_taps * (dilation_rate ** (n_layers - 1))
    # Receptive-field halo for exact recompute inside each time tile.
    R = pad_taps * sum(dilation_rate ** i for i in range(n_layers))
    Rh = _round_up(R, 8) if R > 0 else 0

    Tt = min(_round_up(max(int(t_tile), 8), 8), _round_up(T, 8))
    nt = -(-T // Tt)
    Tpad = nt * Tt
    Wext = Tt + 2 * Rh

    # NCT -> NTC, zero-padded by the halo, then gathered into overlapping
    # windows so the kernel only needs standard Blocked BlockSpecs.
    x_t = jnp.transpose(x, (0, 2, 1)).astype(jnp.float32)             # (B, T, C)
    m_t = jnp.transpose(x_mask, (0, 2, 1)).astype(jnp.float32)        # (B, T, 1)
    x_pad = jnp.zeros((B, Tpad + 2 * Rh, C), jnp.float32).at[:, Rh:Rh + T, :].set(x_t)
    m_pad = jnp.zeros((B, Tpad + 2 * Rh, 1), jnp.float32).at[:, Rh:Rh + T, :].set(m_t)
    win_idx = (jnp.arange(nt) * Tt)[:, None] + jnp.arange(Wext)[None, :]
    x_win = jnp.take(x_pad, win_idx, axis=1)                          # (B, nt, Wext, C)
    m_win = jnp.take(m_pad, win_idx, axis=1)                          # (B, nt, Wext, 1)

    # --- cost estimate ------------------------------------------------------
    per_tile = 2 * Wext * half * H
    per_tile += n_layers * (2 * Wext * K * H * 2 * H)
    per_tile += max(n_layers - 1, 0) * (2 * Wext * H * 2 * H)
    per_tile += 2 * Tt * H * H                       # last-layer skip matmul
    per_tile += 2 * Tt * H * op_width                # post (padded lanes)
    flops = B * nt * (per_tile + 8 * Wext * H * n_layers)
    transc = B * nt * (n_layers * 2 * Wext * H + Tt * half)
    wbytes = sum(_nbytes(a.shape, a.dtype) for a in packed)
    bytes_accessed = (_nbytes(x_win.shape, jnp.float32)
                      + _nbytes(m_win.shape, jnp.float32)
                      + _nbytes((B, Tpad, op_width), jnp.float32) + wbytes)
    cost = pl.CostEstimate(flops=int(flops), transcendentals=int(transc),
                           bytes_accessed=int(bytes_accessed))

    # --- VMEM budget: actual blocks + weights + scratch + f32 intermediates --
    blk2x = 2 * (_nbytes((1, 1, Wext, C), jnp.float32)
                 + _nbytes((1, 1, Wext, 1), jnp.float32)
                 + _nbytes((1, Tt, op_width), jnp.float32))
    scratch_b = _nbytes((Wext + 2 * padmax, H), mxu_dtype)
    interm = 4 * Wext * (H + 2 * H + H + 2 * H) + 4 * Tt * (H + op_width)
    est = blk2x + 2 * wbytes + scratch_b + 2 * interm + (2 << 20)
    try:
        phys = int(pltpu.get_tpu_info().vmem_capacity_bytes)
    except Exception:
        phys = 64 * 1024 * 1024
    cap = (phys * 3) // 4
    vmem_limit = int(min(cap, max(16 * 1024 * 1024, est)))

    kernel = _make_kernel(dilation_rate)
    out_shape = jax.ShapeDtypeStruct((B, Tpad, op_width), jnp.float32)
    grid = (B, nt)

    def run(weight_mode):
        wkw = {} if weight_mode is None else {"pipeline_mode": weight_mode}

        def wspec(shape):
            n = len(shape)
            return pl.BlockSpec(shape, lambda b, t, _n=n: (0,) * _n, **wkw)

        in_specs = [
            pl.BlockSpec((1, 1, Wext, C), lambda b, t: (b, t, 0, 0)),
            pl.BlockSpec((1, 1, Wext, 1), lambda b, t: (b, t, 0, 0)),
            wspec(pre_w_k.shape), wspec(pre_b_k.shape),
            wspec(in_w_k.shape), wspec(in_b_k.shape),
            wspec(rs_w_k.shape), wspec(rs_b_k.shape),
            wspec(rsl_w_k.shape), wspec(rsl_b_k.shape),
            wspec(post_w_k.shape), wspec(post_b_k.shape),
        ]
        out_specs = pl.BlockSpec((1, Tt, op_width), lambda b, t: (b, t, 0))
        return pl.pallas_call(
            kernel,
            out_shape=out_shape,
            grid=grid,
            in_specs=in_specs,
            out_specs=out_specs,
            scratch_shapes=[pltpu.VMEM((Wext + 2 * padmax, H), mxu_dtype)],
            compiler_params=pltpu.CompilerParams(
                dimension_semantics=("parallel", "parallel"),
                vmem_limit_bytes=vmem_limit),
            cost_estimate=cost,
        )(x_win, m_win, pre_w_k, pre_b_k, in_w_k, in_b_k,
          rs_w_k, rs_b_k, rsl_w_k, rsl_b_k, post_w_k, post_b_k)

    if single_buffer_weights:
        try:
            out = run(pl.Buffered(1))        # weights: single-buffered VMEM
            jax.block_until_ready(out)
        except Exception:                    # fall back to default buffering
            out = run(None)
    else:
        out = run(None)

    out = out[:, :T, :]
    x1_new = jnp.transpose(out[:, :, :half], (0, 2, 1)).astype(x.dtype)
    logdet = jnp.sum(out[:, :, half:2 * half], axis=(1, 2))
    x_out = jnp.concatenate([x[:, :half, :], x1_new], axis=1)
    return x_out, logdet


# ---------------------------------------------------------------------------
# Parameters & pure-JAX reference
# ---------------------------------------------------------------------------
def init_params(key, channels, hidden_channels, kernel_size, n_layers):
    """Deterministic parameters in 'math' layout (y = x @ w + b).

    Note: the PyTorch module zero-initialises `post` (which would make the
    output trivially x1 * mask); we give `post` small random weights so the
    numerical check exercises the full WN path.  The forward math is unchanged.
    """
    half = channels // 2
    H, K = hidden_channels, kernel_size
    keys = jax.random.split(key, 4 + 4 * n_layers)

    def uniform(k, shape, fan_in):
        bound = 1.0 / math.sqrt(fan_in)
        return jax.random.uniform(k, shape, jnp.float32, -bound, bound)

    pre_w = uniform(keys[0], (half, H), half)
    pre_b = uniform(keys[1], (H,), half)
    in_w, in_b, rs_w, rs_b = [], [], [], []
    for i in range(n_layers):
        kw, kb, krw, krb = keys[2 + 4 * i: 6 + 4 * i]
        in_w.append(uniform(kw, (K, H, 2 * H), H * K))     # (tap, in, out)
        in_b.append(uniform(kb, (2 * H,), H * K))
        rs_ch = 2 * H if i < n_layers - 1 else H
        rs_w.append(uniform(krw, (H, rs_ch), H))
        rs_b.append(uniform(krb, (rs_ch,), H))
    post_w = uniform(keys[2 + 4 * n_layers], (H, 2 * half), H) * 0.25
    post_b = uniform(keys[3 + 4 * n_layers], (2 * half,), H) * 0.25
    return (pre_w, pre_b, in_w, in_b, rs_w, rs_b, post_w, post_b)


def reference(x, x_mask, params, *, dilation_rate=1, mxu_dtype=jnp.float32):
    """Pure-JAX NCT reference of ResidualCouplingLayer.forward (reverse=False).

    Operands are quantised to `mxu_dtype` (to mirror the kernel's MXU-operand
    casts) but the dots themselves run in f32, so this works on any backend
    (avoids the unsupported BF16 x BF16 = F32 dot on CPU/interpret).
    """
    pre_w, pre_b, in_w, in_b, rs_w, rs_b, post_w, post_b = params
    B, C, T = x.shape
    half = C // 2
    H = pre_w.shape[1]
    n_layers = len(in_w)
    K = in_w[0].shape[0]
    prec = lax.Precision.HIGHEST

    def q(a):                                    # emulate MXU operand rounding
        return a.astype(mxu_dtype).astype(jnp.float32)

    def mm1x1(h, w, b):                          # (B,Ci,T) x (Ci,Co)
        y = jnp.einsum('bct,co->bot', q(h), q(w), precision=prec)
        return y + b[None, :, None]

    x0, x1 = x[:, :half], x[:, half:]
    h = mm1x1(x0, pre_w, pre_b) * x_mask         # pre
    skip = jnp.zeros((B, H, T), jnp.float32)
    for i in range(n_layers):
        dil = dilation_rate ** i
        pad = dil * (K - 1) // 2
        w_oih = jnp.transpose(in_w[i], (2, 1, 0))     # (2H, H, K)
        x_in = lax.conv_general_dilated(
            q(h), q(w_oih), window_strides=(1,),
            padding=[(pad, pad)], rhs_dilation=(dil,),
            dimension_numbers=('NCH', 'OIH', 'NCH'), precision=prec)
        x_in = x_in + in_b[i][None, :, None]
        acts = jnp.tanh(x_in[:, :H]) * jax.nn.sigmoid(x_in[:, H:])
        rs = mm1x1(acts, rs_w[i], rs_b[i])
        if i < n_layers - 1:
            h = (h + rs[:, :H]) * x_mask
            skip = skip + rs[:, H:]
        else:
            skip = skip + rs
    enc = skip * x_mask
    stats = mm1x1(enc, post_w, post_b) * x_mask
    m, logs = stats[:, :half], stats[:, half:]
    x1n = m + x1 * jnp.exp(logs) * x_mask
    x_out = jnp.concatenate([x0, x1n], axis=1)
    logdet = jnp.sum(logs, axis=(1, 2))
    return x_out, logdet


if __name__ == "__main__":
    # Small shapes consistent with the module: batch=2, channels=4 (half=2),
    # hidden=32, kernel_size=3, dilation_rate=1, n_layers=3, T=16.
    B, C, Hh, K, DIL, L, T = 2, 4, 32, 3, 1, 3, 16
    key = jax.random.PRNGKey(0)
    kx, kp = jax.random.split(key)
    x = jax.random.normal(kx, (B, C, T), jnp.float32)
    lengths = jnp.array([T, T // 2])
    x_mask = (jnp.arange(T)[None, None, :] < lengths[:, None, None]).astype(jnp.float32)
    params = init_params(kp, C, Hh, K, L)

    yr, ldr = reference(x, x_mask, params, dilation_rate=DIL,
                        mxu_dtype=jnp.float32)

    # 1) f32 MXU-operand path, time-tiled (t_tile=8 -> 2 tiles + halo recompute).
    y32, ld32 = residual_coupling_forward(
        x, x_mask, params, dilation_rate=DIL, mxu_dtype=jnp.float32, t_tile=8)
    jax.block_until_ready((y32, ld32))
    assert y32.shape == (B, C, T) and ld32.shape == (B,)
    assert jnp.allclose(y32, yr, atol=5e-3, rtol=5e-3), \
        float(jnp.max(jnp.abs(y32 - yr)))
    assert jnp.allclose(ld32, ldr, atol=5e-3, rtol=5e-3), \
        float(jnp.max(jnp.abs(ld32 - ldr)))

    # 2) f32, single time tile (t_tile >= T): exercises the untiled path.
    y1, ld1 = residual_coupling_forward(
        x, x_mask, params, dilation_rate=DIL, mxu_dtype=jnp.float32, t_tile=256)
    jax.block_until_ready((y1, ld1))
    assert jnp.allclose(y1, yr, atol=5e-3, rtol=5e-3), \
        float(jnp.max(jnp.abs(y1 - yr)))
    assert jnp.allclose(ld1, ldr, atol=5e-3, rtol=5e-3), \
        float(jnp.max(jnp.abs(ld1 - ldr)))

    # 3) bf16-MXU performance path, checked against the bf16-operand-quantised
    #    reference (differences are accumulation order only).
    ybf, ldbf = residual_coupling_forward(
        x, x_mask, params, dilation_rate=DIL, mxu_dtype=jnp.bfloat16, t_tile=8)
    jax.block_until_ready((ybf, ldbf))
    yrb, ldrb = reference(x, x_mask, params, dilation_rate=DIL,
                          mxu_dtype=jnp.bfloat16)
    assert jnp.allclose(ybf, yrb, atol=2e-2, rtol=2e-2), \
        float(jnp.max(jnp.abs(ybf - yrb)))
    assert jnp.allclose(ldbf, ldrb, atol=1e-1, rtol=5e-2), \
        float(jnp.max(jnp.abs(ldbf - ldrb)))

    print("KERNEL_OK")
</pallas_src>

<mosaic_0001>
module attributes {stable_mosaic.version = 11 : i64} {
  func.func @kernel(%arg0: i32, %arg1: i32, %arg2: memref<1x1x24x4xf32, #tpu.memory_space<vmem>>, %arg3: memref<1x1x24x1xf32, #tpu.memory_space<vmem>>, %arg4: memref<2x32xf32, #tpu.memory_space<vmem>>, %arg5: memref<1x32xf32, #tpu.memory_space<vmem>>, %arg6: memref<3x3x32x64xf32, #tpu.memory_space<vmem>>, %arg7: memref<3x1x64xf32, #tpu.memory_space<vmem>>, %arg8: memref<2x32x64xf32, #tpu.memory_space<vmem>>, %arg9: memref<2x1x64xf32, #tpu.memory_space<vmem>>, %arg10: memref<32x32xf32, #tpu.memory_space<vmem>>, %arg11: memref<1x32xf32, #tpu.memory_space<vmem>>, %arg12: memref<32x128xf32, #tpu.memory_space<vmem>>, %arg13: memref<1x128xf32, #tpu.memory_space<vmem>>, %arg14: memref<1x8x128xf32, #tpu.memory_space<vmem>>, %arg15: memref<26x32xf32, #tpu.memory_space<vmem>>) attributes {dimension_semantics = [#tpu.dimension_semantics<parallel>, #tpu.dimension_semantics<parallel>], iteration_bounds = array<i64: 2, 2>, scalar_prefetch = 0 : i64, scratch_operands = 1 : i64, tpu.core_type = #tpu.core_type<tc>, window_params = [{transform_indices = @transform_0, window_bounds = array<i64: 1, 1, 24, 4>}, {transform_indices = @transform_1, window_bounds = array<i64: 1, 1, 24, 1>}, {pipeline_mode = #tpu.pipeline_mode<synchronous>, transform_indices = @transform_2, window_bounds = array<i64: 2, 32>}, {pipeline_mode = #tpu.pipeline_mode<synchronous>, transform_indices = @transform_3, window_bounds = array<i64: 1, 32>}, {pipeline_mode = #tpu.pipeline_mode<synchronous>, transform_indices = @transform_4, window_bounds = array<i64: 3, 3, 32, 64>}, {pipeline_mode = #tpu.pipeline_mode<synchronous>, transform_indices = @transform_5, window_bounds = array<i64: 3, 1, 64>}, {pipeline_mode = #tpu.pipeline_mode<synchronous>, transform_indices = @transform_6, window_bounds = array<i64: 2, 32, 64>}, {pipeline_mode = #tpu.pipeline_mode<synchronous>, transform_indices = @transform_7, window_bounds = array<i64: 2, 1, 64>}, {pipeline_mode = #tpu.pipeline_mode<synchronous>, transform_indices = @transform_8, window_bounds = array<i64: 32, 32>}, {pipeline_mode = #tpu.pipeline_mode<synchronous>, transform_indices = @transform_9, window_bounds = array<i64: 1, 32>}, {pipeline_mode = #tpu.pipeline_mode<synchronous>, transform_indices = @transform_10, window_bounds = array<i64: 32, 128>}, {pipeline_mode = #tpu.pipeline_mode<synchronous>, transform_indices = @transform_11, window_bounds = array<i64: 1, 128>}, {transform_indices = @transform_12, window_bounds = array<i64: 1, 8, 128>}]} {
    %c0 = arith.constant 0 : index
    %c0_0 = arith.constant 0 : index
    %c0_1 = arith.constant 0 : index
    %c0_2 = arith.constant 0 : index
    %0 = vector.load %arg2[%c0, %c0_0, %c0_1, %c0_2] : memref<1x1x24x4xf32, #tpu.memory_space<vmem>>, vector<1x1x24x4xf32>
    %1 = vector.shape_cast %0 : vector<1x1x24x4xf32> to vector<24x4xf32>
    %c0_3 = arith.constant 0 : index
    %c0_4 = arith.constant 0 : index
    %c0_5 = arith.constant 0 : index
    %c0_6 = arith.constant 0 : index
    %2 = vector.load %arg3[%c0_3, %c0_4, %c0_5, %c0_6] : memref<1x1x24x1xf32, #tpu.memory_space<vmem>>, vector<1x1x24x1xf32>
    %3 = vector.shape_cast %2 : vector<1x1x24x1xf32> to vector<24x1xf32>
    %4 = vector.extract_strided_slice %1 {offsets = [0, 0], sizes = [24, 2], strides = [1, 1]} : vector<24x4xf32> to vector<24x2xf32>
    %5 = vector.extract_strided_slice %1 {offsets = [8, 2], sizes = [8, 2], strides = [1, 1]} : vector<24x4xf32> to vector<8x2xf32>
    %6 = vector.extract_strided_slice %3 {offsets = [8, 0], sizes = [8, 1], strides = [1, 1]} : vector<24x1xf32> to vector<8x1xf32>
    %cst = arith.constant 0.000000e+00 : f32
    %7 = vector.broadcast %cst : f32 to vector<1x32xf32>
    %c0_7 = arith.constant 0 : index
    %c0_8 = arith.constant 0 : index
    %8 = vector.load %arg15[%c0_7, %c0_8] : memref<26x32xf32, #tpu.memory_space<vmem>>, vector<1x32xf32>
    tpu.vector_store %arg15[%c0_7, %c0_8], %7 {strides = array<i32>} : memref<26x32xf32, #tpu.memory_space<vmem>>, vector<1x32xf32>,
    %c25 = arith.constant 25 : index
    %c0_9 = arith.constant 0 : index
    %9 = vector.load %arg15[%c25, %c0_9] : memref<26x32xf32, #tpu.memory_space<vmem>>, vector<1x32xf32>
    tpu.vector_store %arg15[%c25, %c0_9], %7 {strides = array<i32>} : memref<26x32xf32, #tpu.memory_space<vmem>>, vector<1x32xf32>,
    %c0_10 = arith.constant 0 : index
    %c0_11 = arith.constant 0 : index
    %10 = vector.load %arg4[%c0_10, %c0_11] : memref<2x32xf32, #tpu.memory_space<vmem>>, vector<2x32xf32>
    %cst_12 = arith.constant dense<0.000000e+00> : vector<24x32xf32>
    %11 = tpu.matmul %4, %10, %cst_12 {dimension_numbers = #tpu.dot_dimension_numbers<[1], [0], [0], [1], [0, 0, 1, 1], [], []>} : vector<24x2xf32>, vector<2x32xf32>, vector<24x32xf32> -> vector<24x32xf32>
    %c0_13 = arith.constant 0 : index
    %c0_14 = arith.constant 0 : index
    %12 = vector.load %arg5[%c0_13, %c0_14] : memref<1x32xf32, #tpu.memory_space<vmem>>, vector<1x32xf32>
    %13 = vector.broadcast %12 : vector<1x32xf32> to vector<24x32xf32>
    %14 = arith.addf %11, %13 : vector<24x32xf32>
    %15 = vector.broadcast %3 : vector<24x1xf32> to vector<24x32xf32>
    %16 = arith.mulf %14, %15 : vector<24x32xf32>
    %cst_15 = arith.constant 0.000000e+00 : f32
    %17 = vector.broadcast %cst_15 : f32 to vector<8x32xf32>
    %c1 = arith.constant 1 : index
    %c0_16 = arith.constant 0 : index
    %18 = vector.load %arg15[%c1, %c0_16] : memref<26x32xf32, #tpu.memory_space<vmem>>, vector<24x32xf32>
    tpu.vector_store %arg15[%c1, %c0_16], %16 {strides = array<i32>} : memref<26x32xf32, #tpu.memory_space<vmem>>, vector<24x32xf32>,
    %cst_17 = arith.constant 0.000000e+00 : f32
    %19 = vector.broadcast %cst_17 : f32 to vector<24x64xf32>
    %c0_18 = arith.constant 0 : index
    %c0_19 = arith.constant 0 : index
    %20 = vector.load %arg15[%c0_18, %c0_19] : memref<26x32xf32, #tpu.memory_space<vmem>>, vector<24x32xf32>
    %c0_20 = arith.constant 0 : index
    %c0_21 = arith.constant 0 : index
    %c0_22 = arith.constant 0 : index
    %c0_23 = arith.constant 0 : index
    %21 = vector.load %arg6[%c0_20, %c0_21, %c0_22, %c0_23] : memref<3x3x32x64xf32, #tpu.memory_space<vmem>>, vector<1x1x32x64xf32>
    %22 = vector.shape_cast %21 : vector<1x1x32x64xf32> to vector<32x64xf32>
    %cst_24 = arith.constant dense<0.000000e+00> : vector<24x64xf32>
    %23 = tpu.matmul %20, %22, %cst_24 {dimension_numbers = #tpu.dot_dimension_numbers<[1], [0], [0], [1], [0, 0, 1, 1], [], []>} : vector<24x32xf32>, vector<32x64xf32>, vector<24x64xf32> -> vector<24x64xf32>
    %24 = arith.addf %19, %23 : vector<24x64xf32>
    %c1_25 = arith.constant 1 : index
    %c0_26 = arith.constant 0 : index
    %25 = vector.load %arg15[%c1_25, %c0_26] : memref<26x32xf32, #tpu.memory_space<vmem>>, vector<24x32xf32>
    %c0_27 = arith.constant 0 : index
    %c1_28 = arith.constant 1 : index
    %c0_29 = arith.constant 0 : index
    %c0_30 = arith.constant 0 : index
    %26 = vector.load %arg6[%c0_27, %c1_28, %c0_29, %c0_30] : memref<3x3x32x64xf32, #tpu.memory_space<vmem>>, vector<1x1x32x64xf32>
    %27 = vector.shape_cast %26 : vector<1x1x32x64xf32> to vector<32x64xf32>
    %cst_31 = arith.constant dense<0.000000e+00> : vector<24x64xf32>
    %28 = tpu.matmul %25, %27, %cst_31 {dimension_numbers = #tpu.dot_dimension_numbers<[1], [0], [0], [1], [0, 0, 1, 1], [], []>} : vector<24x32xf32>, vector<32x64xf32>, vector<24x64xf32> -> vector<24x64xf32>
    %29 = arith.addf %24, %28 : vector<24x64xf32>
    %c2 = arith.constant 2 : index
    %c0_32 = arith.constant 0 : index
    %30 = vector.load %arg15[%c2, %c0_32] : memref<26x32xf32, #tpu.memory_space<vmem>>, vector<24x32xf32>
    %c0_33 = arith.constant 0 : index
    %c2_34 = arith.constant 2 : index
    %c0_35 = arith.constant 0 : index
    %c0_36 = arith.constant 0 : index
    %31 = vector.load %arg6[%c0_33, %c2_34, %c0_35, %c0_36] : memref<3x3x32x64xf32, #tpu.memory_space<vmem>>, vector<1x1x32x64xf32>
    %32 = vector.shape_cast %31 : vector<1x1x32x64xf32> to vector<32x64xf32>
    %cst_37 = arith.constant dense<0.000000e+00> : vector<24x64xf32>
    %33 = tpu.matmul %30, %32, %cst_37 {dimension_numbers = #tpu.dot_dimension_numbers<[1], [0], [0], [1], [0, 0, 1, 1], [], []>} : vector<24x32xf32>, vector<32x64xf32>, vector<24x64xf32> -> vector<24x64xf32>
    %34 = arith.addf %29, %33 : vector<24x64xf32>
    %c0_38 = arith.constant 0 : index
    %c0_39 = arith.constant 0 : index
    %c0_40 = arith.constant 0 : index
    %35 = vector.load %arg7[%c0_38, %c0_39, %c0_40] : memref<3x1x64xf32, #tpu.memory_space<vmem>>, vector<1x1x64xf32>
    %36 = vector.shape_cast %35 : vector<1x1x64xf32> to vector<1x64xf32>
    %37 = vector.broadcast %36 : vector<1x64xf32> to vector<24x64xf32>
    %38 = arith.addf %34, %37 : vector<24x64xf32>
    %39 = vector.extract_strided_slice %38 {offsets = [0, 0], sizes = [24, 32], strides = [1, 1]} : vector<24x64xf32> to vector<24x32xf32>
    %40 = math.tanh %39 : vector<24x32xf32>
    %41 = vector.extract_strided_slice %38 {offsets = [0, 32], sizes = [24, 32], strides = [1, 1]} : vector<24x64xf32> to vector<24x32xf32>
    %42 = arith.negf %41 : vector<24x32xf32>
    %43 = math.exp %42 : vector<24x32xf32>
    %cst_41 = arith.constant 1.000000e+00 : f32
    %44 = vector.broadcast %cst_41 : f32 to vector<24x32xf32>
    %45 = arith.addf %44, %43 : vector<24x32xf32>
    %46 = arith.divf %44, %45 : vector<24x32xf32>
    %47 = arith.mulf %40, %46 : vector<24x32xf32>
    %c0_42 = arith.constant 0 : index
    %c0_43 = arith.constant 0 : index
    %c0_44 = arith.constant 0 : index
    %48 = vector.load %arg8[%c0_42, %c0_43, %c0_44] : memref<2x32x64xf32, #tpu.memory_space<vmem>>, vector<1x32x64xf32>
    %49 = vector.shape_cast %48 : vector<1x32x64xf32> to vector<32x64xf32>
    %cst_45 = arith.constant dense<0.000000e+00> : vector<24x64xf32>
    %50 = tpu.matmul %47, %49, %cst_45 {dimension_numbers = #tpu.dot_dimension_numbers<[1], [0], [0], [1], [0, 0, 1, 1], [], []>} : vector<24x32xf32>, vector<32x64xf32>, vector<24x64xf32> -> vector<24x64xf32>
    %c0_46 = arith.constant 0 : index
    %c0_47 = arith.constant 0 : index
    %c0_48 = arith.constant 0 : index
    %51 = vector.load %arg9[%c0_46, %c0_47, %c0_48] : memref<2x1x64xf32, #tpu.memory_space<vmem>>, vector<1x1x64xf32>
    %52 = vector.shape_cast %51 : vector<1x1x64xf32> to vector<1x64xf32>
    %53 = vector.broadcast %52 : vector<1x64xf32> to vector<24x64xf32>
    %54 = arith.addf %50, %53 : vector<24x64xf32>
    %55 = vector.extract_strided_slice %54 {offsets = [0, 0], sizes = [24, 32], strides = [1, 1]} : vector<24x64xf32> to vector<24x32xf32>
    %56 = arith.addf %16, %55 : vector<24x32xf32>
    %57 = vector.broadcast %3 : vector<24x1xf32> to vector<24x32xf32>
    %58 = arith.mulf %56, %57 : vector<24x32xf32>
    %59 = vector.extract_strided_slice %54 {offsets = [8, 32], sizes = [8, 32], strides = [1, 1]} : vector<24x64xf32> to vector<8x32xf32>
    %60 = arith.addf %17, %59 : vector<8x32xf32>
    %c1_49 = arith.constant 1 : index
    %c0_50 = arith.constant 0 : index
    %61 = vector.load %arg15[%c1_49, %c0_50] : memref<26x32xf32, #tpu.memory_space<vmem>>, vector<24x32xf32>
    tpu.vector_store %arg15[%c1_49, %c0_50], %58 {strides = array<i32>} : memref<26x32xf32, #tpu.memory_space<vmem>>, vector<24x32xf32>,
    %cst_51 = arith.constant 0.000000e+00 : f32
    %62 = vector.broadcast %cst_51 : f32 to vector<24x64xf32>
    %c0_52 = arith.constant 0 : index
    %c0_53 = arith.constant 0 : index
    %63 = vector.load %arg15[%c0_52, %c0_53] : memref<26x32xf32, #tpu.memory_space<vmem>>, vector<24x32xf32>
    %c1_54 = arith.constant 1 : index
    %c0_55 = arith.constant 0 : index
    %c0_56 = arith.constant 0 : index
    %c0_57 = arith.constant 0 : index
    %64 = vector.load %arg6[%c1_54, %c0_55, %c0_56, %c0_57] : memref<3x3x32x64xf32, #tpu.memory_space<vmem>>, vector<1x1x32x64xf32>
    %65 = vector.shape_cast %64 : vector<1x1x32x64xf32> to vector<32x64xf32>
    %cst_58 = arith.constant dense<0.000000e+00> : vector<24x64xf32>
    %66 = tpu.matmul %63, %65, %cst_58 {dimension_numbers = #tpu.dot_dimension_numbers<[1], [0], [0], [1], [0, 0, 1, 1], [], []>} : vector<24x32xf32>, vector<32x64xf32>, vector<24x64xf32> -> vector<24x64xf32>
    %67 = arith.addf %62, %66 : vector<24x64xf32>
    %c1_59 = arith.constant 1 : index
    %c0_60 = arith.constant 0 : index
    %68 = vector.load %arg15[%c1_59, %c0_60] : memref<26x32xf32, #tpu.memory_space<vmem>>, vector<24x32xf32>
    %c1_61 = arith.constant 1 : index
    %c1_62 = arith.constant 1 : index
    %c0_63 = arith.constant 0 : index
    %c0_64 = arith.constant 0 : index
    %69 = vector.load %arg6[%c1_61, %c1_62, %c0_63, %c0_64] : memref<3x3x32x64xf32, #tpu.memory_space<vmem>>, vector<1x1x32x64xf32>
    %70 = vector.shape_cast %69 : vector<1x1x32x64xf32> to vector<32x64xf32>
    %cst_65 = arith.constant dense<0.000000e+00> : vector<24x64xf32>
    %71 = tpu.matmul %68, %70, %cst_65 {dimension_numbers = #tpu.dot_dimension_numbers<[1], [0], [0], [1], [0, 0, 1, 1], [], []>} : vector<24x32xf32>, vector<32x64xf32>, vector<24x64xf32> -> vector<24x64xf32>
    %72 = arith.addf %67, %71 : vector<24x64xf32>
    %c2_66 = arith.constant 2 : index
    %c0_67 = arith.constant 0 : index
    %73 = vector.load %arg15[%c2_66, %c0_67] : memref<26x32xf32, #tpu.memory_space<vmem>>, vector<24x32xf32>
    %c1_68 = arith.constant 1 : index
    %c2_69 = arith.constant 2 : index
    %c0_70 = arith.constant 0 : index
    %c0_71 = arith.constant 0 : index
    %74 = vector.load %arg6[%c1_68, %c2_69, %c0_70, %c0_71] : memref<3x3x32x64xf32, #tpu.memory_space<vmem>>, vector<1x1x32x64xf32>
    %75 = vector.shape_cast %74 : vector<1x1x32x64xf32> to vector<32x64xf32>
    %cst_72 = arith.constant dense<0.000000e+00> : vector<24x64xf32>
    %76 = tpu.matmul %73, %75, %cst_72 {dimension_numbers = #tpu.dot_dimension_numbers<[1], [0], [0], [1], [0, 0, 1, 1], [], []>} : vector<24x32xf32>, vector<32x64xf32>, vector<24x64xf32> -> vector<24x64xf32>
    %77 = arith.addf %72, %76 : vector<24x64xf32>
    %c1_73 = arith.constant 1 : index
    %c0_74 = arith.constant 0 : index
    %c0_75 = arith.constant 0 : index
    %78 = vector.load %arg7[%c1_73, %c0_74, %c0_75] : memref<3x1x64xf32, #tpu.memory_space<vmem>>, vector<1x1x64xf32>
    %79 = vector.shape_cast %78 : vector<1x1x64xf32> to vector<1x64xf32>
    %80 = vector.broadcast %79 : vector<1x64xf32> to vector<24x64xf32>
    %81 = arith.addf %77, %80 : vector<24x64xf32>
    %82 = vector.extract_strided_slice %81 {offsets = [0, 0], sizes = [24, 32], strides = [1, 1]} : vector<24x64xf32> to vector<24x32xf32>
    %83 = math.tanh %82 : vector<24x32xf32>
    %84 = vector.extract_strided_slice %81 {offsets = [0, 32], sizes = [24, 32], strides = [1, 1]} : vector<24x64xf32> to vector<24x32xf32>
    %85 = arith.negf %84 : vector<24x32xf32>
    %86 = math.exp %85 : vector<24x32xf32>
    %cst_76 = arith.constant 1.000000e+00 : f32
    %87 = vector.broadcast %cst_76 : f32 to vector<24x32xf32>
    %88 = arith.addf %87, %86 : vector<24x32xf32>
    %89 = arith.divf %87, %88 : vector<24x32xf32>
    %90 = arith.mulf %83, %89 : vector<24x32xf32>
    %c1_77 = arith.constant 1 : index
    %c0_78 = arith.constant 0 : index
    %c0_79 = arith.constant 0 : index
    %91 = vector.load %arg8[%c1_77, %c0_78, %c0_79] : memref<2x32x64xf32, #tpu.memory_space<vmem>>, vector<1x32x64xf32>
    %92 = vector.shape_cast %91 : vector<1x32x64xf32> to vector<32x64xf32>
    %cst_80 = arith.constant dense<0.000000e+00> : vector<24x64xf32>
    %93 = tpu.matmul %90, %92, %cst_80 {dimension_numbers = #tpu.dot_dimension_numbers<[1], [0], [0], [1], [0, 0, 1, 1], [], []>} : vector<24x32xf32>, vector<32x64xf32>, vector<24x64xf32> -> vector<24x64xf32>
    %c1_81 = arith.constant 1 : index
    %c0_82 = arith.constant 0 : index
    %c0_83 = arith.constant 0 : index
    %94 = vector.load %arg9[%c1_81, %c0_82, %c0_83] : memref<2x1x64xf32, #tpu.memory_space<vmem>>, vector<1x1x64xf32>
    %95 = vector.shape_cast %94 : vector<1x1x64xf32> to vector<1x64xf32>
    %96 = vector.broadcast %95 : vector<1x64xf32> to vector<24x64xf32>
    %97 = arith.addf %93, %96 : vector<24x64xf32>
    %98 = vector.extract_strided_slice %97 {offsets = [0, 0], sizes = [24, 32], strides = [1, 1]} : vector<24x64xf32> to vector<24x32xf32>
    %99 = arith.addf %58, %98 : vector<24x32xf32>
    %100 = vector.broadcast %3 : vector<24x1xf32> to vector<24x32xf32>
    %101 = arith.mulf %99, %100 : vector<24x32xf32>
    %102 = vector.extract_strided_slice %97 {offsets = [8, 32], sizes = [8, 32], strides = [1, 1]} : vector<24x64xf32> to vector<8x32xf32>
    %103 = arith.addf %60, %102 : vector<8x32xf32>
    %c1_84 = arith.constant 1 : index
    %c0_85 = arith.constant 0 : index
    %104 = vector.load %arg15[%c1_84, %c0_85] : memref<26x32xf32, #tpu.memory_space<vmem>>, vector<24x32xf32>
    tpu.vector_store %arg15[%c1_84, %c0_85], %101 {strides = array<i32>} : memref<26x32xf32, #tpu.memory_space<vmem>>, vector<24x32xf32>,
    %cst_86 = arith.constant 0.000000e+00 : f32
    %105 = vector.broadcast %cst_86 : f32 to vector<24x64xf32>
    %c0_87 = arith.constant 0 : index
    %c0_88 = arith.constant 0 : index
    %106 = vector.load %arg15[%c0_87, %c0_88] : memref<26x32xf32, #tpu.memory_space<vmem>>, vector<24x32xf32>
    %c2_89 = arith.constant 2 : index
    %c0_90 = arith.constant 0 : index
    %c0_91 = arith.constant 0 : index
    %c0_92 = arith.constant 0 : index
    %107 = vector.load %arg6[%c2_89, %c0_90, %c0_91, %c0_92] : memref<3x3x32x64xf32, #tpu.memory_space<vmem>>, vector<1x1x32x64xf32>
    %108 = vector.shape_cast %107 : vector<1x1x32x64xf32> to vector<32x64xf32>
    %cst_93 = arith.constant dense<0.000000e+00> : vector<24x64xf32>
    %109 = tpu.matmul %106, %108, %cst_93 {dimension_numbers = #tpu.dot_dimension_numbers<[1], [0], [0], [1], [0, 0, 1, 1], [], []>} : vector<24x32xf32>, vector<32x64xf32>, vector<24x64xf32> -> vector<24x64xf32>
    %110 = arith.addf %105, %109 : vector<24x64xf32>
    %c1_94 = arith.constant 1 : index
    %c0_95 = arith.constant 0 : index
    %111 = vector.load %arg15[%c1_94, %c0_95] : memref<26x32xf32, #tpu.memory_space<vmem>>, vector<24x32xf32>
    %c2_96 = arith.constant 2 : index
    %c1_97 = arith.constant 1 : index
    %c0_98 = arith.constant 0 : index
    %c0_99 = arith.constant 0 : index
    %112 = vector.load %arg6[%c2_96, %c1_97, %c0_98, %c0_99] : memref<3x3x32x64xf32, #tpu.memory_space<vmem>>, vector<1x1x32x64xf32>
    %113 = vector.shape_cast %112 : vector<1x1x32x64xf32> to vector<32x64xf32>
    %cst_100 = arith.constant dense<0.000000e+00> : vector<24x64xf32>
    %114 = tpu.matmul %111, %113, %cst_100 {dimension_numbers = #tpu.dot_dimension_numbers<[1], [0], [0], [1], [0, 0, 1, 1], [], []>} : vector<24x32xf32>, vector<32x64xf32>, vector<24x64xf32> -> vector<24x64xf32>
    %115 = arith.addf %110, %114 : vector<24x64xf32>
    %c2_101 = arith.constant 2 : index
    %c0_102 = arith.constant 0 : index
    %116 = vector.load %arg15[%c2_101, %c0_102] : memref<26x32xf32, #tpu.memory_space<vmem>>, vector<24x32xf32>
    %c2_103 = arith.constant 2 : index
    %c2_104 = arith.constant 2 : index
    %c0_105 = arith.constant 0 : index
    %c0_106 = arith.constant 0 : index
    %117 = vector.load %arg6[%c2_103, %c2_104, %c0_105, %c0_106] : memref<3x3x32x64xf32, #tpu.memory_space<vmem>>, vector<1x1x32x64xf32>
    %118 = vector.shape_cast %117 : vector<1x1x32x64xf32> to vector<32x64xf32>
    %cst_107 = arith.constant dense<0.000000e+00> : vector<24x64xf32>
    %119 = tpu.matmul %116, %118, %cst_107 {dimension_numbers = #tpu.dot_dimension_numbers<[1], [0], [0], [1], [0, 0, 1, 1], [], []>} : vector<24x32xf32>, vector<32x64xf32>, vector<24x64xf32> -> vector<24x64xf32>
    %120 = arith.addf %115, %119 : vector<24x64xf32>
    %c2_108 = arith.constant 2 : index
    %c0_109 = arith.constant 0 : index
    %c0_110 = arith.constant 0 : index
    %121 = vector.load %arg7[%c2_108, %c0_109, %c0_110] : memref<3x1x64xf32, #tpu.memory_space<vmem>>, vector<1x1x64xf32>
    %122 = vector.shape_cast %121 : vector<1x1x64xf32> to vector<1x64xf32>
    %123 = vector.broadcast %122 : vector<1x64xf32> to vector<24x64xf32>
    %124 = arith.addf %120, %123 : vector<24x64xf32>
    %125 = vector.extract_strided_slice %124 {offsets = [0, 0], sizes = [24, 32], strides = [1, 1]} : vector<24x64xf32> to vector<24x32xf32>
    %126 = math.tanh %125 : vector<24x32xf32>
    %127 = vector.extract_strided_slice %124 {offsets = [0, 32], sizes = [24, 32], strides = [1, 1]} : vector<24x64xf32> to vector<24x32xf32>
    %128 = arith.negf %127 : vector<24x32xf32>
    %129 = math.exp %128 : vector<24x32xf32>
    %cst_111 = arith.constant 1.000000e+00 : f32
    %130 = vector.broadcast %cst_111 : f32 to vector<24x32xf32>
    %131 = arith.addf %130, %129 : vector<24x32xf32>
    %132 = arith.divf %130, %131 : vector<24x32xf32>
    %133 = arith.mulf %126, %132 : vector<24x32xf32>
    %134 = vector.extract_strided_slice %133 {offsets = [8, 0], sizes = [8, 32], strides = [1, 1]} : vector<24x32xf32> to vector<8x32xf32>
    %c0_112 = arith.constant 0 : index
    %c0_113 = arith.constant 0 : index
    %135 = vector.load %arg10[%c0_112, %c0_113] : memref<32x32xf32, #tpu.memory_space<vmem>>, vector<32x32xf32>
    %cst_114 = arith.constant dense<0.000000e+00> : vector<8x32xf32>
    %136 = tpu.matmul %134, %135, %cst_114 {dimension_numbers = #tpu.dot_dimension_numbers<[1], [0], [0], [1], [0, 0, 1, 1], [], []>} : vector<8x32xf32>, vector<32x32xf32>, vector<8x32xf32> -> vector<8x32xf32>
    %c0_115 = arith.constant 0 : index
    %c0_116 = arith.constant 0 : index
    %137 = vector.load %arg11[%c0_115, %c0_116] : memref<1x32xf32, #tpu.memory_space<vmem>>, vector<1x32xf32>
    %138 = vector.broadcast %137 : vector<1x32xf32> to vector<8x32xf32>
    %139 = arith.addf %136, %138 : vector<8x32xf32>
    %140 = arith.addf %103, %139 : vector<8x32xf32>
    %141 = vector.broadcast %6 : vector<8x1xf32> to vector<8x32xf32>
    %142 = arith.mulf %140, %141 : vector<8x32xf32>
    %c0_117 = arith.constant 0 : index
    %c0_118 = arith.constant 0 : index
    %143 = vector.load %arg12[%c0_117, %c0_118] : memref<32x128xf32, #tpu.memory_space<vmem>>, vector<32x128xf32>
    %cst_119 = arith.constant dense<0.000000e+00> : vector<8x128xf32>
    %144 = tpu.matmul %142, %143, %cst_119 {dimension_numbers = #tpu.dot_dimension_numbers<[1], [0], [0], [1], [0, 0, 1, 1], [], []>} : vector<8x32xf32>, vector<32x128xf32>, vector<8x128xf32> -> vector<8x128xf32>
    %c0_120 = arith.constant 0 : index
    %c0_121 = arith.constant 0 : index
    %145 = vector.load %arg13[%c0_120, %c0_121] : memref<1x128xf32, #tpu.memory_space<vmem>>, vector<1x128xf32>
    %146 = vector.broadcast %145 : vector<1x128xf32> to vector<8x128xf32>
    %147 = arith.addf %144, %146 : vector<8x128xf32>
    %148 = vector.broadcast %6 : vector<8x1xf32> to vector<8x128xf32>
    %149 = arith.mulf %147, %148 : vector<8x128xf32>
    %150 = vector.extract_strided_slice %149 {offsets = [0, 2], sizes = [8, 2], strides = [1, 1]} : vector<8x128xf32> to vector<8x2xf32>
    %151 = math.exp %150 : vector<8x2xf32>
    %152 = arith.mulf %5, %151 : vector<8x2xf32>
    %153 = vector.broadcast %6 : vector<8x1xf32> to vector<8x2xf32>
    %154 = arith.mulf %152, %153 : vector<8x2xf32>
    %cst_122 = arith.constant 0.000000e+00 : f32
    %155 = vector.broadcast %cst_122 : f32 to vector<8x126xf32>
    %156 = tpu.concatenate %154, %155 in 1 : vector<8x2xf32>, vector<8x126xf32> -> vector<8x128xf32>
    %157 = arith.addf %149, %156 : vector<8x128xf32>
    %c0_123 = arith.constant 0 : index
    %c0_124 = arith.constant 0 : index
    %c0_125 = arith.constant 0 : index
    %158 = vector.load %arg14[%c0_123, %c0_124, %c0_125] : memref<1x8x128xf32, #tpu.memory_space<vmem>>, vector<1x8x128xf32>
    %159 = vector.shape_cast %158 : vector<1x8x128xf32> to vector<8x128xf32>
    %160 = vector.shape_cast %157 : vector<8x128xf32> to vector<1x8x128xf32>
    tpu.vector_store %arg14[%c0_123, %c0_124, %c0_125], %160 {strides = array<i32>} : memref<1x8x128xf32, #tpu.memory_space<vmem>>, vector<1x8x128xf32>,
    return
  }
  func.func @transform_0(%arg0: i32, %arg1: i32) -> (i32, i32, i32, i32) {
    %c0_i32 = arith.constant 0 : i32
    %c0_i32_0 = arith.constant 0 : i32
    %c0_i32_1 = arith.constant 0 : i32
    return %arg0, %arg1, %c0_i32, %c0_i32_0 : i32, i32, i32, i32
  }
  func.func @transform_1(%arg0: i32, %arg1: i32) -> (i32, i32, i32, i32) {
    %c0_i32 = arith.constant 0 : i32
    %c0_i32_0 = arith.constant 0 : i32
    %c0_i32_1 = arith.constant 0 : i32
    return %arg0, %arg1, %c0_i32, %c0_i32_0 : i32, i32, i32, i32
  }
  func.func @transform_2(%arg0: i32, %arg1: i32) -> (i32, i32) {
    %c0_i32 = arith.constant 0 : i32
    %c0_i32_0 = arith.constant 0 : i32
    %c0_i32_1 = arith.constant 0 : i32
    return %c0_i32, %c0_i32_0 : i32, i32
  }
  func.func @transform_3(%arg0: i32, %arg1: i32) -> (i32, i32) {
    %c0_i32 = arith.constant 0 : i32
    %c0_i32_0 = arith.constant 0 : i32
    %c0_i32_1 = arith.constant 0 : i32
    return %c0_i32, %c0_i32_0 : i32, i32
  }
  func.func @transform_4(%arg0: i32, %arg1: i32) -> (i32, i32, i32, i32) {
    %c0_i32 = arith.constant 0 : i32
    %c0_i32_0 = arith.constant 0 : i32
    %c0_i32_1 = arith.constant 0 : i32
    %c0_i32_2 = arith.constant 0 : i32
    %c0_i32_3 = arith.constant 0 : i32
    return %c0_i32, %c0_i32_0, %c0_i32_1, %c0_i32_2 : i32, i32, i32, i32
  }
  func.func @transform_5(%arg0: i32, %arg1: i32) -> (i32, i32, i32) {
    %c0_i32 = arith.constant 0 : i32
    %c0_i32_0 = arith.constant 0 : i32
    %c0_i32_1 = arith.constant 0 : i32
    %c0_i32_2 = arith.constant 0 : i32
    return %c0_i32, %c0_i32_0, %c0_i32_1 : i32, i32, i32
  }
  func.func @transform_6(%arg0: i32, %arg1: i32) -> (i32, i32, i32) {
    %c0_i32 = arith.constant 0 : i32
    %c0_i32_0 = arith.constant 0 : i32
    %c0_i32_1 = arith.constant 0 : i32
    %c0_i32_2 = arith.constant 0 : i32
    return %c0_i32, %c0_i32_0, %c0_i32_1 : i32, i32, i32
  }
  func.func @transform_7(%arg0: i32, %arg1: i32) -> (i32, i32, i32) {
    %c0_i32 = arith.constant 0 : i32
    %c0_i32_0 = arith.constant 0 : i32
    %c0_i32_1 = arith.constant 0 : i32
    %c0_i32_2 = arith.constant 0 : i32
    return %c0_i32, %c0_i32_0, %c0_i32_1 : i32, i32, i32
  }
  func.func @transform_8(%arg0: i32, %arg1: i32) -> (i32, i32) {
    %c0_i32 = arith.constant 0 : i32
    %c0_i32_0 = arith.constant 0 : i32
    %c0_i32_1 = arith.constant 0 : i32
    return %c0_i32, %c0_i32_0 : i32, i32
  }
  func.func @transform_9(%arg0: i32, %arg1: i32) -> (i32, i32) {
    %c0_i32 = arith.constant 0 : i32
    %c0_i32_0 = arith.constant 0 : i32
    %c0_i32_1 = arith.constant 0 : i32
    return %c0_i32, %c0_i32_0 : i32, i32
  }
  func.func @transform_10(%arg0: i32, %arg1: i32) -> (i32, i32) {
    %c0_i32 = arith.constant 0 : i32
    %c0_i32_0 = arith.constant 0 : i32
    %c0_i32_1 = arith.constant 0 : i32
    return %c0_i32, %c0_i32_0 : i32, i32
  }
  func.func @transform_11(%arg0: i32, %arg1: i32) -> (i32, i32) {
    %c0_i32 = arith.constant 0 : i32
    %c0_i32_0 = arith.constant 0 : i32
    %c0_i32_1 = arith.constant 0 : i32
    return %c0_i32, %c0_i32_0 : i32, i32
  }
  func.func @transform_12(%arg0: i32, %arg1: i32) -> (i32, i32, i32) {
    %c0_i32 = arith.constant 0 : i32
    %c0_i32_0 = arith.constant 0 : i32
    return %arg0, %arg1, %c0_i32 : i32, i32, i32
  }
}

module attributes {stable_mosaic.version = 11 : i64} {
  func.func @kernel(%arg0: i32, %arg1: i32, %arg2: memref<1x1x24x4xf32, #tpu.memory_space<vmem>>, %arg3: memref<1x1x24x1xf32, #tpu.memory_space<vmem>>, %arg4: memref<2x32xf32, #tpu.memory_space<vmem>>, %arg5: memref<1x32xf32, #tpu.memory_space<vmem>>, %arg6: memref<3x3x32x64xf32, #tpu.memory_space<vmem>>, %arg7: memref<3x1x64xf32, #tpu.memory_space<vmem>>, %arg8: memref<2x32x64xf32, #tpu.memory_space<vmem>>, %arg9: memref<2x1x64xf32, #tpu.memory_space<vmem>>, %arg10: memref<32x32xf32, #tpu.memory_space<vmem>>, %arg11: memref<1x32xf32, #tpu.memory_space<vmem>>, %arg12: memref<32x128xf32, #tpu.memory_space<vmem>>, %arg13: memref<1x128xf32, #tpu.memory_space<vmem>>, %arg14: memref<1x8x128xf32, #tpu.memory_space<vmem>>, %arg15: memref<26x32xf32, #tpu.memory_space<vmem>>) attributes {dimension_semantics = [#tpu.dimension_semantics<parallel>, #tpu.dimension_semantics<parallel>], iteration_bounds = array<i64: 2, 2>, scalar_prefetch = 0 : i64, scratch_operands = 1 : i64, tpu.core_type = #tpu.core_type<tc>, window_params = [{transform_indices = @transform_0, window_bounds = array<i64: 1, 1, 24, 4>}, {transform_indices = @transform_1, window_bounds = array<i64: 1, 1, 24, 1>}, {pipeline_mode = #tpu.pipeline_mode<synchronous>, transform_indices = @transform_2, window_bounds = array<i64: 2, 32>}, {pipeline_mode = #tpu.pipeline_mode<synchronous>, transform_indices = @transform_3, window_bounds = array<i64: 1, 32>}, {pipeline_mode = #tpu.pipeline_mode<synchronous>, transform_indices = @transform_4, window_bounds = array<i64: 3, 3, 32, 64>}, {pipeline_mode = #tpu.pipeline_mode<synchronous>, transform_indices = @transform_5, window_bounds = array<i64: 3, 1, 64>}, {pipeline_mode = #tpu.pipeline_mode<synchronous>, transform_indices = @transform_6, window_bounds = array<i64: 2, 32, 64>}, {pipeline_mode = #tpu.pipeline_mode<synchronous>, transform_indices = @transform_7, window_bounds = array<i64: 2, 1, 64>}, {pipeline_mode = #tpu.pipeline_mode<synchronous>, transform_indices = @transform_8, window_bounds = array<i64: 32, 32>}, {pipeline_mode = #tpu.pipeline_mode<synchronous>, transform_indices = @transform_9, window_bounds = array<i64: 1, 32>}, {pipeline_mode = #tpu.pipeline_mode<synchronous>, transform_indices = @transform_10, window_bounds = array<i64: 32, 128>}, {pipeline_mode = #tpu.pipeline_mode<synchronous>, transform_indices = @transform_11, window_bounds = array<i64: 1, 128>}, {transform_indices = @transform_12, window_bounds = array<i64: 1, 8, 128>}]} {
    %c0 = arith.constant 0 : index
    %c0_0 = arith.constant 0 : index
    %c0_1 = arith.constant 0 : index
    %c0_2 = arith.constant 0 : index
    %0 = vector.load %arg2[%c0, %c0_0, %c0_1, %c0_2] : memref<1x1x24x4xf32, #tpu.memory_space<vmem>>, vector<1x1x24x4xf32>
    %1 = vector.shape_cast %0 : vector<1x1x24x4xf32> to vector<24x4xf32>
    %c0_3 = arith.constant 0 : index
    %c0_4 = arith.constant 0 : index
    %c0_5 = arith.constant 0 : index
    %c0_6 = arith.constant 0 : index
    %2 = vector.load %arg3[%c0_3, %c0_4, %c0_5, %c0_6] : memref<1x1x24x1xf32, #tpu.memory_space<vmem>>, vector<1x1x24x1xf32>
    %3 = vector.shape_cast %2 : vector<1x1x24x1xf32> to vector<24x1xf32>
    %4 = vector.extract_strided_slice %1 {offsets = [0, 0], sizes = [24, 2], strides = [1, 1]} : vector<24x4xf32> to vector<24x2xf32>
    %5 = vector.extract_strided_slice %1 {offsets = [8, 2], sizes = [8, 2], strides = [1, 1]} : vector<24x4xf32> to vector<8x2xf32>
    %6 = vector.extract_strided_slice %3 {offsets = [8, 0], sizes = [8, 1], strides = [1, 1]} : vector<24x1xf32> to vector<8x1xf32>
    %cst = arith.constant 0.000000e+00 : f32
    %7 = vector.broadcast %cst : f32 to vector<1x32xf32>
    %c0_7 = arith.constant 0 : index
    %c0_8 = arith.constant 0 : index
    %8 = vector.load %arg15[%c0_7, %c0_8] : memref<26x32xf32, #tpu.memory_space<vmem>>, vector<1x32xf32>
    tpu.vector_store %arg15[%c0_7, %c0_8], %7 {strides = array<i32>} : memref<26x32xf32, #tpu.memory_space<vmem>>, vector<1x32xf32>,
    %c25 = arith.constant 25 : index
    %c0_9 = arith.constant 0 : index
    %9 = vector.load %arg15[%c25, %c0_9] : memref<26x32xf32, #tpu.memory_space<vmem>>, vector<1x32xf32>
    tpu.vector_store %arg15[%c25, %c0_9], %7 {strides = array<i32>} : memref<26x32xf32, #tpu.memory_space<vmem>>, vector<1x32xf32>,
    %c0_10 = arith.constant 0 : index
    %c0_11 = arith.constant 0 : index
    %10 = vector.load %arg4[%c0_10, %c0_11] : memref<2x32xf32, #tpu.memory_space<vmem>>, vector<2x32xf32>
    %cst_12 = arith.constant dense<0.000000e+00> : vector<24x32xf32>
    %11 = tpu.matmul %4, %10, %cst_12 {dimension_numbers = #tpu.dot_dimension_numbers<[1], [0], [0], [1], [0, 0, 1, 1], [], []>} : vector<24x2xf32>, vector<2x32xf32>, vector<24x32xf32> -> vector<24x32xf32>
    %c0_13 = arith.constant 0 : index
    %c0_14 = arith.constant 0 : index
    %12 = vector.load %arg5[%c0_13, %c0_14] : memref<1x32xf32, #tpu.memory_space<vmem>>, vector<1x32xf32>
    %13 = vector.broadcast %12 : vector<1x32xf32> to vector<24x32xf32>
    %14 = arith.addf %11, %13 : vector<24x32xf32>
    %15 = vector.broadcast %3 : vector<24x1xf32> to vector<24x32xf32>
    %16 = arith.mulf %14, %15 : vector<24x32xf32>
    %cst_15 = arith.constant 0.000000e+00 : f32
    %17 = vector.broadcast %cst_15 : f32 to vector<8x32xf32>
    %c1 = arith.constant 1 : index
    %c0_16 = arith.constant 0 : index
    %18 = vector.load %arg15[%c1, %c0_16] : memref<26x32xf32, #tpu.memory_space<vmem>>, vector<24x32xf32>
    tpu.vector_store %arg15[%c1, %c0_16], %16 {strides = array<i32>} : memref<26x32xf32, #tpu.memory_space<vmem>>, vector<24x32xf32>,
    %cst_17 = arith.constant 0.000000e+00 : f32
    %19 = vector.broadcast %cst_17 : f32 to vector<24x64xf32>
    %c0_18 = arith.constant 0 : index
    %c0_19 = arith.constant 0 : index
    %20 = vector.load %arg15[%c0_18, %c0_19] : memref<26x32xf32, #tpu.memory_space<vmem>>, vector<24x32xf32>
    %c0_20 = arith.constant 0 : index
    %c0_21 = arith.constant 0 : index
    %c0_22 = arith.constant 0 : index
    %c0_23 = arith.constant 0 : index
    %21 = vector.load %arg6[%c0_20, %c0_21, %c0_22, %c0_23] : memref<3x3x32x64xf32, #tpu.memory_space<vmem>>, vector<1x1x32x64xf32>
    %22 = vector.shape_cast %21 : vector<1x1x32x64xf32> to vector<32x64xf32>
    %cst_24 = arith.constant dense<0.000000e+00> : vector<24x64xf32>
    %23 = tpu.matmul %20, %22, %cst_24 {dimension_numbers = #tpu.dot_dimension_numbers<[1], [0], [0], [1], [0, 0, 1, 1], [], []>} : vector<24x32xf32>, vector<32x64xf32>, vector<24x64xf32> -> vector<24x64xf32>
    %24 = arith.addf %19, %23 : vector<24x64xf32>
    %c1_25 = arith.constant 1 : index
    %c0_26 = arith.constant 0 : index
    %25 = vector.load %arg15[%c1_25, %c0_26] : memref<26x32xf32, #tpu.memory_space<vmem>>, vector<24x32xf32>
    %c0_27 = arith.constant 0 : index
    %c1_28 = arith.constant 1 : index
    %c0_29 = arith.constant 0 : index
    %c0_30 = arith.constant 0 : index
    %26 = vector.load %arg6[%c0_27, %c1_28, %c0_29, %c0_30] : memref<3x3x32x64xf32, #tpu.memory_space<vmem>>, vector<1x1x32x64xf32>
    %27 = vector.shape_cast %26 : vector<1x1x32x64xf32> to vector<32x64xf32>
    %cst_31 = arith.constant dense<0.000000e+00> : vector<24x64xf32>
    %28 = tpu.matmul %25, %27, %cst_31 {dimension_numbers = #tpu.dot_dimension_numbers<[1], [0], [0], [1], [0, 0, 1, 1], [], []>} : vector<24x32xf32>, vector<32x64xf32>, vector<24x64xf32> -> vector<24x64xf32>
    %29 = arith.addf %24, %28 : vector<24x64xf32>
    %c2 = arith.constant 2 : index
    %c0_32 = arith.constant 0 : index
    %30 = vector.load %arg15[%c2, %c0_32] : memref<26x32xf32, #tpu.memory_space<vmem>>, vector<24x32xf32>
    %c0_33 = arith.constant 0 : index
    %c2_34 = arith.constant 2 : index
    %c0_35 = arith.constant 0 : index
    %c0_36 = arith.constant 0 : index
    %31 = vector.load %arg6[%c0_33, %c2_34, %c0_35, %c0_36] : memref<3x3x32x64xf32, #tpu.memory_space<vmem>>, vector<1x1x32x64xf32>
    %32 = vector.shape_cast %31 : vector<1x1x32x64xf32> to vector<32x64xf32>
    %cst_37 = arith.constant dense<0.000000e+00> : vector<24x64xf32>
    %33 = tpu.matmul %30, %32, %cst_37 {dimension_numbers = #tpu.dot_dimension_numbers<[1], [0], [0], [1], [0, 0, 1, 1], [], []>} : vector<24x32xf32>, vector<32x64xf32>, vector<24x64xf32> -> vector<24x64xf32>
    %34 = arith.addf %29, %33 : vector<24x64xf32>
    %c0_38 = arith.constant 0 : index
    %c0_39 = arith.constant 0 : index
    %c0_40 = arith.constant 0 : index
    %35 = vector.load %arg7[%c0_38, %c0_39, %c0_40] : memref<3x1x64xf32, #tpu.memory_space<vmem>>, vector<1x1x64xf32>
    %36 = vector.shape_cast %35 : vector<1x1x64xf32> to vector<1x64xf32>
    %37 = vector.broadcast %36 : vector<1x64xf32> to vector<24x64xf32>
    %38 = arith.addf %34, %37 : vector<24x64xf32>
    %39 = vector.extract_strided_slice %38 {offsets = [0, 0], sizes = [24, 32], strides = [1, 1]} : vector<24x64xf32> to vector<24x32xf32>
    %40 = math.tanh %39 : vector<24x32xf32>
    %41 = vector.extract_strided_slice %38 {offsets = [0, 32], sizes = [24, 32], strides = [1, 1]} : vector<24x64xf32> to vector<24x32xf32>
    %42 = arith.negf %41 : vector<24x32xf32>
    %43 = math.exp %42 : vector<24x32xf32>
    %cst_41 = arith.constant 1.000000e+00 : f32
    %44 = vector.broadcast %cst_41 : f32 to vector<24x32xf32>
    %45 = arith.addf %44, %43 : vector<24x32xf32>
    %46 = arith.divf %44, %45 : vector<24x32xf32>
    %47 = arith.mulf %40, %46 : vector<24x32xf32>
    %c0_42 = arith.constant 0 : index
    %c0_43 = arith.constant 0 : index
    %c0_44 = arith.constant 0 : index
    %48 = vector.load %arg8[%c0_42, %c0_43, %c0_44] : memref<2x32x64xf32, #tpu.memory_space<vmem>>, vector<1x32x64xf32>
    %49 = vector.shape_cast %48 : vector<1x32x64xf32> to vector<32x64xf32>
    %cst_45 = arith.constant dense<0.000000e+00> : vector<24x64xf32>
    %50 = tpu.matmul %47, %49, %cst_45 {dimension_numbers = #tpu.dot_dimension_numbers<[1], [0], [0], [1], [0, 0, 1, 1], [], []>} : vector<24x32xf32>, vector<32x64xf32>, vector<24x64xf32> -> vector<24x64xf32>
    %c0_46 = arith.constant 0 : index
    %c0_47 = arith.constant 0 : index
    %c0_48 = arith.constant 0 : index
    %51 = vector.load %arg9[%c0_46, %c0_47, %c0_48] : memref<2x1x64xf32, #tpu.memory_space<vmem>>, vector<1x1x64xf32>
    %52 = vector.shape_cast %51 : vector<1x1x64xf32> to vector<1x64xf32>
    %53 = vector.broadcast %52 : vector<1x64xf32> to vector<24x64xf32>
    %54 = arith.addf %50, %53 : vector<24x64xf32>
    %55 = vector.extract_strided_slice %54 {offsets = [0, 0], sizes = [24, 32], strides = [1, 1]} : vector<24x64xf32> to vector<24x32xf32>
    %56 = arith.addf %16, %55 : vector<24x32xf32>
    %57 = vector.broadcast %3 : vector<24x1xf32> to vector<24x32xf32>
    %58 = arith.mulf %56, %57 : vector<24x32xf32>
    %59 = vector.extract_strided_slice %54 {offsets = [8, 32], sizes = [8, 32], strides = [1, 1]} : vector<24x64xf32> to vector<8x32xf32>
    %60 = arith.addf %17, %59 : vector<8x32xf32>
    %c1_49 = arith.constant 1 : index
    %c0_50 = arith.constant 0 : index
    %61 = vector.load %arg15[%c1_49, %c0_50] : memref<26x32xf32, #tpu.memory_space<vmem>>, vector<24x32xf32>
    tpu.vector_store %arg15[%c1_49, %c0_50], %58 {strides = array<i32>} : memref<26x32xf32, #tpu.memory_space<vmem>>, vector<24x32xf32>,
    %cst_51 = arith.constant 0.000000e+00 : f32
    %62 = vector.broadcast %cst_51 : f32 to vector<24x64xf32>
    %c0_52 = arith.constant 0 : index
    %c0_53 = arith.constant 0 : index
    %63 = vector.load %arg15[%c0_52, %c0_53] : memref<26x32xf32, #tpu.memory_space<vmem>>, vector<24x32xf32>
    %c1_54 = arith.constant 1 : index
    %c0_55 = arith.constant 0 : index
    %c0_56 = arith.constant 0 : index
    %c0_57 = arith.constant 0 : index
    %64 = vector.load %arg6[%c1_54, %c0_55, %c0_56, %c0_57] : memref<3x3x32x64xf32, #tpu.memory_space<vmem>>, vector<1x1x32x64xf32>
    %65 = vector.shape_cast %64 : vector<1x1x32x64xf32> to vector<32x64xf32>
    %cst_58 = arith.constant dense<0.000000e+00> : vector<24x64xf32>
    %66 = tpu.matmul %63, %65, %cst_58 {dimension_numbers = #tpu.dot_dimension_numbers<[1], [0], [0], [1], [0, 0, 1, 1], [], []>} : vector<24x32xf32>, vector<32x64xf32>, vector<24x64xf32> -> vector<24x64xf32>
    %67 = arith.addf %62, %66 : vector<24x64xf32>
    %c1_59 = arith.constant 1 : index
    %c0_60 = arith.constant 0 : index
    %68 = vector.load %arg15[%c1_59, %c0_60] : memref<26x32xf32, #tpu.memory_space<vmem>>, vector<24x32xf32>
    %c1_61 = arith.constant 1 : index
    %c1_62 = arith.constant 1 : index
    %c0_63 = arith.constant 0 : index
    %c0_64 = arith.constant 0 : index
    %69 = vector.load %arg6[%c1_61, %c1_62, %c0_63, %c0_64] : memref<3x3x32x64xf32, #tpu.memory_space<vmem>>, vector<1x1x32x64xf32>
    %70 = vector.shape_cast %69 : vector<1x1x32x64xf32> to vector<32x64xf32>
    %cst_65 = arith.constant dense<0.000000e+00> : vector<24x64xf32>
    %71 = tpu.matmul %68, %70, %cst_65 {dimension_numbers = #tpu.dot_dimension_numbers<[1], [0], [0], [1], [0, 0, 1, 1], [], []>} : vector<24x32xf32>, vector<32x64xf32>, vector<24x64xf32> -> vector<24x64xf32>
    %72 = arith.addf %67, %71 : vector<24x64xf32>
    %c2_66 = arith.constant 2 : index
    %c0_67 = arith.constant 0 : index
    %73 = vector.load %arg15[%c2_66, %c0_67] : memref<26x32xf32, #tpu.memory_space<vmem>>, vector<24x32xf32>
    %c1_68 = arith.constant 1 : index
    %c2_69 = arith.constant 2 : index
    %c0_70 = arith.constant 0 : index
    %c0_71 = arith.constant 0 : index
    %74 = vector.load %arg6[%c1_68, %c2_69, %c0_70, %c0_71] : memref<3x3x32x64xf32, #tpu.memory_space<vmem>>, vector<1x1x32x64xf32>
    %75 = vector.shape_cast %74 : vector<1x1x32x64xf32> to vector<32x64xf32>
    %cst_72 = arith.constant dense<0.000000e+00> : vector<24x64xf32>
    %76 = tpu.matmul %73, %75, %cst_72 {dimension_numbers = #tpu.dot_dimension_numbers<[1], [0], [0], [1], [0, 0, 1, 1], [], []>} : vector<24x32xf32>, vector<32x64xf32>, vector<24x64xf32> -> vector<24x64xf32>
    %77 = arith.addf %72, %76 : vector<24x64xf32>
    %c1_73 = arith.constant 1 : index
    %c0_74 = arith.constant 0 : index
    %c0_75 = arith.constant 0 : index
    %78 = vector.load %arg7[%c1_73, %c0_74, %c0_75] : memref<3x1x64xf32, #tpu.memory_space<vmem>>, vector<1x1x64xf32>
    %79 = vector.shape_cast %78 : vector<1x1x64xf32> to vector<1x64xf32>
    %80 = vector.broadcast %79 : vector<1x64xf32> to vector<24x64xf32>
    %81 = arith.addf %77, %80 : vector<24x64xf32>
    %82 = vector.extract_strided_slice %81 {offsets = [0, 0], sizes = [24, 32], strides = [1, 1]} : vector<24x64xf32> to vector<24x32xf32>
    %83 = math.tanh %82 : vector<24x32xf32>
    %84 = vector.extract_strided_slice %81 {offsets = [0, 32], sizes = [24, 32], strides = [1, 1]} : vector<24x64xf32> to vector<24x32xf32>
    %85 = arith.negf %84 : vector<24x32xf32>
    %86 = math.exp %85 : vector<24x32xf32>
    %cst_76 = arith.constant 1.000000e+00 : f32
    %87 = vector.broadcast %cst_76 : f32 to vector<24x32xf32>
    %88 = arith.addf %87, %86 : vector<24x32xf32>
    %89 = arith.divf %87, %88 : vector<24x32xf32>
    %90 = arith.mulf %83, %89 : vector<24x32xf32>
    %c1_77 = arith.constant 1 : index
    %c0_78 = arith.constant 0 : index
    %c0_79 = arith.constant 0 : index
    %91 = vector.load %arg8[%c1_77, %c0_78, %c0_79] : memref<2x32x64xf32, #tpu.memory_space<vmem>>, vector<1x32x64xf32>
    %92 = vector.shape_cast %91 : vector<1x32x64xf32> to vector<32x64xf32>
    %cst_80 = arith.constant dense<0.000000e+00> : vector<24x64xf32>
    %93 = tpu.matmul %90, %92, %cst_80 {dimension_numbers = #tpu.dot_dimension_numbers<[1], [0], [0], [1], [0, 0, 1, 1], [], []>} : vector<24x32xf32>, vector<32x64xf32>, vector<24x64xf32> -> vector<24x64xf32>
    %c1_81 = arith.constant 1 : index
    %c0_82 = arith.constant 0 : index
    %c0_83 = arith.constant 0 : index
    %94 = vector.load %arg9[%c1_81, %c0_82, %c0_83] : memref<2x1x64xf32, #tpu.memory_space<vmem>>, vector<1x1x64xf32>
    %95 = vector.shape_cast %94 : vector<1x1x64xf32> to vector<1x64xf32>
    %96 = vector.broadcast %95 : vector<1x64xf32> to vector<24x64xf32>
    %97 = arith.addf %93, %96 : vector<24x64xf32>
    %98 = vector.extract_strided_slice %97 {offsets = [0, 0], sizes = [24, 32], strides = [1, 1]} : vector<24x64xf32> to vector<24x32xf32>
    %99 = arith.addf %58, %98 : vector<24x32xf32>
    %100 = vector.broadcast %3 : vector<24x1xf32> to vector<24x32xf32>
    %101 = arith.mulf %99, %100 : vector<24x32xf32>
    %102 = vector.extract_strided_slice %97 {offsets = [8, 32], sizes = [8, 32], strides = [1, 1]} : vector<24x64xf32> to vector<8x32xf32>
    %103 = arith.addf %60, %102 : vector<8x32xf32>
    %c1_84 = arith.constant 1 : index
    %c0_85 = arith.constant 0 : index
    %104 = vector.load %arg15[%c1_84, %c0_85] : memref<26x32xf32, #tpu.memory_space<vmem>>, vector<24x32xf32>
    tpu.vector_store %arg15[%c1_84, %c0_85], %101 {strides = array<i32>} : memref<26x32xf32, #tpu.memory_space<vmem>>, vector<24x32xf32>,
    %cst_86 = arith.constant 0.000000e+00 : f32
    %105 = vector.broadcast %cst_86 : f32 to vector<24x64xf32>
    %c0_87 = arith.constant 0 : index
    %c0_88 = arith.constant 0 : index
    %106 = vector.load %arg15[%c0_87, %c0_88] : memref<26x32xf32, #tpu.memory_space<vmem>>, vector<24x32xf32>
    %c2_89 = arith.constant 2 : index
    %c0_90 = arith.constant 0 : index
    %c0_91 = arith.constant 0 : index
    %c0_92 = arith.constant 0 : index
    %107 = vector.load %arg6[%c2_89, %c0_90, %c0_91, %c0_92] : memref<3x3x32x64xf32, #tpu.memory_space<vmem>>, vector<1x1x32x64xf32>
    %108 = vector.shape_cast %107 : vector<1x1x32x64xf32> to vector<32x64xf32>
    %cst_93 = arith.constant dense<0.000000e+00> : vector<24x64xf32>
    %109 = tpu.matmul %106, %108, %cst_93 {dimension_numbers = #tpu.dot_dimension_numbers<[1], [0], [0], [1], [0, 0, 1, 1], [], []>} : vector<24x32xf32>, vector<32x64xf32>, vector<24x64xf32> -> vector<24x64xf32>
    %110 = arith.addf %105, %109 : vector<24x64xf32>
    %c1_94 = arith.constant 1 : index
    %c0_95 = arith.constant 0 : index
    %111 = vector.load %arg15[%c1_94, %c0_95] : memref<26x32xf32, #tpu.memory_space<vmem>>, vector<24x32xf32>
    %c2_96 = arith.constant 2 : index
    %c1_97 = arith.constant 1 : index
    %c0_98 = arith.constant 0 : index
    %c0_99 = arith.constant 0 : index
    %112 = vector.load %arg6[%c2_96, %c1_97, %c0_98, %c0_99] : memref<3x3x32x64xf32, #tpu.memory_space<vmem>>, vector<1x1x32x64xf32>
    %113 = vector.shape_cast %112 : vector<1x1x32x64xf32> to vector<32x64xf32>
    %cst_100 = arith.constant dense<0.000000e+00> : vector<24x64xf32>
    %114 = tpu.matmul %111, %113, %cst_100 {dimension_numbers = #tpu.dot_dimension_numbers<[1], [0], [0], [1], [0, 0, 1, 1], [], []>} : vector<24x32xf32>, vector<32x64xf32>, vector<24x64xf32> -> vector<24x64xf32>
    %115 = arith.addf %110, %114 : vector<24x64xf32>
    %c2_101 = arith.constant 2 : index
    %c0_102 = arith.constant 0 : index
    %116 = vector.load %arg15[%c2_101, %c0_102] : memref<26x32xf32, #tpu.memory_space<vmem>>, vector<24x32xf32>
    %c2_103 = arith.constant 2 : index
    %c2_104 = arith.constant 2 : index
    %c0_105 = arith.constant 0 : index
    %c0_106 = arith.constant 0 : index
    %117 = vector.load %arg6[%c2_103, %c2_104, %c0_105, %c0_106] : memref<3x3x32x64xf32, #tpu.memory_space<vmem>>, vector<1x1x32x64xf32>
    %118 = vector.shape_cast %117 : vector<1x1x32x64xf32> to vector<32x64xf32>
    %cst_107 = arith.constant dense<0.000000e+00> : vector<24x64xf32>
    %119 = tpu.matmul %116, %118, %cst_107 {dimension_numbers = #tpu.dot_dimension_numbers<[1], [0], [0], [1], [0, 0, 1, 1], [], []>} : vector<24x32xf32>, vector<32x64xf32>, vector<24x64xf32> -> vector<24x64xf32>
    %120 = arith.addf %115, %119 : vector<24x64xf32>
    %c2_108 = arith.constant 2 : index
    %c0_109 = arith.constant 0 : index
    %c0_110 = arith.constant 0 : index
    %121 = vector.load %arg7[%c2_108, %c0_109, %c0_110] : memref<3x1x64xf32, #tpu.memory_space<vmem>>, vector<1x1x64xf32>
    %122 = vector.shape_cast %121 : vector<1x1x64xf32> to vector<1x64xf32>
    %123 = vector.broadcast %122 : vector<1x64xf32> to vector<24x64xf32>
    %124 = arith.addf %120, %123 : vector<24x64xf32>
    %125 = vector.extract_strided_slice %124 {offsets = [0, 0], sizes = [24, 32], strides = [1, 1]} : vector<24x64xf32> to vector<24x32xf32>
    %126 = math.tanh %125 : vector<24x32xf32>
    %127 = vector.extract_strided_slice %124 {offsets = [0, 32], sizes = [24, 32], strides = [1, 1]} : vector<24x64xf32> to vector<24x32xf32>
    %128 = arith.negf %127 : vector<24x32xf32>
    %129 = math.exp %128 : vector<24x32xf32>
    %cst_111 = arith.constant 1.000000e+00 : f32
    %130 = vector.broadcast %cst_111 : f32 to vector<24x32xf32>
    %131 = arith.addf %130, %129 : vector<24x32xf32>
    %132 = arith.divf %130, %131 : vector<24x32xf32>
    %133 = arith.mulf %126, %132 : vector<24x32xf32>
    %134 = vector.extract_strided_slice %133 {offsets = [8, 0], sizes = [8, 32], strides = [1, 1]} : vector<24x32xf32> to vector<8x32xf32>
    %c0_112 = arith.constant 0 : index
    %c0_113 = arith.constant 0 : index
    %135 = vector.load %arg10[%c0_112, %c0_113] : memref<32x32xf32, #tpu.memory_space<vmem>>, vector<32x32xf32>
    %cst_114 = arith.constant dense<0.000000e+00> : vector<8x32xf32>
    %136 = tpu.matmul %134, %135, %cst_114 {dimension_numbers = #tpu.dot_dimension_numbers<[1], [0], [0], [1], [0, 0, 1, 1], [], []>} : vector<8x32xf32>, vector<32x32xf32>, vector<8x32xf32> -> vector<8x32xf32>
    %c0_115 = arith.constant 0 : index
    %c0_116 = arith.constant 0 : index
    %137 = vector.load %arg11[%c0_115, %c0_116] : memref<1x32xf32, #tpu.memory_space<vmem>>, vector<1x32xf32>
    %138 = vector.broadcast %137 : vector<1x32xf32> to vector<8x32xf32>
    %139 = arith.addf %136, %138 : vector<8x32xf32>
    %140 = arith.addf %103, %139 : vector<8x32xf32>
    %141 = vector.broadcast %6 : vector<8x1xf32> to vector<8x32xf32>
    %142 = arith.mulf %140, %141 : vector<8x32xf32>
    %c0_117 = arith.constant 0 : index
    %c0_118 = arith.constant 0 : index
    %143 = vector.load %arg12[%c0_117, %c0_118] : memref<32x128xf32, #tpu.memory_space<vmem>>, vector<32x128xf32>
    %cst_119 = arith.constant dense<0.000000e+00> : vector<8x128xf32>
    %144 = tpu.matmul %142, %143, %cst_119 {dimension_numbers = #tpu.dot_dimension_numbers<[1], [0], [0], [1], [0, 0, 1, 1], [], []>} : vector<8x32xf32>, vector<32x128xf32>, vector<8x128xf32> -> vector<8x128xf32>
    %c0_120 = arith.constant 0 : index
    %c0_121 = arith.constant 0 : index
    %145 = vector.load %arg13[%c0_120, %c0_121] : memref<1x128xf32, #tpu.memory_space<vmem>>, vector<1x128xf32>
    %146 = vector.broadcast %145 : vector<1x128xf32> to vector<8x128xf32>
    %147 = arith.addf %144, %146 : vector<8x128xf32>
    %148 = vector.broadcast %6 : vector<8x1xf32> to vector<8x128xf32>
    %149 = arith.mulf %147, %148 : vector<8x128xf32>
    %150 = vector.extract_strided_slice %149 {offsets = [0, 2], sizes = [8, 2], strides = [1, 1]} : vector<8x128xf32> to vector<8x2xf32>
    %151 = math.exp %150 : vector<8x2xf32>
    %152 = arith.mulf %5, %151 : vector<8x2xf32>
    %153 = vector.broadcast %6 : vector<8x1xf32> to vector<8x2xf32>
    %154 = arith.mulf %152, %153 : vector<8x2xf32>
    %cst_122 = arith.constant 0.000000e+00 : f32
    %155 = vector.broadcast %cst_122 : f32 to vector<8x126xf32>
    %156 = tpu.concatenate %154, %155 in 1 : vector<8x2xf32>, vector<8x126xf32> -> vector<8x128xf32>
    %157 = arith.addf %149, %156 : vector<8x128xf32>
    %c0_123 = arith.constant 0 : index
    %c0_124 = arith.constant 0 : index
    %c0_125 = arith.constant 0 : index
    %158 = vector.load %arg14[%c0_123, %c0_124, %c0_125] : memref<1x8x128xf32, #tpu.memory_space<vmem>>, vector<1x8x128xf32>
    %159 = vector.shape_cast %158 : vector<1x8x128xf32> to vector<8x128xf32>
    %160 = vector.shape_cast %157 : vector<8x128xf32> to vector<1x8x128xf32>
    tpu.vector_store %arg14[%c0_123, %c0_124, %c0_125], %160 {strides = array<i32>} : memref<1x8x128xf32, #tpu.memory_space<vmem>>, vector<1x8x128xf32>,
    return
  }
  func.func @transform_0(%arg0: i32, %arg1: i32) -> (i32, i32, i32, i32) {
    %c0_i32 = arith.constant 0 : i32
    %c0_i32_0 = arith.constant 0 : i32
    %c0_i32_1 = arith.constant 0 : i32
    return %arg0, %arg1, %c0_i32, %c0_i32_0 : i32, i32, i32, i32
  }
  func.func @transform_1(%arg0: i32, %arg1: i32) -> (i32, i32, i32, i32) {
    %c0_i32 = arith.constant 0 : i32
    %c0_i32_0 = arith.constant 0 : i32
    %c0_i32_1 = arith.constant 0 : i32
    return %arg0, %arg1, %c0_i32, %c0_i32_0 : i32, i32, i32, i32
  }
  func.func @transform_2(%arg0: i32, %arg1: i32) -> (i32, i32) {
    %c0_i32 = arith.constant 0 : i32
    %c0_i32_0 = arith.constant 0 : i32
    %c0_i32_1 = arith.constant 0 : i32
    return %c0_i32, %c0_i32_0 : i32, i32
  }
  func.func @transform_3(%arg0: i32, %arg1: i32) -> (i32, i32) {
    %c0_i32 = arith.constant 0 : i32
    %c0_i32_0 = arith.constant 0 : i32
    %c0_i32_1 = arith.constant 0 : i32
    return %c0_i32, %c0_i32_0 : i32, i32
  }
  func.func @transform_4(%arg0: i32, %arg1: i32) -> (i32, i32, i32, i32) {
    %c0_i32 = arith.constant 0 : i32
    %c0_i32_0 = arith.constant 0 : i32
    %c0_i32_1 = arith.constant 0 : i32
    %c0_i32_2 = arith.constant 0 : i32
    %c0_i32_3 = arith.constant 0 : i32
    return %c0_i32, %c0_i32_0, %c0_i32_1, %c0_i32_2 : i32, i32, i32, i32
  }
  func.func @transform_5(%arg0: i32, %arg1: i32) -> (i32, i32, i32) {
    %c0_i32 = arith.constant 0 : i32
    %c0_i32_0 = arith.constant 0 : i32
    %c0_i32_1 = arith.constant 0 : i32
    %c0_i32_2 = arith.constant 0 : i32
    return %c0_i32, %c0_i32_0, %c0_i32_1 : i32, i32, i32
  }
  func.func @transform_6(%arg0: i32, %arg1: i32) -> (i32, i32, i32) {
    %c0_i32 = arith.constant 0 : i32
    %c0_i32_0 = arith.constant 0 : i32
    %c0_i32_1 = arith.constant 0 : i32
    %c0_i32_2 = arith.constant 0 : i32
    return %c0_i32, %c0_i32_0, %c0_i32_1 : i32, i32, i32
  }
  func.func @transform_7(%arg0: i32, %arg1: i32) -> (i32, i32, i32) {
    %c0_i32 = arith.constant 0 : i32
    %c0_i32_0 = arith.constant 0 : i32
    %c0_i32_1 = arith.constant 0 : i32
    %c0_i32_2 = arith.constant 0 : i32
    return %c0_i32, %c0_i32_0, %c0_i32_1 : i32, i32, i32
  }
  func.func @transform_8(%arg0: i32, %arg1: i32) -> (i32, i32) {
    %c0_i32 = arith.constant 0 : i32
    %c0_i32_0 = arith.constant 0 : i32
    %c0_i32_1 = arith.constant 0 : i32
    return %c0_i32, %c0_i32_0 : i32, i32
  }
  func.func @transform_9(%arg0: i32, %arg1: i32) -> (i32, i32) {
    %c0_i32 = arith.constant 0 : i32
    %c0_i32_0 = arith.constant 0 : i32
    %c0_i32_1 = arith.constant 0 : i32
    return %c0_i32, %c0_i32_0 : i32, i32
  }
  func.func @transform_10(%arg0: i32, %arg1: i32) -> (i32, i32) {
    %c0_i32 = arith.constant 0 : i32
    %c0_i32_0 = arith.constant 0 : i32
    %c0_i32_1 = arith.constant 0 : i32
    return %c0_i32, %c0_i32_0 : i32, i32
  }
  func.func @transform_11(%arg0: i32, %arg1: i32) -> (i32, i32) {
    %c0_i32 = arith.constant 0 : i32
    %c0_i32_0 = arith.constant 0 : i32
    %c0_i32_1 = arith.constant 0 : i32
    return %c0_i32, %c0_i32_0 : i32, i32
  }
  func.func @transform_12(%arg0: i32, %arg1: i32) -> (i32, i32, i32) {
    %c0_i32 = arith.constant 0 : i32
    %c0_i32_0 = arith.constant 0 : i32
    return %arg0, %arg1, %c0_i32 : i32, i32, i32
  }
}

</mosaic_0001>

<llo_original>
// kernel: tpu_custom_call.1
$region0: #{tpu_custom_call.1}
  #allocation0 [shape = 'u32[]', space=smem, size = 0x4, offset = 0x4, fixed_abs, tag = 'smem constant byte address 0x4 - core index']
  #allocation1 [shape = 'u32[72,128]{1,0:T(1,128)}', space=vmem, size = 0x9000, scoped, tag = 'internal scratch']
  #allocation2 [shape = 'f32[26,32]{1,0:T(8,128)}', space=vmem, size = 0x4000, scoped, tag = 'scratch operand']
  %s0 = inlined_call_operand.vmem [shape: f32[2,2,24,4], index: 0, kind: input, shape index: {}]
  %s1 = inlined_call_operand.vmem [shape: f32[2,2,24,1], index: 1, kind: input, shape index: {}]
  %s2 = inlined_call_operand.vmem [shape: f32[2,32], index: 2, kind: input, shape index: {}]
  %s3 = inlined_call_operand.vmem [shape: f32[1,32], index: 3, kind: input, shape index: {}]
  %s4 = inlined_call_operand.hbm [shape: f32[3,3,32,64], index: 4, kind: input, shape index: {}]
  %s5 = inlined_call_operand.vmem [shape: f32[3,1,64], index: 5, kind: input, shape index: {}]
  %s6 = inlined_call_operand.vmem [shape: f32[2,32,64], index: 6, kind: input, shape index: {}]
  %s7 = inlined_call_operand.vmem [shape: f32[2,1,64], index: 7, kind: input, shape index: {}]
  %s8 = inlined_call_operand.vmem [shape: f32[32,32], index: 8, kind: input, shape index: {}]
  %s9 = inlined_call_operand.vmem [shape: f32[1,32], index: 9, kind: input, shape index: {}]
  %s10 = inlined_call_operand.vmem [shape: f32[32,128], index: 10, kind: input, shape index: {}]
  %s11 = inlined_call_operand.vmem [shape: f32[1,128], index: 11, kind: input, shape index: {}]
  %s12 = inlined_call_operand.hbm [shape: f32[2,16,128], index: 12, kind: output, shape index: {}]
  %s13 = sld [smem:[#allocation0]]
  $region85: #{tpu_custom_call.1} parent=0
    _
  %s15 = ssub.s32 1, %s13
  %s16 = scalar_select 0, %s15, %s13
  $region1: #{tpu_custom_call.1} parent=0
    #allocation3 [shape = 'u8[147456]{0}', space=vmem, size = 0x24000, scoped, tag = 'input window, operand 4, single buffered']
    #allocation4 [shape = 's32[2]{0}', space=sflag, size = 0x8, scoped, tag = 'scoped memory for tpu_custom_call.1']
    #allocation5 [shape = 's32[2]{0}', space=sflag, size = 0x8, scoped, tag = 'scoped memory for tpu_custom_call.1']
    #allocation6 [shape = 'u8[8192]{0}', space=vmem, size = 0x2000, scoped, tag = 'output window, operand 0']
    %17 = vsyncpa [#allocation4], 0
    %18 = vsyncpa [#allocation5], 0
    %s19 = scalar_lea.sflag [#allocation5], 1
    %20 = vsyncpa %s19, 0
    loop: start=0, step=1, limit=6
    $region2: #{tpu_custom_call.1} parent=1 // loop_pre_header
      _
    $region3: #{tpu_custom_call.1} parent=1 // loop_header
      %s22 = sphi 0, %s26
      %p23 = scmp.ge.s32.totalorder %s22, 6
      %s29 = sphi 0, %s41
      %s30 = sphi 0, %s37
      %s31 = sphi 0, %s29
      %s32 = sphi 0, %s30
      %s33 = sphi 0, %s31
      %s34 = sphi 0, %s32
      %s46 = sphi 0, %s48
      %s49 = sphi 0, %s46
      %s50 = sphi 0, %s49
      %s66 = sphi 0, %s50
      %s74 = sphi 0, %s76
      %s77 = sphi 0, %s74
      %s78 = sphi 0, %s77
      %s94 = sphi 0, %s78
      %s98 = sphi 0, %s98
      %s100 = sphi 0, %s98
      %s101 = sphi 0, %s100
      %s115 = sphi 0, %s101
      %s119 = sphi 0, %s119
      %s121 = sphi 0, %s119
      %s122 = sphi 0, %s121
      %s136 = sphi 0, %s122
      %s140 = sphi 0, %s140
      %s142 = sphi 0, %s140
      %s143 = sphi 0, %s142
      %s157 = sphi 0, %s143
      %s161 = sphi 0, %s161
      %s163 = sphi 0, %s161
      %s164 = sphi 0, %s163
      %s178 = sphi 0, %s164
      %s182 = sphi 0, %s182
      %s184 = sphi 0, %s182
      %s185 = sphi 0, %s184
      %s199 = sphi 0, %s185
      %s203 = sphi 0, %s203
      %s205 = sphi 0, %s203
      %s206 = sphi 0, %s205
      %s220 = sphi 0, %s206
      %s224 = sphi 0, %s224
      %s226 = sphi 0, %s224
      %s227 = sphi 0, %s226
      %s241 = sphi 0, %s227
      %s245 = sphi 0, %s245
      %s247 = sphi 0, %s245
      %s248 = sphi 0, %s247
      %s262 = sphi 0, %s248
      %s266 = sphi 0, %s266
      %s268 = sphi 0, %s266
      %s269 = sphi 0, %s268
      %s283 = sphi 0, %s269
      %s287 = sphi 0, %s287
      %s289 = sphi 0, %s287
      %s290 = sphi 0, %s289
      %s304 = sphi 0, %s290
      %s312 = sphi 0, %s314
      %s315 = sphi 0, %s312
      %s316 = sphi 0, %s315
      %s332 = sphi 0, %s316
    $region4: #{tpu_custom_call.1} parent=1 // loop_header_branch
      %25 = sbr.rel (%p23) target = $region8
    $region5: #{tpu_custom_call.1} parent=1 // loop_body
      %s27 = ssub.s32 %s22, 1
      %s28 = ssub.s32 %s22, 2
      %s35 = sadd.s32 1, %s30
      %p36 = scmp.ge.s32.totalorder %s35, 2
      %s37 = scalar_select %p36, 0, %s35
      %s38 = sadd.s32 1, %s29
      %s39 = scalar_select %p36, %s38, %s29
      %p40 = scmp.ge.s32.totalorder %s39, 2
      %s41 = scalar_select %p40, 0, %s39
      %s42 = ssub.s32 %s29, %s41
      %s43 = ssub.s32 %s30, %s37
      %s44 = sor.u32 %s42, %s43
      %p45 = scmp.eq.s32.totalorder %s44, 0
      %s47 = sadd.s32 %s46, 1
      %s48 = scalar_select %p45, %s46, %s47
      %p51 = pneg %p45
      %p52 = scmp.eq.s32.totalorder %s22, 3
      %p53 = por %p51, %p52
      %p54 = scmp.ne.s32.totalorder %s46, %s49
      %p55 = scmp.eq.s32.totalorder %s22, 0
      %p56 = por %p54, %p55
      %p57 = scmp.ne.s32.totalorder %s46, %s49
      %p58 = scmp.eq.s32.totalorder %s27, 3
      %p59 = por %p57, %p58
      %p60 = scmp.ne.s32.totalorder %s49, %s50
      %p61 = scmp.eq.s32.totalorder %s27, 0
      %p62 = por %p60, %p61
      %p63 = scmp.ne.s32.totalorder %s49, %s50
      %p64 = scmp.eq.s32.totalorder %s28, 3
      %p65 = por %p63, %p64
      %p67 = scmp.ne.s32.totalorder %s50, %s66
      %p68 = scmp.eq.s32.totalorder %s28, 0
      %p69 = por %p67, %p68
      %s70 = ssub.s32 %s29, %s41
      %s71 = ssub.s32 %s30, %s37
      %s72 = sor.u32 %s70, %s71
      %p73 = scmp.eq.s32.totalorder %s72, 0
      %s75 = sadd.s32 %s74, 1
      %s76 = scalar_select %p73, %s74, %s75
      %p79 = pneg %p73
      %p80 = scmp.eq.s32.totalorder %s22, 3
      %p81 = por %p79, %p80
      %p82 = scmp.ne.s32.totalorder %s74, %s77
      %p83 = scmp.eq.s32.totalorder %s22, 0
      %p84 = por %p82, %p83
      %p85 = scmp.ne.s32.totalorder %s74, %s77
      %p86 = scmp.eq.s32.totalorder %s27, 3
      %p87 = por %p85, %p86
      %p88 = scmp.ne.s32.totalorder %s77, %s78
      %p89 = scmp.eq.s32.totalorder %s27, 0
      %p90 = por %p88, %p89
      %p91 = scmp.ne.s32.totalorder %s77, %s78
      %p92 = scmp.eq.s32.totalorder %s28, 3
      %p93 = por %p91, %p92
      %p95 = scmp.ne.s32.totalorder %s78, %s94
      %p96 = scmp.eq.s32.totalorder %s28, 0
      %p97 = por %p95, %p96
      %s99 = sadd.s32 %s98, 1
      %p102 = scmp.eq.s32.totalorder %s22, 3
      %p103 = scmp.ne.s32.totalorder %s98, %s100
      %p104 = scmp.eq.s32.totalorder %s22, 0
      %p105 = por %p103, %p104
      %p106 = scmp.ne.s32.totalorder %s98, %s100
      %p107 = scmp.eq.s32.totalorder %s27, 3
      %p108 = por %p106, %p107
      %p109 = scmp.ne.s32.totalorder %s100, %s101
      %p110 = scmp.eq.s32.totalorder %s27, 0
      %p111 = por %p109, %p110
      %p112 = scmp.ne.s32.totalorder %s100, %s101
      %p113 = scmp.eq.s32.totalorder %s28, 3
      %p114 = por %p112, %p113
      %p116 = scmp.ne.s32.totalorder %s101, %s115
      %p117 = scmp.eq.s32.totalorder %s28, 0
      %p118 = por %p116, %p117
      %s120 = sadd.s32 %s119, 1
      %p123 = scmp.eq.s32.totalorder %s22, 3
      %p124 = scmp.ne.s32.totalorder %s119, %s121
      %p125 = scmp.eq.s32.totalorder %s22, 0
      %p126 = por %p124, %p125
      %p127 = scmp.ne.s32.totalorder %s119, %s121
      %p128 = scmp.eq.s32.totalorder %s27, 3
      %p129 = por %p127, %p128
      %p130 = scmp.ne.s32.totalorder %s121, %s122
      %p131 = scmp.eq.s32.totalorder %s27, 0
      %p132 = por %p130, %p131
      %p133 = scmp.ne.s32.totalorder %s121, %s122
      %p134 = scmp.eq.s32.totalorder %s28, 3
      %p135 = por %p133, %p134
      %p137 = scmp.ne.s32.totalorder %s122, %s136
      %p138 = scmp.eq.s32.totalorder %s28, 0
      %p139 = por %p137, %p138
      %s141 = sadd.s32 %s140, 1
      %p144 = scmp.eq.s32.totalorder %s22, 3
      %p145 = scmp.ne.s32.totalorder %s140, %s142
      %p146 = scmp.eq.s32.totalorder %s22, 0
      %p147 = por %p145, %p146
      %p148 = scmp.ne.s32.totalorder %s140, %s142
      %p149 = scmp.eq.s32.totalorder %s27, 3
      %p150 = por %p148, %p149
      %p151 = scmp.ne.s32.totalorder %s142, %s143
      %p152 = scmp.eq.s32.totalorder %s27, 0
      %p153 = por %p151, %p152
      %p154 = scmp.ne.s32.totalorder %s142, %s143
      %p155 = scmp.eq.s32.totalorder %s28, 3
      %p156 = por %p154, %p155
      %p158 = scmp.ne.s32.totalorder %s143, %s157
      %p159 = scmp.eq.s32.totalorder %s28, 0
      %p160 = por %p158, %p159
      %s162 = sadd.s32 %s161, 1
      %p165 = scmp.eq.s32.totalorder %s22, 3
      %p166 = scmp.ne.s32.totalorder %s161, %s163
      %p167 = scmp.eq.s32.totalorder %s22, 0
      %p168 = por %p166, %p167
      %p169 = scmp.ne.s32.totalorder %s161, %s163
      %p170 = scmp.eq.s32.totalorder %s27, 3
      %p171 = por %p169, %p170
      %p172 = scmp.ne.s32.totalorder %s163, %s164
      %p173 = scmp.eq.s32.totalorder %s27, 0
      %p174 = por %p172, %p173
      %p175 = scmp.ne.s32.totalorder %s163, %s164
      %p176 = scmp.eq.s32.totalorder %s28, 3
      %p177 = por %p175, %p176
      %p179 = scmp.ne.s32.totalorder %s164, %s178
      %p180 = scmp.eq.s32.totalorder %s28, 0
      %p181 = por %p179, %p180
      %s183 = sadd.s32 %s182, 1
      %p186 = scmp.eq.s32.totalorder %s22, 3
      %p187 = scmp.ne.s32.totalorder %s182, %s184
      %p188 = scmp.eq.s32.totalorder %s22, 0
      %p189 = por %p187, %p188
      %p190 = scmp.ne.s32.totalorder %s182, %s184
      %p191 = scmp.eq.s32.totalorder %s27, 3
      %p192 = por %p190, %p191
      %p193 = scmp.ne.s32.totalorder %s184, %s185
      %p194 = scmp.eq.s32.totalorder %s27, 0
      %p195 = por %p193, %p194
      %p196 = scmp.ne.s32.totalorder %s184, %s185
      %p197 = scmp.eq.s32.totalorder %s28, 3
      %p198 = por %p196, %p197
      %p200 = scmp.ne.s32.totalorder %s185, %s199
      %p201 = scmp.eq.s32.totalorder %s28, 0
      %p202 = por %p200, %p201
      %s204 = sadd.s32 %s203, 1
      %p207 = scmp.eq.s32.totalorder %s22, 3
      %p208 = scmp.ne.s32.totalorder %s203, %s205
      %p209 = scmp.eq.s32.totalorder %s22, 0
      %p210 = por %p208, %p209
      %p211 = scmp.ne.s32.totalorder %s203, %s205
      %p212 = scmp.eq.s32.totalorder %s27, 3
      %p213 = por %p211, %p212
      %p214 = scmp.ne.s32.totalorder %s205, %s206
      %p215 = scmp.eq.s32.totalorder %s27, 0
      %p216 = por %p214, %p215
      %p217 = scmp.ne.s32.totalorder %s205, %s206
      %p218 = scmp.eq.s32.totalorder %s28, 3
      %p219 = por %p217, %p218
      %p221 = scmp.ne.s32.totalorder %s206, %s220
      %p222 = scmp.eq.s32.totalorder %s28, 0
      %p223 = por %p221, %p222
      %s225 = sadd.s32 %s224, 1
      %p228 = scmp.eq.s32.totalorder %s22, 3
      %p229 = scmp.ne.s32.totalorder %s224, %s226
      %p230 = scmp.eq.s32.totalorder %s22, 0
      %p231 = por %p229, %p230
      %p232 = scmp.ne.s32.totalorder %s224, %s226
      %p233 = scmp.eq.s32.totalorder %s27, 3
      %p234 = por %p232, %p233
      %p235 = scmp.ne.s32.totalorder %s226, %s227
      %p236 = scmp.eq.s32.totalorder %s27, 0
      %p237 = por %p235, %p236
      %p238 = scmp.ne.s32.totalorder %s226, %s227
      %p239 = scmp.eq.s32.totalorder %s28, 3
      %p240 = por %p238, %p239
      %p242 = scmp.ne.s32.totalorder %s227, %s241
      %p243 = scmp.eq.s32.totalorder %s28, 0
      %p244 = por %p242, %p243
      %s246 = sadd.s32 %s245, 1
      %p249 = scmp.eq.s32.totalorder %s22, 3
      %p250 = scmp.ne.s32.totalorder %s245, %s247
      %p251 = scmp.eq.s32.totalorder %s22, 0
      %p252 = por %p250, %p251
      %p253 = scmp.ne.s32.totalorder %s245, %s247
      %p254 = scmp.eq.s32.totalorder %s27, 3
      %p255 = por %p253, %p254
      %p256 = scmp.ne.s32.totalorder %s247, %s248
      %p257 = scmp.eq.s32.totalorder %s27, 0
      %p258 = por %p256, %p257
      %p259 = scmp.ne.s32.totalorder %s247, %s248
      %p260 = scmp.eq.s32.totalorder %s28, 3
      %p261 = por %p259, %p260
      %p263 = scmp.ne.s32.totalorder %s248, %s262
      %p264 = scmp.eq.s32.totalorder %s28, 0
      %p265 = por %p263, %p264
      %s267 = sadd.s32 %s266, 1
      %p270 = scmp.eq.s32.totalorder %s22, 3
      %p271 = scmp.ne.s32.totalorder %s266, %s268
      %p272 = scmp.eq.s32.totalorder %s22, 0
      %p273 = por %p271, %p272
      %p274 = scmp.ne.s32.totalorder %s266, %s268
      %p275 = scmp.eq.s32.totalorder %s27, 3
      %p276 = por %p274, %p275
      %p277 = scmp.ne.s32.totalorder %s268, %s269
      %p278 = scmp.eq.s32.totalorder %s27, 0
      %p279 = por %p277, %p278
      %p280 = scmp.ne.s32.totalorder %s268, %s269
      %p281 = scmp.eq.s32.totalorder %s28, 3
      %p282 = por %p280, %p281
      %p284 = scmp.ne.s32.totalorder %s269, %s283
      %p285 = scmp.eq.s32.totalorder %s28, 0
      %p286 = por %p284, %p285
      %s288 = sadd.s32 %s287, 1
      %p291 = scmp.eq.s32.totalorder %s22, 3
      %p292 = scmp.ne.s32.totalorder %s287, %s289
      %p293 = scmp.eq.s32.totalorder %s22, 0
      %p294 = por %p292, %p293
      %p295 = scmp.ne.s32.totalorder %s287, %s289
      %p296 = scmp.eq.s32.totalorder %s27, 3
      %p297 = por %p295, %p296
      %p298 = scmp.ne.s32.totalorder %s289, %s290
      %p299 = scmp.eq.s32.totalorder %s27, 0
      %p300 = por %p298, %p299
      %p301 = scmp.ne.s32.totalorder %s289, %s290
      %p302 = scmp.eq.s32.totalorder %s28, 3
      %p303 = por %p301, %p302
      %p305 = scmp.ne.s32.totalorder %s290, %s304
      %p306 = scmp.eq.s32.totalorder %s28, 0
      %p307 = por %p305, %p306
      %s308 = ssub.s32 %s29, %s41
      %s309 = ssub.s32 %s30, %s37
      %s310 = sor.u32 %s308, %s309
      %p311 = scmp.eq.s32.totalorder %s310, 0
      %s313 = sadd.s32 %s312, 1
      %s314 = scalar_select %p311, %s312, %s313
      %p317 = pneg %p311
      %p318 = scmp.eq.s32.totalorder %s22, 3
      %p319 = por %p317, %p318
      %p320 = scmp.ne.s32.totalorder %s312, %s315
      %p321 = scmp.eq.s32.totalorder %s22, 0
      %p322 = por %p320, %p321
      %p323 = scmp.ne.s32.totalorder %s312, %s315
      %p324 = scmp.eq.s32.totalorder %s27, 3
      %p325 = por %p323, %p324
      %p326 = scmp.ne.s32.totalorder %s315, %s316
      %p327 = scmp.eq.s32.totalorder %s27, 0
      %p328 = por %p326, %p327
      %p329 = scmp.ne.s32.totalorder %s315, %s316
      %p330 = scmp.eq.s32.totalorder %s28, 3
      %p331 = por %p329, %p330
      %p333 = scmp.ne.s32.totalorder %s316, %s332
      %p334 = scmp.eq.s32.totalorder %s28, 0
      %p335 = por %p333, %p334
      %p336 = scmp.le.s32.totalorder 1, %s22
      %p337 = scmp.lt.s32.totalorder %s22, 5
      %p338 = pnand %p336, %p337
      %p339 = pneg %p338
      // Predicated region
      $region9: #{tpu_custom_call.1} parent=5 // pred_check
        _
      $region10: #{tpu_custom_call.1} parent=5 // pred_check_branch
        %341 = sbr.rel (%p338) target = $region12
      $region11: #{tpu_custom_call.1} parent=5 // pred_region
        %s342 = ssub.s32 %s22, 1
        // Predicated region
        $region13: #{tpu_custom_call.1} parent=11 // pred_check
          %p343 = pneg %p111
        $region14: #{tpu_custom_call.1} parent=11 // pred_check_branch
          %345 = sbr.rel (%p343) target = $region16
        $region15: #{tpu_custom_call.1} parent=11 // pred_region
          _
        $region16: #{tpu_custom_call.1} parent=11 // pred_fallthru
          _
        // Predicated region
        $region17: #{tpu_custom_call.1} parent=11 // pred_check
          %p346 = pneg %p132
        $region18: #{tpu_custom_call.1} parent=11 // pred_check_branch
          %348 = sbr.rel (%p346) target = $region20
        $region19: #{tpu_custom_call.1} parent=11 // pred_region
          _
        $region20: #{tpu_custom_call.1} parent=11 // pred_fallthru
          _
        // Predicated region
        $region21: #{tpu_custom_call.1} parent=11 // pred_check
          %p349 = pneg %p153
        $region22: #{tpu_custom_call.1} parent=11 // pred_check_branch
          %351 = sbr.rel (%p349) target = $region24
        $region23: #{tpu_custom_call.1} parent=11 // pred_region
          %353 = vsyncadd [#allocation4], 0
          %s354 = sshll.u32 %s4, 4
          %s355 = int_to_ptr.hbm [resolvable:$true] %s354
          %s356 = sshll.u32 [#allocation3], 4
          %s357 = int_to_ptr.vmem [resolvable:$true] %s356
          %362 = dma.hbm_to_vmem [thread:$0]  %s355, 4608, %s357, [#allocation4], 128, 128, 8
        $region24: #{tpu_custom_call.1} parent=11 // pred_fallthru
          _
        // Predicated region
        $region25: #{tpu_custom_call.1} parent=11 // pred_check
          %p363 = pneg %p174
        $region26: #{tpu_custom_call.1} parent=11 // pred_check_branch
          %365 = sbr.rel (%p363) target = $region28
        $region27: #{tpu_custom_call.1} parent=11 // pred_region
          _
        $region28: #{tpu_custom_call.1} parent=11 // pred_fallthru
          _
        // Predicated region
        $region29: #{tpu_custom_call.1} parent=11 // pred_check
          %p366 = pneg %p195
        $region30: #{tpu_custom_call.1} parent=11 // pred_check_branch
          %368 = sbr.rel (%p366) target = $region32
        $region31: #{tpu_custom_call.1} parent=11 // pred_region
          _
        $region32: #{tpu_custom_call.1} parent=11 // pred_fallthru
          _
        // Predicated region
        $region33: #{tpu_custom_call.1} parent=11 // pred_check
          %p369 = pneg %p216
        $region34: #{tpu_custom_call.1} parent=11 // pred_check_branch
          %371 = sbr.rel (%p369) target = $region36
        $region35: #{tpu_custom_call.1} parent=11 // pred_region
          _
        $region36: #{tpu_custom_call.1} parent=11 // pred_fallthru
          _
        // Predicated region
        $region37: #{tpu_custom_call.1} parent=11 // pred_check
          %p372 = pneg %p237
        $region38: #{tpu_custom_call.1} parent=11 // pred_check_branch
          %374 = sbr.rel (%p372) target = $region40
        $region39: #{tpu_custom_call.1} parent=11 // pred_region
          _
        $region40: #{tpu_custom_call.1} parent=11 // pred_fallthru
          _
        // Predicated region
        $region41: #{tpu_custom_call.1} parent=11 // pred_check
          %p375 = pneg %p258
        $region42: #{tpu_custom_call.1} parent=11 // pred_check_branch
          %377 = sbr.rel (%p375) target = $region44
        $region43: #{tpu_custom_call.1} parent=11 // pred_region
          _
        $region44: #{tpu_custom_call.1} parent=11 // pred_fallthru
          _
        // Predicated region
        $region45: #{tpu_custom_call.1} parent=11 // pred_check
          %p378 = pneg %p279
        $region46: #{tpu_custom_call.1} parent=11 // pred_check_branch
          %380 = sbr.rel (%p378) target = $region48
        $region47: #{tpu_custom_call.1} parent=11 // pred_region
          _
        $region48: #{tpu_custom_call.1} parent=11 // pred_fallthru
          _
        // Predicated region
        $region49: #{tpu_custom_call.1} parent=11 // pred_check
          %p381 = pneg %p300
        $region50: #{tpu_custom_call.1} parent=11 // pred_check_branch
          %383 = sbr.rel (%p381) target = $region52
        $region51: #{tpu_custom_call.1} parent=11 // pred_region
          _
        $region52: #{tpu_custom_call.1} parent=11 // pred_fallthru
          _
      $region12: #{tpu_custom_call.1} parent=5 // pred_fallthru
        _
      %p384 = scmp.lt.s32.totalorder %s22, 4
      // Predicated region
      $region53: #{tpu_custom_call.1} parent=5 // pred_check
        %p385 = pneg %p384
      $region54: #{tpu_custom_call.1} parent=5 // pred_check_branch
        %387 = sbr.rel (%p385) target = $region56
      $region55: #{tpu_custom_call.1} parent=5 // pred_region
        // Predicated region
        $region57: #{tpu_custom_call.1} parent=55 // pred_check
          %p388 = pneg %p56
        $region58: #{tpu_custom_call.1} parent=55 // pred_check_branch
          %390 = sbr.rel (%p388) target = $region60
        $region59: #{tpu_custom_call.1} parent=55 // pred_region
          %p391 = scmp.lt.s32.totalorder %s29, 1
          %s392 = scalar_select %p391, %s29, 1
          %p393 = scmp.lt.s32.totalorder %s30, 1
          %s394 = scalar_select %p393, %s30, 1
          %s395 = smul.addr %s394, 3
          %s396 = smul.addr %s392, 6
          %s397 = sadd.s32 %s395, %s396
          %s398 = smul.addr %s397, 8
          %s399 = scalar_lea.vmem %s0, %s398
        $region60: #{tpu_custom_call.1} parent=55 // pred_fallthru
          _
        // Predicated region
        $region61: #{tpu_custom_call.1} parent=55 // pred_check
          %p400 = pneg %p84
        $region62: #{tpu_custom_call.1} parent=55 // pred_check_branch
          %402 = sbr.rel (%p400) target = $region64
        $region63: #{tpu_custom_call.1} parent=55 // pred_region
          %p403 = scmp.lt.s32.totalorder %s29, 1
          %s404 = scalar_select %p403, %s29, 1
          %p405 = scmp.lt.s32.totalorder %s30, 1
          %s406 = scalar_select %p405, %s30, 1
          %s407 = smul.addr %s406, 3
          %s408 = smul.addr %s404, 6
          %s409 = sadd.s32 %s407, %s408
          %s410 = smul.addr %s409, 8
          %s411 = scalar_lea.vmem %s1, %s410
        $region64: #{tpu_custom_call.1} parent=55 // pred_fallthru
          _
      $region56: #{tpu_custom_call.1} parent=5 // pred_fallthru
        _
      %p412 = scmp.le.s32.totalorder 1, %s22
      %p413 = scmp.lt.s32.totalorder %s22, 5
      %p414 = pnand %p412, %p413
      %p415 = pneg %p414
      // Predicated region
      $region65: #{tpu_custom_call.1} parent=5 // pred_check
        _
      $region66: #{tpu_custom_call.1} parent=5 // pred_check_branch
        %417 = sbr.rel (%p414) target = $region68
      $region67: #{tpu_custom_call.1} parent=5 // pred_region
        %s418 = ssub.s32 %s22, 1
        // Predicated region
        $region69: #{tpu_custom_call.1} parent=67 // pred_check
          %p419 = pneg %p153
        $region70: #{tpu_custom_call.1} parent=67 // pred_check_branch
          %421 = sbr.rel (%p419) target = $region72
        $region71: #{tpu_custom_call.1} parent=67 // pred_region
          %423 = dma.done [#allocation4], 4608
        $region72: #{tpu_custom_call.1} parent=67 // pred_fallthru
          _
        %p424 = scmp.lt.s32.totalorder %s31, 1
        %s425 = scalar_select %p424, %s31, 1
        %p426 = scmp.lt.s32.totalorder %s32, 1
        %s427 = scalar_select %p426, %s32, 1
        %s428 = smul.addr %s427, 3
        %s429 = smul.addr %s425, 6
        %s430 = sadd.s32 %s428, %s429
        %s431 = smul.addr %s430, 8
        %s432 = scalar_lea.vmem %s0, %s431
        %p433 = pneg %p62
        %p434 = pneg %p59
        %p435 = scmp.lt.s32.totalorder %s31, 1
        %s436 = scalar_select %p435, %s31, 1
        %p437 = scmp.lt.s32.totalorder %s32, 1
        %s438 = scalar_select %p437, %s32, 1
        %s439 = smul.addr %s438, 3
        %s440 = smul.addr %s436, 6
        %s441 = sadd.s32 %s439, %s440
        %s442 = smul.addr %s441, 8
        %s443 = scalar_lea.vmem %s1, %s442
        %p444 = pneg %p90
        %p445 = pneg %p87
        %p446 = pneg %p111
        %p447 = pneg %p108
        %p448 = pneg %p132
        %p449 = pneg %p129
        %p450 = pneg %p153
        %p451 = pneg %p150
        %p452 = pneg %p174
        %p453 = pneg %p171
        %p454 = pneg %p195
        %p455 = pneg %p192
        %p456 = pneg %p216
        %p457 = pneg %p213
        %p458 = pneg %p237
        %p459 = pneg %p234
        %p460 = pneg %p258
        %p461 = pneg %p255
        %p462 = pneg %p279
        %p463 = pneg %p276
        %p464 = pneg %p300
        %p465 = pneg %p297
        %p466 = pneg %p328
        %p467 = pneg %p325
        %s468 = sand.u32 %s315, 1
        %s469 = scalar_lea.sflag [#allocation5], %s468
        %s470 = sand.u32 %s315, 1
        %s471 = smul.addr %s470, 8
        %s472 = scalar_lea.vmem [#allocation6], %s471
        %p473 = scmp.lt.s32.totalorder %s31, 1
        %s474 = scalar_select %p473, %s31, 1
        %p475 = scmp.lt.s32.totalorder %s32, 1
        %s476 = scalar_select %p475, %s32, 1
        %s477 = smul.addr %s476, 3
        %s478 = smul.addr %s474, 6
        %s479 = sadd.s32 %s477, %s478
        %s480 = smul.addr %s479, 8
        %s481 = scalar_lea.vmem %s0, %s480
        %p482 = scmp.lt.s32.totalorder %s31, 1
        %s483 = scalar_select %p482, %s31, 1
        %p484 = scmp.lt.s32.totalorder %s32, 1
        %s485 = scalar_select %p484, %s32, 1
        %s486 = smul.addr %s485, 3
        %s487 = smul.addr %s483, 6
        %s488 = sadd.s32 %s486, %s487
        %s489 = smul.addr %s488, 8
        %s490 = scalar_lea.vmem %s1, %s489
        %v491 = vld [vmem:[%s481] sm:$0xff]
        %v492 = vld [vmem:[%s481 + $0x8] sm:$0xff]
        %v493 = vld [vmem:[%s481 + $0x10] sm:$0xff]
        %v494 = vld [vmem:[%s490] sm:$0xff]
        %v495 = vld [vmem:[%s490 + $0x8] sm:$0xff]
        %v496 = vld [vmem:[%s490 + $0x10] sm:$0xff]
        %vm497 = vcmask 253952
        %498 = vst.msk [vmem:[#allocation2] sm:$0x1] %vm497, 0.0
        %499 = vst.msk [vmem:[#allocation2 + $0x19] sm:$0x1] %vm497, 0.0
        %v500 = vld [vmem:[%s2] sm:$0x3]
        %v501 = vld [vmem:[%s3] sm:$0x1]
        %v503 = vperm.slane %v501, 0
        %vm505 = vcmask 15360
        %v507 = vsel %vm505, %v491, 0
        %v510 = vsel %vm505, %v492, 0
        %v513 = vsel %vm505, %v493, 0
        %vm515 = vcmask 1041408
        %v517 = vsel %vm515, %v500, 0
        %519 = vmatpush.msra.mxu0 0.0
        %520 = vmatpush.msra.mxu0 0.0
        %521 = vmatpush.msra.mxu0 0.0
        %522 = vmatpush.msra.mxu0 0.0
        %523 = vmatpush.msra.mxu0 0.0
        %524 = vmatpush.msra.mxu0 0.0
        %525 = vmatpush.msra.mxu0 0.0
        %526 = vmatpush.msra.mxu0 0.0
        %527 = vmatpush.msra.mxu0 0.0
        %528 = vmatpush.msra.mxu0 0.0
        %529 = vmatpush.msra.mxu0 0.0
        %530 = vmatpush.msra.mxu0 0.0
        %531 = vmatpush.msra.mxu0 0.0
        %532 = vmatpush.msra.mxu0 0.0
        %533 = vmatpush.msra.mxu0 0.0
        %534 = vmatpush.msra.mxu0 %v517
        %535 = vmatmul.f32.gmra.mxu0 %v507
        %v536 = vpop.f32.mrf.mxu0
        %v537 = vadd.f32 %v503, %v536
        %538 = vmatmul.f32.gmra.mxu0 %v510
        %v539 = vpop.f32.mrf.mxu0
        %v540 = vadd.f32 %v503, %v539
        %541 = vmatmul.f32.gmra.mxu0 %v513
        %v542 = vpop.f32.mrf.mxu0
        %v543 = vadd.f32 %v503, %v542
        %544 = vdwg.mxu0
        %546 = vset.pattern.permute.xlu0 0
        %547 = vperm.xlu0 %546, %v494
        %v548 = vpop.permute.xlu0 %547
        %551 = vset.pattern.permute.xlu0 0
        %552 = vperm.xlu0 %551, %v495
        %v553 = vpop.permute.xlu0 %552
        %556 = vset.pattern.permute.xlu0 0
        %557 = vperm.xlu0 %556, %v496
        %v558 = vpop.permute.xlu0 %557
        %v560 = vmul.f32 %v537, %v548
        %v561 = vmul.f32 %v540, %v553
        %v562 = vmul.f32 %v543, %v558
        %vm563 = vcmask 261120
        %564 = vst.msk [vmem:[#allocation2 + $0x1] sm:$0xff] %vm563, %v560
        %565 = vst.msk [vmem:[#allocation2 + $0x9] sm:$0xff] %vm563, %v561
        %566 = vst.msk [vmem:[#allocation2 + $0x11] sm:$0xff] %vm563, %v562
        %v567 = vld [vmem:[#allocation2] sm:$0xff]
        %v568 = vld [vmem:[#allocation2 + $0x8] sm:$0xff]
        %v569 = vld [vmem:[#allocation2 + $0x10] sm:$0xff]
        %v570 = vld [vmem:[#allocation3] sm:$0xff]
        %v571 = vld [vmem:[#allocation3 + $0x8] sm:$0xff]
        %v572 = vld [vmem:[#allocation3 + $0x10] sm:$0xff]
        %v573 = vld [vmem:[#allocation3 + $0x18] sm:$0xff]
        %v574 = vld [vmem:[#allocation2 + $0x1] sm:$0xff]
        %v575 = vld [vmem:[#allocation2 + $0x9] sm:$0xff]
        %v576 = vld [vmem:[#allocation2 + $0x11] sm:$0xff]
        %s577 = scalar_lea.vmem [#allocation3], 32
        %v578 = vld [vmem:[%s577] sm:$0xff]
        %v579 = vld [vmem:[%s577 + $0x8] sm:$0xff]
        %v580 = vld [vmem:[%s577 + $0x10] sm:$0xff]
        %v581 = vld [vmem:[%s577 + $0x18] sm:$0xff]
        %v583 = vsel %vm563, %v574, 0
        %v586 = vsel %vm563, %v575, 0
        %v589 = vsel %vm563, %v576, 0
        %591 = vmatpush.msra.mxu0 0.0
        %592 = vmatpush.msra.mxu0 0.0
        %593 = vmatpush.msra.mxu0 0.0
        %594 = vmatpush.msra.mxu0 0.0
        %595 = vmatpush.msra.mxu0 0.0
        %596 = vmatpush.msra.mxu0 0.0
        %597 = vmatpush.msra.mxu0 0.0
        %598 = vmatpush.msra.mxu0 0.0
        %599 = vmatpush.msra.mxu0 0.0
        %600 = vmatpush.msra.mxu0 0.0
        %601 = vmatpush.msra.mxu0 0.0
        %602 = vmatpush.msra.mxu0 0.0
        %603 = vmatpush.msra.mxu0 %v581
        %604 = vmatpush.msra.mxu0 %v580
        %605 = vmatpush.msra.mxu0 %v579
        %606 = vmatpush.msra.mxu0 %v578
        %607 = vmatmul.f32.gmra.mxu0 %v583
        %v608 = vpop.f32.mrf.mxu0
        %v609 = vadd.f32 0.0, %v608
        %610 = vmatmul.f32.gmra.mxu0 %v586
        %v611 = vpop.f32.mrf.mxu0
        %v612 = vadd.f32 0.0, %v611
        %613 = vmatmul.f32.gmra.mxu0 %v589
        %v614 = vpop.f32.mrf.mxu0
        %v615 = vadd.f32 0.0, %v614
        %616 = vdwg.mxu0
        %v618 = vsel %vm563, %v567, 0
        %v621 = vsel %vm563, %v568, 0
        %v624 = vsel %vm563, %v569, 0
        %626 = vmatpush.msra.mxu0 0.0
        %627 = vmatpush.msra.mxu0 0.0
        %628 = vmatpush.msra.mxu0 0.0
        %629 = vmatpush.msra.mxu0 0.0
        %630 = vmatpush.msra.mxu0 0.0
        %631 = vmatpush.msra.mxu0 0.0
        %632 = vmatpush.msra.mxu0 0.0
        %633 = vmatpush.msra.mxu0 0.0
        %634 = vmatpush.msra.mxu0 0.0
        %635 = vmatpush.msra.mxu0 0.0
        %636 = vmatpush.msra.mxu0 0.0
        %637 = vmatpush.msra.mxu0 0.0
        %638 = vmatpush.msra.mxu0 %v573
        %639 = vmatpush.msra.mxu0 %v572
        %640 = vmatpush.msra.mxu0 %v571
        %641 = vmatpush.msra.mxu0 %v570
        %642 = vmatmul.f32.gmra.mxu0 %v618
        %v643 = vpop.f32.mrf.mxu0
        %v644 = vadd.f32 %v609, %v643
        %645 = vmatmul.f32.gmra.mxu0 %v621
        %v646 = vpop.f32.mrf.mxu0
        %v647 = vadd.f32 %v612, %v646
        %648 = vmatmul.f32.gmra.mxu0 %v624
        %v649 = vpop.f32.mrf.mxu0
        %v650 = vadd.f32 %v615, %v649
        %651 = vdwg.mxu0
        %v652 = vld [vmem:[#allocation2 + $0x2] sm:$0xff]
        %v653 = vld [vmem:[#allocation2 + $0xa] sm:$0xff]
        %v654 = vld [vmem:[#allocation2 + $0x12] sm:$0xff]
        %s655 = scalar_lea.vmem [#allocation3], 64
        %v656 = vld [vmem:[%s655] sm:$0xff]
        %v657 = vld [vmem:[%s655 + $0x8] sm:$0xff]
        %v658 = vld [vmem:[%s655 + $0x10] sm:$0xff]
        %v659 = vld [vmem:[%s655 + $0x18] sm:$0xff]
        %v661 = vsel %vm563, %v652, 0
        %v664 = vsel %vm563, %v653, 0
        %v667 = vsel %vm563, %v654, 0
        %669 = vmatpush.msra.mxu0 0.0
        %670 = vmatpush.msra.mxu0 0.0
        %671 = vmatpush.msra.mxu0 0.0
        %672 = vmatpush.msra.mxu0 0.0
        %673 = vmatpush.msra.mxu0 0.0
        %674 = vmatpush.msra.mxu0 0.0
        %675 = vmatpush.msra.mxu0 0.0
        %676 = vmatpush.msra.mxu0 0.0
        %677 = vmatpush.msra.mxu0 0.0
        %678 = vmatpush.msra.mxu0 0.0
        %679 = vmatpush.msra.mxu0 0.0
        %680 = vmatpush.msra.mxu0 0.0
        %681 = vmatpush.msra.mxu0 %v659
        %682 = vmatpush.msra.mxu0 %v658
        %683 = vmatpush.msra.mxu0 %v657
        %684 = vmatpush.msra.mxu0 %v656
        %685 = vmatmul.f32.gmra.mxu0 %v661
        %v686 = vpop.f32.mrf.mxu0
        %v687 = vadd.f32 0.0, %v686
        %688 = vmatmul.f32.gmra.mxu0 %v664
        %v689 = vpop.f32.mrf.mxu0
        %v690 = vadd.f32 0.0, %v689
        %691 = vmatmul.f32.gmra.mxu0 %v667
        %v692 = vpop.f32.mrf.mxu0
        %v693 = vadd.f32 0.0, %v692
        %694 = vdwg.mxu0
        %v695 = vadd.f32 %v644, %v687
        %v696 = vadd.f32 %v647, %v690
        %v697 = vadd.f32 %v650, %v693
        %v698 = vld [vmem:[%s5] sm:$0x1]
        %v700 = vperm.slane %v698, 0
        %v702 = vadd.f32 %v695, %v700
        %v703 = vadd.f32 %v696, %v700
        %v704 = vadd.f32 %v697, %v700
        %v705 = vtanh.pop %v702
        %v706 = vtanh.pop %v703
        %v707 = vtanh.pop %v704
        %v708 = vxor.u32 %v702, 2147483648
        %v709 = vxor.u32 %v703, 2147483648
        %v710 = vxor.u32 %v704, 2147483648
        %v711 = vmul.f32 %v708, 1.442695
        %v712 = vpow.pop %v711
        %v713 = vmul.f32 %v709, 1.442695
        %v714 = vpow.pop %v713
        %v715 = vmul.f32 %v710, 1.442695
        %v716 = vpow.pop %v715
        %v717 = vadd.f32 %v712, 1.0
        %v718 = vadd.f32 %v714, 1.0
        %v719 = vadd.f32 %v716, 1.0
        %v720 = vrcp.pop %v717
        %v721 = vmul.f32 %v717, %v720
        %v722 = vsub.f32 1.0, %v721
        %v723 = vmul.f32 %v720, %v722
        %v724 = vadd.f32 %v720, %v723
        %vm725 = vweird.f32 %v717
        %vm726 = vweird.f32 %v720
        %vm727 = vmor %vm725, %vm726
        %v728 = vsel %vm727, %v720, %v724
        %v729 = vand.u32 2147483647, %v717
        %vm730 = vcmp.eq.f32.partialorder %v729, 8.507059e+37
        %v731 = vand.u32 %v717, 2147483648
        %v732 = vor.u32 1.1754944e-38, %v731
        %v733 = vsel %vm730, %v732, %v728
        %v734 = vmul.f32 1.0, %v733
        %v735 = vrcp.pop %v718
        %v736 = vmul.f32 %v718, %v735
        %v737 = vsub.f32 1.0, %v736
        %v738 = vmul.f32 %v735, %v737
        %v739 = vadd.f32 %v735, %v738
        %vm740 = vweird.f32 %v718
        %vm741 = vweird.f32 %v735
        %vm742 = vmor %vm740, %vm741
        %v743 = vsel %vm742, %v735, %v739
        %v744 = vand.u32 2147483647, %v718
        %vm745 = vcmp.eq.f32.partialorder %v744, 8.507059e+37
        %v746 = vand.u32 %v718, 2147483648
        %v747 = vor.u32 1.1754944e-38, %v746
        %v748 = vsel %vm745, %v747, %v743
        %v749 = vmul.f32 1.0, %v748
        %v750 = vrcp.pop %v719
        %v751 = vmul.f32 %v719, %v750
        %v752 = vsub.f32 1.0, %v751
        %v753 = vmul.f32 %v750, %v752
        %v754 = vadd.f32 %v750, %v753
        %vm755 = vweird.f32 %v719
        %vm756 = vweird.f32 %v750
        %vm757 = vmor %vm755, %vm756
        %v758 = vsel %vm757, %v750, %v754
        %v759 = vand.u32 2147483647, %v719
        %vm760 = vcmp.eq.f32.partialorder %v759, 8.507059e+37
        %v761 = vand.u32 %v719, 2147483648
        %v762 = vor.u32 1.1754944e-38, %v761
        %v763 = vsel %vm760, %v762, %v758
        %v764 = vmul.f32 1.0, %v763
        %768 = vrot.lane.b32.xlu0 %v734, 96
        %v769 = vpop.permute.xlu0 %768
        %770 = vrot.lane.b32.xlu0 %v749, 96
        %v771 = vpop.permute.xlu0 %770
        %772 = vrot.lane.b32.xlu0 %v764, 96
        %v773 = vpop.permute.xlu0 %772
        %v777 = vmul.f32 %v705, %v769
        %v778 = vmul.f32 %v706, %v771
        %v779 = vmul.f32 %v707, %v773
        %v780 = vld [vmem:[%s6] sm:$0xff]
        %v781 = vld [vmem:[%s6 + $0x8] sm:$0xff]
        %v782 = vld [vmem:[%s6 + $0x10] sm:$0xff]
        %v783 = vld [vmem:[%s6 + $0x18] sm:$0xff]
        %v784 = vld [vmem:[%s7] sm:$0x1]
        %v786 = vperm.slane %v784, 0
        %v789 = vsel %vm563, %v777, 0
        %v792 = vsel %vm563, %v778, 0
        %v795 = vsel %vm563, %v779, 0
        %797 = vmatpush.msra.mxu0 0.0
        %798 = vmatpush.msra.mxu0 0.0
        %799 = vmatpush.msra.mxu0 0.0
        %800 = vmatpush.msra.mxu0 0.0
        %801 = vmatpush.msra.mxu0 0.0
        %802 = vmatpush.msra.mxu0 0.0
        %803 = vmatpush.msra.mxu0 0.0
        %804 = vmatpush.msra.mxu0 0.0
        %805 = vmatpush.msra.mxu0 0.0
        %806 = vmatpush.msra.mxu0 0.0
        %807 = vmatpush.msra.mxu0 0.0
        %808 = vmatpush.msra.mxu0 0.0
        %809 = vmatpush.msra.mxu0 %v783
        %810 = vmatpush.msra.mxu0 %v782
        %811 = vmatpush.msra.mxu0 %v781
        %812 = vmatpush.msra.mxu0 %v780
        %813 = vmatmul.f32.gmra.mxu0 %v789
        %v814 = vpop.f32.mrf.mxu0
        %v815 = vadd.f32 %v786, %v814
        %816 = vmatmul.f32.gmra.mxu0 %v792
        %v817 = vpop.f32.mrf.mxu0
        %v818 = vadd.f32 %v786, %v817
        %819 = vmatmul.f32.gmra.mxu0 %v795
        %v820 = vpop.f32.mrf.mxu0
        %v821 = vadd.f32 %v786, %v820
        %822 = vdwg.mxu0
        %v823 = vadd.f32 %v560, %v815
        %v824 = vadd.f32 %v561, %v818
        %v825 = vadd.f32 %v562, %v821
        %v826 = vmul.f32 %v823, %v548
        %v827 = vmul.f32 %v824, %v553
        %v828 = vmul.f32 %v825, %v558
        %v829 = vadd.f32 %v818, 0.0
        %830 = vst.msk [vmem:[#allocation2 + $0x1] sm:$0xff] %vm563, %v826
        %831 = vst.msk [vmem:[#allocation2 + $0x9] sm:$0xff] %vm563, %v827
        %832 = vst.msk [vmem:[#allocation2 + $0x11] sm:$0xff] %vm563, %v828
        %v833 = vld [vmem:[#allocation2] sm:$0xff]
        %v834 = vld [vmem:[#allocation2 + $0x8] sm:$0xff]
        %v835 = vld [vmem:[#allocation2 + $0x10] sm:$0xff]
        %s836 = scalar_lea.vmem [#allocation3], 96
        %v837 = vld [vmem:[%s836] sm:$0xff]
        %v838 = vld [vmem:[%s836 + $0x8] sm:$0xff]
        %v839 = vld [vmem:[%s836 + $0x10] sm:$0xff]
        %v840 = vld [vmem:[%s836 + $0x18] sm:$0xff]
        %v841 = vld [vmem:[#allocation2 + $0x1] sm:$0xff]
        %v842 = vld [vmem:[#allocation2 + $0x9] sm:$0xff]
        %v843 = vld [vmem:[#allocation2 + $0x11] sm:$0xff]
        %s844 = scalar_lea.vmem [#allocation3], 128
        %v845 = vld [vmem:[%s844] sm:$0xff]
        %v846 = vld [vmem:[%s844 + $0x8] sm:$0xff]
        %v847 = vld [vmem:[%s844 + $0x10] sm:$0xff]
        %v848 = vld [vmem:[%s844 + $0x18] sm:$0xff]
        %v850 = vsel %vm563, %v841, 0
        %v853 = vsel %vm563, %v842, 0
        %v856 = vsel %vm563, %v843, 0
        %858 = vmatpush.msra.mxu0 0.0
        %859 = vmatpush.msra.mxu0 0.0
        %860 = vmatpush.msra.mxu0 0.0
        %861 = vmatpush.msra.mxu0 0.0
        %862 = vmatpush.msra.mxu0 0.0
        %863 = vmatpush.msra.mxu0 0.0
        %864 = vmatpush.msra.mxu0 0.0
        %865 = vmatpush.msra.mxu0 0.0
        %866 = vmatpush.msra.mxu0 0.0
        %867 = vmatpush.msra.mxu0 0.0
        %868 = vmatpush.msra.mxu0 0.0
        %869 = vmatpush.msra.mxu0 0.0
        %870 = vmatpush.msra.mxu0 %v848
        %871 = vmatpush.msra.mxu0 %v847
        %872 = vmatpush.msra.mxu0 %v846
        %873 = vmatpush.msra.mxu0 %v845
        %874 = vmatmul.f32.gmra.mxu0 %v850
        %v875 = vpop.f32.mrf.mxu0
        %v876 = vadd.f32 0.0, %v875
        %877 = vmatmul.f32.gmra.mxu0 %v853
        %v878 = vpop.f32.mrf.mxu0
        %v879 = vadd.f32 0.0, %v878
        %880 = vmatmul.f32.gmra.mxu0 %v856
        %v881 = vpop.f32.mrf.mxu0
        %v882 = vadd.f32 0.0, %v881
        %883 = vdwg.mxu0
        %v885 = vsel %vm563, %v833, 0
        %v888 = vsel %vm563, %v834, 0
        %v891 = vsel %vm563, %v835, 0
        %893 = vmatpush.msra.mxu0 0.0
        %894 = vmatpush.msra.mxu0 0.0
        %895 = vmatpush.msra.mxu0 0.0
        %896 = vmatpush.msra.mxu0 0.0
        %897 = vmatpush.msra.mxu0 0.0
        %898 = vmatpush.msra.mxu0 0.0
        %899 = vmatpush.msra.mxu0 0.0
        %900 = vmatpush.msra.mxu0 0.0
        %901 = vmatpush.msra.mxu0 0.0
        %902 = vmatpush.msra.mxu0 0.0
        %903 = vmatpush.msra.mxu0 0.0
        %904 = vmatpush.msra.mxu0 0.0
        %905 = vmatpush.msra.mxu0 %v840
        %906 = vmatpush.msra.mxu0 %v839
        %907 = vmatpush.msra.mxu0 %v838
        %908 = vmatpush.msra.mxu0 %v837
        %909 = vmatmul.f32.gmra.mxu0 %v885
        %v910 = vpop.f32.mrf.mxu0
        %v911 = vadd.f32 %v876, %v910
        %912 = vmatmul.f32.gmra.mxu0 %v888
        %v913 = vpop.f32.mrf.mxu0
        %v914 = vadd.f32 %v879, %v913
        %915 = vmatmul.f32.gmra.mxu0 %v891
        %v916 = vpop.f32.mrf.mxu0
        %v917 = vadd.f32 %v882, %v916
        %918 = vdwg.mxu0
        %v919 = vld [vmem:[#allocation2 + $0x2] sm:$0xff]
        %v920 = vld [vmem:[#allocation2 + $0xa] sm:$0xff]
        %v921 = vld [vmem:[#allocation2 + $0x12] sm:$0xff]
        %s922 = scalar_lea.vmem [#allocation3], 160
        %v923 = vld [vmem:[%s922] sm:$0xff]
        %v924 = vld [vmem:[%s922 + $0x8] sm:$0xff]
        %v925 = vld [vmem:[%s922 + $0x10] sm:$0xff]
        %v926 = vld [vmem:[%s922 + $0x18] sm:$0xff]
        %v928 = vsel %vm563, %v919, 0
        %v931 = vsel %vm563, %v920, 0
        %v934 = vsel %vm563, %v921, 0
        %936 = vmatpush.msra.mxu0 0.0
        %937 = vmatpush.msra.mxu0 0.0
        %938 = vmatpush.msra.mxu0 0.0
        %939 = vmatpush.msra.mxu0 0.0
        %940 = vmatpush.msra.mxu0 0.0
        %941 = vmatpush.msra.mxu0 0.0
        %942 = vmatpush.msra.mxu0 0.0
        %943 = vmatpush.msra.mxu0 0.0
        %944 = vmatpush.msra.mxu0 0.0
        %945 = vmatpush.msra.mxu0 0.0
        %946 = vmatpush.msra.mxu0 0.0
        %947 = vmatpush.msra.mxu0 0.0
        %948 = vmatpush.msra.mxu0 %v926
        %949 = vmatpush.msra.mxu0 %v925
        %950 = vmatpush.msra.mxu0 %v924
        %951 = vmatpush.msra.mxu0 %v923
        %952 = vmatmul.f32.gmra.mxu0 %v928
        %v953 = vpop.f32.mrf.mxu0
        %v954 = vadd.f32 0.0, %v953
        %955 = vmatmul.f32.gmra.mxu0 %v931
        %v956 = vpop.f32.mrf.mxu0
        %v957 = vadd.f32 0.0, %v956
        %958 = vmatmul.f32.gmra.mxu0 %v934
        %v959 = vpop.f32.mrf.mxu0
        %v960 = vadd.f32 0.0, %v959
        %961 = vdwg.mxu0
        %v962 = vadd.f32 %v911, %v954
        %v963 = vadd.f32 %v914, %v957
        %v964 = vadd.f32 %v917, %v960
        %s965 = scalar_lea.vmem %s5, 1
        %v966 = vld [vmem:[%s965] sm:$0x1]
        %v968 = vperm.slane %v966, 0
        %v970 = vadd.f32 %v962, %v968
        %v971 = vadd.f32 %v963, %v968
        %v972 = vadd.f32 %v964, %v968
        %v973 = vtanh.pop %v970
        %v974 = vtanh.pop %v971
        %v975 = vtanh.pop %v972
        %v976 = vxor.u32 %v970, 2147483648
        %v977 = vxor.u32 %v971, 2147483648
        %v978 = vxor.u32 %v972, 2147483648
        %v979 = vmul.f32 %v976, 1.442695
        %v980 = vpow.pop %v979
        %v981 = vmul.f32 %v977, 1.442695
        %v982 = vpow.pop %v981
        %v983 = vmul.f32 %v978, 1.442695
        %v984 = vpow.pop %v983
        %v985 = vadd.f32 %v980, 1.0
        %v986 = vadd.f32 %v982, 1.0
        %v987 = vadd.f32 %v984, 1.0
        %v988 = vrcp.pop %v985
        %v989 = vmul.f32 %v985, %v988
        %v990 = vsub.f32 1.0, %v989
        %v991 = vmul.f32 %v988, %v990
        %v992 = vadd.f32 %v988, %v991
        %vm993 = vweird.f32 %v985
        %vm994 = vweird.f32 %v988
        %vm995 = vmor %vm993, %vm994
        %v996 = vsel %vm995, %v988, %v992
        %v997 = vand.u32 2147483647, %v985
        %vm998 = vcmp.eq.f32.partialorder %v997, 8.507059e+37
        %v999 = vand.u32 %v985, 2147483648
        %v1000 = vor.u32 1.1754944e-38, %v999
        %v1001 = vsel %vm998, %v1000, %v996
        %v1002 = vmul.f32 1.0, %v1001
        %v1003 = vrcp.pop %v986
        %v1004 = vmul.f32 %v986, %v1003
        %v1005 = vsub.f32 1.0, %v1004
        %v1006 = vmul.f32 %v1003, %v1005
        %v1007 = vadd.f32 %v1003, %v1006
        %vm1008 = vweird.f32 %v986
        %vm1009 = vweird.f32 %v1003
        %vm1010 = vmor %vm1008, %vm1009
        %v1011 = vsel %vm1010, %v1003, %v1007
        %v1012 = vand.u32 2147483647, %v986
        %vm1013 = vcmp.eq.f32.partialorder %v1012, 8.507059e+37
        %v1014 = vand.u32 %v986, 2147483648
        %v1015 = vor.u32 1.1754944e-38, %v1014
        %v1016 = vsel %vm1013, %v1015, %v1011
        %v1017 = vmul.f32 1.0, %v1016
        %v1018 = vrcp.pop %v987
        %v1019 = vmul.f32 %v987, %v1018
        %v1020 = vsub.f32 1.0, %v1019
        %v1021 = vmul.f32 %v1018, %v1020
        %v1022 = vadd.f32 %v1018, %v1021
        %vm1023 = vweird.f32 %v987
        %vm1024 = vweird.f32 %v1018
        %vm1025 = vmor %vm1023, %vm1024
        %v1026 = vsel %vm1025, %v1018, %v1022
        %v1027 = vand.u32 2147483647, %v987
        %vm1028 = vcmp.eq.f32.partialorder %v1027, 8.507059e+37
        %v1029 = vand.u32 %v987, 2147483648
        %v1030 = vor.u32 1.1754944e-38, %v1029
        %v1031 = vsel %vm1028, %v1030, %v1026
        %v1032 = vmul.f32 1.0, %v1031
        %1036 = vrot.lane.b32.xlu0 %v1002, 96
        %v1037 = vpop.permute.xlu0 %1036
        %1038 = vrot.lane.b32.xlu0 %v1017, 96
        %v1039 = vpop.permute.xlu0 %1038
        %1040 = vrot.lane.b32.xlu0 %v1032, 96
        %v1041 = vpop.permute.xlu0 %1040
        %v1045 = vmul.f32 %v973, %v1037
        %v1046 = vmul.f32 %v974, %v1039
        %v1047 = vmul.f32 %v975, %v1041
        %s1048 = scalar_lea.vmem %s6, 32
        %v1049 = vld [vmem:[%s1048] sm:$0xff]
        %v1050 = vld [vmem:[%s1048 + $0x8] sm:$0xff]
        %v1051 = vld [vmem:[%s1048 + $0x10] sm:$0xff]
        %v1052 = vld [vmem:[%s1048 + $0x18] sm:$0xff]
        %s1053 = scalar_lea.vmem %s7, 1
        %v1054 = vld [vmem:[%s1053] sm:$0x1]
        %v1056 = vperm.slane %v1054, 0
        %v1059 = vsel %vm563, %v1045, 0
        %v1062 = vsel %vm563, %v1046, 0
        %v1065 = vsel %vm563, %v1047, 0
        %1067 = vmatpush.msra.mxu0 0.0
        %1068 = vmatpush.msra.mxu0 0.0
        %1069 = vmatpush.msra.mxu0 0.0
        %1070 = vmatpush.msra.mxu0 0.0
        %1071 = vmatpush.msra.mxu0 0.0
        %1072 = vmatpush.msra.mxu0 0.0
        %1073 = vmatpush.msra.mxu0 0.0
        %1074 = vmatpush.msra.mxu0 0.0
        %1075 = vmatpush.msra.mxu0 0.0
        %1076 = vmatpush.msra.mxu0 0.0
        %1077 = vmatpush.msra.mxu0 0.0
        %1078 = vmatpush.msra.mxu0 0.0
        %1079 = vmatpush.msra.mxu0 %v1052
        %1080 = vmatpush.msra.mxu0 %v1051
        %1081 = vmatpush.msra.mxu0 %v1050
        %1082 = vmatpush.msra.mxu0 %v1049
        %1083 = vmatmul.f32.gmra.mxu0 %v1059
        %v1084 = vpop.f32.mrf.mxu0
        %v1085 = vadd.f32 %v1056, %v1084
        %1086 = vmatmul.f32.gmra.mxu0 %v1062
        %v1087 = vpop.f32.mrf.mxu0
        %v1088 = vadd.f32 %v1056, %v1087
        %1089 = vmatmul.f32.gmra.mxu0 %v1065
        %v1090 = vpop.f32.mrf.mxu0
        %v1091 = vadd.f32 %v1056, %v1090
        %1092 = vdwg.mxu0
        %v1093 = vadd.f32 %v826, %v1085
        %v1094 = vadd.f32 %v827, %v1088
        %v1095 = vadd.f32 %v828, %v1091
        %v1096 = vmul.f32 %v1093, %v548
        %v1097 = vmul.f32 %v1094, %v553
        %v1098 = vmul.f32 %v1095, %v558
        %v1099 = vadd.f32 %v829, %v1088
        %1100 = vst.msk [vmem:[#allocation2 + $0x1] sm:$0xff] %vm563, %v1096
        %1101 = vst.msk [vmem:[#allocation2 + $0x9] sm:$0xff] %vm563, %v1097
        %1102 = vst.msk [vmem:[#allocation2 + $0x11] sm:$0xff] %vm563, %v1098
        %v1103 = vld [vmem:[#allocation2] sm:$0xff]
        %v1104 = vld [vmem:[#allocation2 + $0x8] sm:$0xff]
        %v1105 = vld [vmem:[#allocation2 + $0x10] sm:$0xff]
        %s1106 = scalar_lea.vmem [#allocation3], 192
        %v1107 = vld [vmem:[%s1106] sm:$0xff]
        %v1108 = vld [vmem:[%s1106 + $0x8] sm:$0xff]
        %v1109 = vld [vmem:[%s1106 + $0x10] sm:$0xff]
        %v1110 = vld [vmem:[%s1106 + $0x18] sm:$0xff]
        %v1111 = vld [vmem:[#allocation2 + $0x1] sm:$0xff]
        %v1112 = vld [vmem:[#allocation2 + $0x9] sm:$0xff]
        %v1113 = vld [vmem:[#allocation2 + $0x11] sm:$0xff]
        %s1114 = scalar_lea.vmem [#allocation3], 224
        %v1115 = vld [vmem:[%s1114] sm:$0xff]
        %v1116 = vld [vmem:[%s1114 + $0x8] sm:$0xff]
        %v1117 = vld [vmem:[%s1114 + $0x10] sm:$0xff]
        %v1118 = vld [vmem:[%s1114 + $0x18] sm:$0xff]
        %v1120 = vsel %vm563, %v1111, 0
        %v1123 = vsel %vm563, %v1112, 0
        %v1126 = vsel %vm563, %v1113, 0
        %1128 = vmatpush.msra.mxu0 0.0
        %1129 = vmatpush.msra.mxu0 0.0
        %1130 = vmatpush.msra.mxu0 0.0
        %1131 = vmatpush.msra.mxu0 0.0
        %1132 = vmatpush.msra.mxu0 0.0
        %1133 = vmatpush.msra.mxu0 0.0
        %1134 = vmatpush.msra.mxu0 0.0
        %1135 = vmatpush.msra.mxu0 0.0
        %1136 = vmatpush.msra.mxu0 0.0
        %1137 = vmatpush.msra.mxu0 0.0
        %1138 = vmatpush.msra.mxu0 0.0
        %1139 = vmatpush.msra.mxu0 0.0
        %1140 = vmatpush.msra.mxu0 %v1118
        %1141 = vmatpush.msra.mxu0 %v1117
        %1142 = vmatpush.msra.mxu0 %v1116
        %1143 = vmatpush.msra.mxu0 %v1115
        %1144 = vmatmul.f32.gmra.mxu0 %v1120
        %v1145 = vpop.f32.mrf.mxu0
        %1146 = vmatmul.f32.gmra.mxu0 %v1123
        %v1147 = vpop.f32.mrf.mxu0
        %v1148 = vadd.f32 0.0, %v1147
        %1149 = vmatmul.f32.gmra.mxu0 %v1126
        %v1150 = vpop.f32.mrf.mxu0
        %1151 = vdwg.mxu0
        %v1153 = vsel %vm563, %v1103, 0
        %v1156 = vsel %vm563, %v1104, 0
        %v1159 = vsel %vm563, %v1105, 0
        %1161 = vmatpush.msra.mxu0 0.0
        %1162 = vmatpush.msra.mxu0 0.0
        %1163 = vmatpush.msra.mxu0 0.0
        %1164 = vmatpush.msra.mxu0 0.0
        %1165 = vmatpush.msra.mxu0 0.0
        %1166 = vmatpush.msra.mxu0 0.0
        %1167 = vmatpush.msra.mxu0 0.0
        %1168 = vmatpush.msra.mxu0 0.0
        %1169 = vmatpush.msra.mxu0 0.0
        %1170 = vmatpush.msra.mxu0 0.0
        %1171 = vmatpush.msra.mxu0 0.0
        %1172 = vmatpush.msra.mxu0 0.0
        %1173 = vmatpush.msra.mxu0 %v1110
        %1174 = vmatpush.msra.mxu0 %v1109
        %1175 = vmatpush.msra.mxu0 %v1108
        %1176 = vmatpush.msra.mxu0 %v1107
        %1177 = vmatmul.f32.gmra.mxu0 %v1153
        %v1178 = vpop.f32.mrf.mxu0
        %1179 = vmatmul.f32.gmra.mxu0 %v1156
        %v1180 = vpop.f32.mrf.mxu0
        %v1181 = vadd.f32 %v1148, %v1180
        %1182 = vmatmul.f32.gmra.mxu0 %v1159
        %v1183 = vpop.f32.mrf.mxu0
        %1184 = vdwg.mxu0
        %v1185 = vld [vmem:[#allocation2 + $0x2] sm:$0xff]
        %v1186 = vld [vmem:[#allocation2 + $0xa] sm:$0xff]
        %v1187 = vld [vmem:[#allocation2 + $0x12] sm:$0xff]
        %s1188 = scalar_lea.vmem [#allocation3], 256
        %v1189 = vld [vmem:[%s1188] sm:$0xff]
        %v1190 = vld [vmem:[%s1188 + $0x8] sm:$0xff]
        %v1191 = vld [vmem:[%s1188 + $0x10] sm:$0xff]
        %v1192 = vld [vmem:[%s1188 + $0x18] sm:$0xff]
        %v1194 = vsel %vm563, %v1185, 0
        %v1197 = vsel %vm563, %v1186, 0
        %v1200 = vsel %vm563, %v1187, 0
        %1202 = vmatpush.msra.mxu0 0.0
        %1203 = vmatpush.msra.mxu0 0.0
        %1204 = vmatpush.msra.mxu0 0.0
        %1205 = vmatpush.msra.mxu0 0.0
        %1206 = vmatpush.msra.mxu0 0.0
        %1207 = vmatpush.msra.mxu0 0.0
        %1208 = vmatpush.msra.mxu0 0.0
        %1209 = vmatpush.msra.mxu0 0.0
        %1210 = vmatpush.msra.mxu0 0.0
        %1211 = vmatpush.msra.mxu0 0.0
        %1212 = vmatpush.msra.mxu0 0.0
        %1213 = vmatpush.msra.mxu0 0.0
        %1214 = vmatpush.msra.mxu0 %v1192
        %1215 = vmatpush.msra.mxu0 %v1191
        %1216 = vmatpush.msra.mxu0 %v1190
        %1217 = vmatpush.msra.mxu0 %v1189
        %1218 = vmatmul.f32.gmra.mxu0 %v1194
        %v1219 = vpop.f32.mrf.mxu0
        %1220 = vmatmul.f32.gmra.mxu0 %v1197
        %v1221 = vpop.f32.mrf.mxu0
        %v1222 = vadd.f32 0.0, %v1221
        %1223 = vmatmul.f32.gmra.mxu0 %v1200
        %v1224 = vpop.f32.mrf.mxu0
        %1225 = vdwg.mxu0
        %v1226 = vadd.f32 %v1181, %v1222
        %s1227 = scalar_lea.vmem %s5, 2
        %v1228 = vld [vmem:[%s1227] sm:$0x1]
        %v1230 = vperm.slane %v1228, 0
        %v1232 = vadd.f32 %v1226, %v1230
        %v1233 = vtanh.pop %v1232
        %v1234 = vxor.u32 %v1232, 2147483648
        %v1235 = vmul.f32 %v1234, 1.442695
        %v1236 = vpow.pop %v1235
        %v1237 = vadd.f32 %v1236, 1.0
        %v1238 = vrcp.pop %v1237
        %v1239 = vmul.f32 %v1237, %v1238
        %v1240 = vsub.f32 1.0, %v1239
        %v1241 = vmul.f32 %v1238, %v1240
        %v1242 = vadd.f32 %v1238, %v1241
        %vm1243 = vweird.f32 %v1237
        %vm1244 = vweird.f32 %v1238
        %vm1245 = vmor %vm1243, %vm1244
        %v1246 = vsel %vm1245, %v1238, %v1242
        %v1247 = vand.u32 2147483647, %v1237
        %vm1248 = vcmp.eq.f32.partialorder %v1247, 8.507059e+37
        %v1249 = vand.u32 %v1237, 2147483648
        %v1250 = vor.u32 1.1754944e-38, %v1249
        %v1251 = vsel %vm1248, %v1250, %v1246
        %v1252 = vmul.f32 1.0, %v1251
        %1254 = vrot.lane.b32.xlu0 %v1252, 96
        %v1255 = vpop.permute.xlu0 %1254
        %v1257 = vmul.f32 %v1233, %v1255
        %v1258 = vld [vmem:[%s8] sm:$0xff]
        %v1259 = vld [vmem:[%s8 + $0x8] sm:$0xff]
        %v1260 = vld [vmem:[%s8 + $0x10] sm:$0xff]
        %v1261 = vld [vmem:[%s8 + $0x18] sm:$0xff]
        %v1262 = vld [vmem:[%s9] sm:$0x1]
        %v1264 = vperm.slane %v1262, 0
        %v1267 = vsel %vm563, %v1257, 0
        %1269 = vmatpush.msra.mxu0 0.0
        %1270 = vmatpush.msra.mxu0 0.0
        %1271 = vmatpush.msra.mxu0 0.0
        %1272 = vmatpush.msra.mxu0 0.0
        %1273 = vmatpush.msra.mxu0 0.0
        %1274 = vmatpush.msra.mxu0 0.0
        %1275 = vmatpush.msra.mxu0 0.0
        %1276 = vmatpush.msra.mxu0 0.0
        %1277 = vmatpush.msra.mxu0 0.0
        %1278 = vmatpush.msra.mxu0 0.0
        %1279 = vmatpush.msra.mxu0 0.0
        %1280 = vmatpush.msra.mxu0 0.0
        %1281 = vmatpush.msra.mxu0 %v1261
        %1282 = vmatpush.msra.mxu0 %v1260
        %1283 = vmatpush.msra.mxu0 %v1259
        %1284 = vmatpush.msra.mxu0 %v1258
        %1285 = vmatmul.f32.gmra.mxu0 %v1267
        %v1286 = vpop.f32.mrf.mxu0
        %v1287 = vadd.f32 %v1264, %v1286
        %1288 = vdwg.mxu0
        %1290 = vrot.lane.b32.xlu0 %v1287, 32
        %v1291 = vpop.permute.xlu0 %1290
        %v1293 = vadd.f32 %v1099, %v1291
        %v1294 = vmul.f32 %v1293, %v553
        %v1295 = vld [vmem:[%s10] sm:$0xff]
        %v1296 = vld [vmem:[%s10 + $0x8] sm:$0xff]
        %v1297 = vld [vmem:[%s10 + $0x10] sm:$0xff]
        %v1298 = vld [vmem:[%s10 + $0x18] sm:$0xff]
        %v1299 = vld [vmem:[%s11] sm:$0x1]
        %v1301 = vperm.slane %v1299, 0
        %1304 = vrot.lane.b32.xlu0 %v1294, 96
        %v1305 = vpop.permute.xlu0 %1304
        %v1306 = vsel %vm563, %v1305, 0
        %1308 = vmatpush.msra.mxu0 0.0
        %1309 = vmatpush.msra.mxu0 0.0
        %1310 = vmatpush.msra.mxu0 0.0
        %1311 = vmatpush.msra.mxu0 0.0
        %1312 = vmatpush.msra.mxu0 0.0
        %1313 = vmatpush.msra.mxu0 0.0
        %1314 = vmatpush.msra.mxu0 0.0
        %1315 = vmatpush.msra.mxu0 0.0
        %1316 = vmatpush.msra.mxu0 0.0
        %1317 = vmatpush.msra.mxu0 0.0
        %1318 = vmatpush.msra.mxu0 0.0
        %1319 = vmatpush.msra.mxu0 0.0
        %1320 = vmatpush.msra.mxu0 %v1298
        %1321 = vmatpush.msra.mxu0 %v1297
        %1322 = vmatpush.msra.mxu0 %v1296
        %1323 = vmatpush.msra.mxu0 %v1295
        %1324 = vmatmul.f32.gmra.mxu0 %v1306
        %v1325 = vpop.f32.mrf.mxu0
        %v1326 = vadd.f32 %v1301, %v1325
        %1327 = vdwg.mxu0
        %v1328 = vmul.f32 %v1326, %v553
        %v1329 = vmul.f32 %v1328, 1.442695
        %v1330 = vpow.pop %v1329
        %v1331 = vmul.f32 %v492, %v1330
        %v1332 = vmul.f32 %v1331, %v553
        %1334 = vrot.lane.b32.xlu0 %v1332, 126
        %v1335 = vpop.permute.xlu0 %1334
        %v1337 = vsel %vm505, %v1335, 0.0
        %v1338 = vadd.f32 %v1328, %v1337
        %1339 = vst [vmem:[%s472] sm:$0xff] %v1338
        %s1340 = sand.u32 %s315, 1
        %s1341 = scalar_lea.sflag [#allocation5], %s1340
        %s1342 = sand.u32 %s315, 1
        %s1343 = smul.addr %s1342, 8
        %s1344 = scalar_lea.vmem [#allocation6], %s1343
        // Predicated region
        $region73: #{tpu_custom_call.1} parent=67 // pred_check
          %p1345 = pneg %p325
        $region74: #{tpu_custom_call.1} parent=67 // pred_check_branch
          %1347 = sbr.rel (%p1345) target = $region76
        $region75: #{tpu_custom_call.1} parent=67 // pred_region
          %1349 = vsyncadd %s1341, 0
          %s1350 = smul.addr %s31, 2
          %s1351 = sadd.s32 %s32, %s1350
          %s1352 = smul.addr %s1351, 8
          %s1353 = scalar_lea.hbm %s12, %s1352
          %s1355 = sshll.u32 %s1344, 4
          %s1356 = int_to_ptr.vmem [resolvable:$true] %s1355
          %s1357 = sshll.u32 %s1353, 4
          %s1358 = int_to_ptr.hbm [resolvable:$true] %s1357
          %1360 = dma.vmem_to_hbm [thread:$0]  %s1356, 128, %s1358, %s1341
        $region76: #{tpu_custom_call.1} parent=67 // pred_fallthru
          _
      $region68: #{tpu_custom_call.1} parent=5 // pred_fallthru
        _
      %p1361 = scmp.le.s32.totalorder 2, %s22
      // Predicated region
      $region77: #{tpu_custom_call.1} parent=5 // pred_check
        %p1362 = pneg %p1361
      $region78: #{tpu_custom_call.1} parent=5 // pred_check_branch
        %1364 = sbr.rel (%p1362) target = $region80
      $region79: #{tpu_custom_call.1} parent=5 // pred_region
        %s1365 = ssub.s32 %s22, 2
        // Predicated region
        $region81: #{tpu_custom_call.1} parent=79 // pred_check
          %p1366 = pneg %p331
        $region82: #{tpu_custom_call.1} parent=79 // pred_check_branch
          %1368 = sbr.rel (%p1366) target = $region84
        $region83: #{tpu_custom_call.1} parent=79 // pred_region
          %s1369 = sand.u32 %s316, 1
          %s1370 = scalar_lea.sflag [#allocation5], %s1369
          %s1371 = sand.u32 %s316, 1
          %s1372 = smul.addr %s1371, 8
          %s1373 = scalar_lea.vmem [#allocation6], %s1372
          %1375 = dma.done %s1370, 128
        $region84: #{tpu_custom_call.1} parent=79 // pred_fallthru
          _
      $region80: #{tpu_custom_call.1} parent=5 // pred_fallthru
        _
    $region6: #{tpu_custom_call.1} parent=1 // loop_footer
      %s26 = sadd.s32 1, %s22
    $region7: #{tpu_custom_call.1} parent=1 // loop_footer_branch
      %21 = sbr.rel target = $region3
    $region8: #{tpu_custom_call.1} parent=1 // loop_exit
      _
    %1376 = vsyncpa [#allocation4], 1
    %s1377 = scalar_lea.sflag [#allocation4], 1
    %1378 = vsyncpa %s1377, 1
    %1379 = vsyncpa [#allocation5], 1
    %s1380 = scalar_lea.sflag [#allocation5], 1
    %1381 = vsyncpa %s1380, 1

// kernel: tpu_custom_call.1
$region0: #{tpu_custom_call.1}
  #allocation0 [shape = 'u32[]', space=smem, size = 0x4, offset = 0x4, fixed_abs, tag = 'smem constant byte address 0x4 - core index']
  #allocation1 [shape = 'u32[72,128]{1,0:T(1,128)}', space=vmem, size = 0x9000, scoped, tag = 'internal scratch']
  #allocation2 [shape = 'f32[26,32]{1,0:T(8,128)}', space=vmem, size = 0x4000, scoped, tag = 'scratch operand']
  %s0 = inlined_call_operand.vmem [shape: f32[2,2,24,4], index: 0, kind: input, shape index: {}]
  %s1 = inlined_call_operand.vmem [shape: f32[2,2,24,1], index: 1, kind: input, shape index: {}]
  %s2 = inlined_call_operand.vmem [shape: f32[2,32], index: 2, kind: input, shape index: {}]
  %s3 = inlined_call_operand.vmem [shape: f32[1,32], index: 3, kind: input, shape index: {}]
  %s4 = inlined_call_operand.hbm [shape: f32[3,3,32,64], index: 4, kind: input, shape index: {}]
  %s5 = inlined_call_operand.vmem [shape: f32[3,1,64], index: 5, kind: input, shape index: {}]
  %s6 = inlined_call_operand.vmem [shape: f32[2,32,64], index: 6, kind: input, shape index: {}]
  %s7 = inlined_call_operand.vmem [shape: f32[2,1,64], index: 7, kind: input, shape index: {}]
  %s8 = inlined_call_operand.vmem [shape: f32[32,32], index: 8, kind: input, shape index: {}]
  %s9 = inlined_call_operand.vmem [shape: f32[1,32], index: 9, kind: input, shape index: {}]
  %s10 = inlined_call_operand.vmem [shape: f32[32,128], index: 10, kind: input, shape index: {}]
  %s11 = inlined_call_operand.vmem [shape: f32[1,128], index: 11, kind: input, shape index: {}]
  %s12 = inlined_call_operand.hbm [shape: f32[2,16,128], index: 12, kind: output, shape index: {}]
  %s13 = sld [smem:[#allocation0]]
  $region85: #{tpu_custom_call.1} parent=0
    _
  %s15 = ssub.s32 1, %s13
  %s16 = scalar_select 0, %s15, %s13
  $region1: #{tpu_custom_call.1} parent=0
    #allocation3 [shape = 'u8[147456]{0}', space=vmem, size = 0x24000, scoped, tag = 'input window, operand 4, single buffered']
    #allocation4 [shape = 's32[2]{0}', space=sflag, size = 0x8, scoped, tag = 'scoped memory for tpu_custom_call.1']
    #allocation5 [shape = 's32[2]{0}', space=sflag, size = 0x8, scoped, tag = 'scoped memory for tpu_custom_call.1']
    #allocation6 [shape = 'u8[8192]{0}', space=vmem, size = 0x2000, scoped, tag = 'output window, operand 0']
    %17 = vsyncpa [#allocation4], 0
    %18 = vsyncpa [#allocation5], 0
    %s19 = scalar_lea.sflag [#allocation5], 1
    %20 = vsyncpa %s19, 0
    loop: start=0, step=1, limit=6
    $region2: #{tpu_custom_call.1} parent=1 // loop_pre_header
      _
    $region3: #{tpu_custom_call.1} parent=1 // loop_header
      %s22 = sphi 0, %s26
      %p23 = scmp.ge.s32.totalorder %s22, 6
      %s29 = sphi 0, %s41
      %s30 = sphi 0, %s37
      %s31 = sphi 0, %s29
      %s32 = sphi 0, %s30
      %s33 = sphi 0, %s31
      %s34 = sphi 0, %s32
      %s46 = sphi 0, %s48
      %s49 = sphi 0, %s46
      %s50 = sphi 0, %s49
      %s66 = sphi 0, %s50
      %s74 = sphi 0, %s76
      %s77 = sphi 0, %s74
      %s78 = sphi 0, %s77
      %s94 = sphi 0, %s78
      %s98 = sphi 0, %s98
      %s100 = sphi 0, %s98
      %s101 = sphi 0, %s100
      %s115 = sphi 0, %s101
      %s119 = sphi 0, %s119
      %s121 = sphi 0, %s119
      %s122 = sphi 0, %s121
      %s136 = sphi 0, %s122
      %s140 = sphi 0, %s140
      %s142 = sphi 0, %s140
      %s143 = sphi 0, %s142
      %s157 = sphi 0, %s143
      %s161 = sphi 0, %s161
      %s163 = sphi 0, %s161
      %s164 = sphi 0, %s163
      %s178 = sphi 0, %s164
      %s182 = sphi 0, %s182
      %s184 = sphi 0, %s182
      %s185 = sphi 0, %s184
      %s199 = sphi 0, %s185
      %s203 = sphi 0, %s203
      %s205 = sphi 0, %s203
      %s206 = sphi 0, %s205
      %s220 = sphi 0, %s206
      %s224 = sphi 0, %s224
      %s226 = sphi 0, %s224
      %s227 = sphi 0, %s226
      %s241 = sphi 0, %s227
      %s245 = sphi 0, %s245
      %s247 = sphi 0, %s245
      %s248 = sphi 0, %s247
      %s262 = sphi 0, %s248
      %s266 = sphi 0, %s266
      %s268 = sphi 0, %s266
      %s269 = sphi 0, %s268
      %s283 = sphi 0, %s269
      %s287 = sphi 0, %s287
      %s289 = sphi 0, %s287
      %s290 = sphi 0, %s289
      %s304 = sphi 0, %s290
      %s312 = sphi 0, %s314
      %s315 = sphi 0, %s312
      %s316 = sphi 0, %s315
      %s332 = sphi 0, %s316
    $region4: #{tpu_custom_call.1} parent=1 // loop_header_branch
      %25 = sbr.rel (%p23) target = $region8
    $region5: #{tpu_custom_call.1} parent=1 // loop_body
      %s27 = ssub.s32 %s22, 1
      %s28 = ssub.s32 %s22, 2
      %s35 = sadd.s32 1, %s30
      %p36 = scmp.ge.s32.totalorder %s35, 2
      %s37 = scalar_select %p36, 0, %s35
      %s38 = sadd.s32 1, %s29
      %s39 = scalar_select %p36, %s38, %s29
      %p40 = scmp.ge.s32.totalorder %s39, 2
      %s41 = scalar_select %p40, 0, %s39
      %s42 = ssub.s32 %s29, %s41
      %s43 = ssub.s32 %s30, %s37
      %s44 = sor.u32 %s42, %s43
      %p45 = scmp.eq.s32.totalorder %s44, 0
      %s47 = sadd.s32 %s46, 1
      %s48 = scalar_select %p45, %s46, %s47
      %p51 = pneg %p45
      %p52 = scmp.eq.s32.totalorder %s22, 3
      %p53 = por %p51, %p52
      %p54 = scmp.ne.s32.totalorder %s46, %s49
      %p55 = scmp.eq.s32.totalorder %s22, 0
      %p56 = por %p54, %p55
      %p57 = scmp.ne.s32.totalorder %s46, %s49
      %p58 = scmp.eq.s32.totalorder %s27, 3
      %p59 = por %p57, %p58
      %p60 = scmp.ne.s32.totalorder %s49, %s50
      %p61 = scmp.eq.s32.totalorder %s27, 0
      %p62 = por %p60, %p61
      %p63 = scmp.ne.s32.totalorder %s49, %s50
      %p64 = scmp.eq.s32.totalorder %s28, 3
      %p65 = por %p63, %p64
      %p67 = scmp.ne.s32.totalorder %s50, %s66
      %p68 = scmp.eq.s32.totalorder %s28, 0
      %p69 = por %p67, %p68
      %s70 = ssub.s32 %s29, %s41
      %s71 = ssub.s32 %s30, %s37
      %s72 = sor.u32 %s70, %s71
      %p73 = scmp.eq.s32.totalorder %s72, 0
      %s75 = sadd.s32 %s74, 1
      %s76 = scalar_select %p73, %s74, %s75
      %p79 = pneg %p73
      %p80 = scmp.eq.s32.totalorder %s22, 3
      %p81 = por %p79, %p80
      %p82 = scmp.ne.s32.totalorder %s74, %s77
      %p83 = scmp.eq.s32.totalorder %s22, 0
      %p84 = por %p82, %p83
      %p85 = scmp.ne.s32.totalorder %s74, %s77
      %p86 = scmp.eq.s32.totalorder %s27, 3
      %p87 = por %p85, %p86
      %p88 = scmp.ne.s32.totalorder %s77, %s78
      %p89 = scmp.eq.s32.totalorder %s27, 0
      %p90 = por %p88, %p89
      %p91 = scmp.ne.s32.totalorder %s77, %s78
      %p92 = scmp.eq.s32.totalorder %s28, 3
      %p93 = por %p91, %p92
      %p95 = scmp.ne.s32.totalorder %s78, %s94
      %p96 = scmp.eq.s32.totalorder %s28, 0
      %p97 = por %p95, %p96
      %s99 = sadd.s32 %s98, 1
      %p102 = scmp.eq.s32.totalorder %s22, 3
      %p103 = scmp.ne.s32.totalorder %s98, %s100
      %p104 = scmp.eq.s32.totalorder %s22, 0
      %p105 = por %p103, %p104
      %p106 = scmp.ne.s32.totalorder %s98, %s100
      %p107 = scmp.eq.s32.totalorder %s27, 3
      %p108 = por %p106, %p107
      %p109 = scmp.ne.s32.totalorder %s100, %s101
      %p110 = scmp.eq.s32.totalorder %s27, 0
      %p111 = por %p109, %p110
      %p112 = scmp.ne.s32.totalorder %s100, %s101
      %p113 = scmp.eq.s32.totalorder %s28, 3
      %p114 = por %p112, %p113
      %p116 = scmp.ne.s32.totalorder %s101, %s115
      %p117 = scmp.eq.s32.totalorder %s28, 0
      %p118 = por %p116, %p117
      %s120 = sadd.s32 %s119, 1
      %p123 = scmp.eq.s32.totalorder %s22, 3
      %p124 = scmp.ne.s32.totalorder %s119, %s121
      %p125 = scmp.eq.s32.totalorder %s22, 0
      %p126 = por %p124, %p125
      %p127 = scmp.ne.s32.totalorder %s119, %s121
      %p128 = scmp.eq.s32.totalorder %s27, 3
      %p129 = por %p127, %p128
      %p130 = scmp.ne.s32.totalorder %s121, %s122
      %p131 = scmp.eq.s32.totalorder %s27, 0
      %p132 = por %p130, %p131
      %p133 = scmp.ne.s32.totalorder %s121, %s122
      %p134 = scmp.eq.s32.totalorder %s28, 3
      %p135 = por %p133, %p134
      %p137 = scmp.ne.s32.totalorder %s122, %s136
      %p138 = scmp.eq.s32.totalorder %s28, 0
      %p139 = por %p137, %p138
      %s141 = sadd.s32 %s140, 1
      %p144 = scmp.eq.s32.totalorder %s22, 3
      %p145 = scmp.ne.s32.totalorder %s140, %s142
      %p146 = scmp.eq.s32.totalorder %s22, 0
      %p147 = por %p145, %p146
      %p148 = scmp.ne.s32.totalorder %s140, %s142
      %p149 = scmp.eq.s32.totalorder %s27, 3
      %p150 = por %p148, %p149
      %p151 = scmp.ne.s32.totalorder %s142, %s143
      %p152 = scmp.eq.s32.totalorder %s27, 0
      %p153 = por %p151, %p152
      %p154 = scmp.ne.s32.totalorder %s142, %s143
      %p155 = scmp.eq.s32.totalorder %s28, 3
      %p156 = por %p154, %p155
      %p158 = scmp.ne.s32.totalorder %s143, %s157
      %p159 = scmp.eq.s32.totalorder %s28, 0
      %p160 = por %p158, %p159
      %s162 = sadd.s32 %s161, 1
      %p165 = scmp.eq.s32.totalorder %s22, 3
      %p166 = scmp.ne.s32.totalorder %s161, %s163
      %p167 = scmp.eq.s32.totalorder %s22, 0
      %p168 = por %p166, %p167
      %p169 = scmp.ne.s32.totalorder %s161, %s163
      %p170 = scmp.eq.s32.totalorder %s27, 3
      %p171 = por %p169, %p170
      %p172 = scmp.ne.s32.totalorder %s163, %s164
      %p173 = scmp.eq.s32.totalorder %s27, 0
      %p174 = por %p172, %p173
      %p175 = scmp.ne.s32.totalorder %s163, %s164
      %p176 = scmp.eq.s32.totalorder %s28, 3
      %p177 = por %p175, %p176
      %p179 = scmp.ne.s32.totalorder %s164, %s178
      %p180 = scmp.eq.s32.totalorder %s28, 0
      %p181 = por %p179, %p180
      %s183 = sadd.s32 %s182, 1
      %p186 = scmp.eq.s32.totalorder %s22, 3
      %p187 = scmp.ne.s32.totalorder %s182, %s184
      %p188 = scmp.eq.s32.totalorder %s22, 0
      %p189 = por %p187, %p188
      %p190 = scmp.ne.s32.totalorder %s182, %s184
      %p191 = scmp.eq.s32.totalorder %s27, 3
      %p192 = por %p190, %p191
      %p193 = scmp.ne.s32.totalorder %s184, %s185
      %p194 = scmp.eq.s32.totalorder %s27, 0
      %p195 = por %p193, %p194
      %p196 = scmp.ne.s32.totalorder %s184, %s185
      %p197 = scmp.eq.s32.totalorder %s28, 3
      %p198 = por %p196, %p197
      %p200 = scmp.ne.s32.totalorder %s185, %s199
      %p201 = scmp.eq.s32.totalorder %s28, 0
      %p202 = por %p200, %p201
      %s204 = sadd.s32 %s203, 1
      %p207 = scmp.eq.s32.totalorder %s22, 3
      %p208 = scmp.ne.s32.totalorder %s203, %s205
      %p209 = scmp.eq.s32.totalorder %s22, 0
      %p210 = por %p208, %p209
      %p211 = scmp.ne.s32.totalorder %s203, %s205
      %p212 = scmp.eq.s32.totalorder %s27, 3
      %p213 = por %p211, %p212
      %p214 = scmp.ne.s32.totalorder %s205, %s206
      %p215 = scmp.eq.s32.totalorder %s27, 0
      %p216 = por %p214, %p215
      %p217 = scmp.ne.s32.totalorder %s205, %s206
      %p218 = scmp.eq.s32.totalorder %s28, 3
      %p219 = por %p217, %p218
      %p221 = scmp.ne.s32.totalorder %s206, %s220
      %p222 = scmp.eq.s32.totalorder %s28, 0
      %p223 = por %p221, %p222
      %s225 = sadd.s32 %s224, 1
      %p228 = scmp.eq.s32.totalorder %s22, 3
      %p229 = scmp.ne.s32.totalorder %s224, %s226
      %p230 = scmp.eq.s32.totalorder %s22, 0
      %p231 = por %p229, %p230
      %p232 = scmp.ne.s32.totalorder %s224, %s226
      %p233 = scmp.eq.s32.totalorder %s27, 3
      %p234 = por %p232, %p233
      %p235 = scmp.ne.s32.totalorder %s226, %s227
      %p236 = scmp.eq.s32.totalorder %s27, 0
      %p237 = por %p235, %p236
      %p238 = scmp.ne.s32.totalorder %s226, %s227
      %p239 = scmp.eq.s32.totalorder %s28, 3
      %p240 = por %p238, %p239
      %p242 = scmp.ne.s32.totalorder %s227, %s241
      %p243 = scmp.eq.s32.totalorder %s28, 0
      %p244 = por %p242, %p243
      %s246 = sadd.s32 %s245, 1
      %p249 = scmp.eq.s32.totalorder %s22, 3
      %p250 = scmp.ne.s32.totalorder %s245, %s247
      %p251 = scmp.eq.s32.totalorder %s22, 0
      %p252 = por %p250, %p251
      %p253 = scmp.ne.s32.totalorder %s245, %s247
      %p254 = scmp.eq.s32.totalorder %s27, 3
      %p255 = por %p253, %p254
      %p256 = scmp.ne.s32.totalorder %s247, %s248
      %p257 = scmp.eq.s32.totalorder %s27, 0
      %p258 = por %p256, %p257
      %p259 = scmp.ne.s32.totalorder %s247, %s248
      %p260 = scmp.eq.s32.totalorder %s28, 3
      %p261 = por %p259, %p260
      %p263 = scmp.ne.s32.totalorder %s248, %s262
      %p264 = scmp.eq.s32.totalorder %s28, 0
      %p265 = por %p263, %p264
      %s267 = sadd.s32 %s266, 1
      %p270 = scmp.eq.s32.totalorder %s22, 3
      %p271 = scmp.ne.s32.totalorder %s266, %s268
      %p272 = scmp.eq.s32.totalorder %s22, 0
      %p273 = por %p271, %p272
      %p274 = scmp.ne.s32.totalorder %s266, %s268
      %p275 = scmp.eq.s32.totalorder %s27, 3
      %p276 = por %p274, %p275
      %p277 = scmp.ne.s32.totalorder %s268, %s269
      %p278 = scmp.eq.s32.totalorder %s27, 0
      %p279 = por %p277, %p278
      %p280 = scmp.ne.s32.totalorder %s268, %s269
      %p281 = scmp.eq.s32.totalorder %s28, 3
      %p282 = por %p280, %p281
      %p284 = scmp.ne.s32.totalorder %s269, %s283
      %p285 = scmp.eq.s32.totalorder %s28, 0
      %p286 = por %p284, %p285
      %s288 = sadd.s32 %s287, 1
      %p291 = scmp.eq.s32.totalorder %s22, 3
      %p292 = scmp.ne.s32.totalorder %s287, %s289
      %p293 = scmp.eq.s32.totalorder %s22, 0
      %p294 = por %p292, %p293
      %p295 = scmp.ne.s32.totalorder %s287, %s289
      %p296 = scmp.eq.s32.totalorder %s27, 3
      %p297 = por %p295, %p296
      %p298 = scmp.ne.s32.totalorder %s289, %s290
      %p299 = scmp.eq.s32.totalorder %s27, 0
      %p300 = por %p298, %p299
      %p301 = scmp.ne.s32.totalorder %s289, %s290
      %p302 = scmp.eq.s32.totalorder %s28, 3
      %p303 = por %p301, %p302
      %p305 = scmp.ne.s32.totalorder %s290, %s304
      %p306 = scmp.eq.s32.totalorder %s28, 0
      %p307 = por %p305, %p306
      %s308 = ssub.s32 %s29, %s41
      %s309 = ssub.s32 %s30, %s37
      %s310 = sor.u32 %s308, %s309
      %p311 = scmp.eq.s32.totalorder %s310, 0
      %s313 = sadd.s32 %s312, 1
      %s314 = scalar_select %p311, %s312, %s313
      %p317 = pneg %p311
      %p318 = scmp.eq.s32.totalorder %s22, 3
      %p319 = por %p317, %p318
      %p320 = scmp.ne.s32.totalorder %s312, %s315
      %p321 = scmp.eq.s32.totalorder %s22, 0
      %p322 = por %p320, %p321
      %p323 = scmp.ne.s32.totalorder %s312, %s315
      %p324 = scmp.eq.s32.totalorder %s27, 3
      %p325 = por %p323, %p324
      %p326 = scmp.ne.s32.totalorder %s315, %s316
      %p327 = scmp.eq.s32.totalorder %s27, 0
      %p328 = por %p326, %p327
      %p329 = scmp.ne.s32.totalorder %s315, %s316
      %p330 = scmp.eq.s32.totalorder %s28, 3
      %p331 = por %p329, %p330
      %p333 = scmp.ne.s32.totalorder %s316, %s332
      %p334 = scmp.eq.s32.totalorder %s28, 0
      %p335 = por %p333, %p334
      %p336 = scmp.le.s32.totalorder 1, %s22
      %p337 = scmp.lt.s32.totalorder %s22, 5
      %p338 = pnand %p336, %p337
      %p339 = pneg %p338
      // Predicated region
      $region9: #{tpu_custom_call.1} parent=5 // pred_check
        _
      $region10: #{tpu_custom_call.1} parent=5 // pred_check_branch
        %341 = sbr.rel (%p338) target = $region12
      $region11: #{tpu_custom_call.1} parent=5 // pred_region
        %s342 = ssub.s32 %s22, 1
        // Predicated region
        $region13: #{tpu_custom_call.1} parent=11 // pred_check
          %p343 = pneg %p111
        $region14: #{tpu_custom_call.1} parent=11 // pred_check_branch
          %345 = sbr.rel (%p343) target = $region16
        $region15: #{tpu_custom_call.1} parent=11 // pred_region
          _
        $region16: #{tpu_custom_call.1} parent=11 // pred_fallthru
          _
        // Predicated region
        $region17: #{tpu_custom_call.1} parent=11 // pred_check
          %p346 = pneg %p132
        $region18: #{tpu_custom_call.1} parent=11 // pred_check_branch
          %348 = sbr.rel (%p346) target = $region20
        $region19: #{tpu_custom_call.1} parent=11 // pred_region
          _
        $region20: #{tpu_custom_call.1} parent=11 // pred_fallthru
          _
        // Predicated region
        $region21: #{tpu_custom_call.1} parent=11 // pred_check
          %p349 = pneg %p153
        $region22: #{tpu_custom_call.1} parent=11 // pred_check_branch
          %351 = sbr.rel (%p349) target = $region24
        $region23: #{tpu_custom_call.1} parent=11 // pred_region
          %353 = vsyncadd [#allocation4], 0
          %s354 = sshll.u32 %s4, 4
          %s355 = int_to_ptr.hbm [resolvable:$true] %s354
          %s356 = sshll.u32 [#allocation3], 4
          %s357 = int_to_ptr.vmem [resolvable:$true] %s356
          %362 = dma.hbm_to_vmem [thread:$0]  %s355, 4608, %s357, [#allocation4], 128, 128, 8
        $region24: #{tpu_custom_call.1} parent=11 // pred_fallthru
          _
        // Predicated region
        $region25: #{tpu_custom_call.1} parent=11 // pred_check
          %p363 = pneg %p174
        $region26: #{tpu_custom_call.1} parent=11 // pred_check_branch
          %365 = sbr.rel (%p363) target = $region28
        $region27: #{tpu_custom_call.1} parent=11 // pred_region
          _
        $region28: #{tpu_custom_call.1} parent=11 // pred_fallthru
          _
        // Predicated region
        $region29: #{tpu_custom_call.1} parent=11 // pred_check
          %p366 = pneg %p195
        $region30: #{tpu_custom_call.1} parent=11 // pred_check_branch
          %368 = sbr.rel (%p366) target = $region32
        $region31: #{tpu_custom_call.1} parent=11 // pred_region
          _
        $region32: #{tpu_custom_call.1} parent=11 // pred_fallthru
          _
        // Predicated region
        $region33: #{tpu_custom_call.1} parent=11 // pred_check
          %p369 = pneg %p216
        $region34: #{tpu_custom_call.1} parent=11 // pred_check_branch
          %371 = sbr.rel (%p369) target = $region36
        $region35: #{tpu_custom_call.1} parent=11 // pred_region
          _
        $region36: #{tpu_custom_call.1} parent=11 // pred_fallthru
          _
        // Predicated region
        $region37: #{tpu_custom_call.1} parent=11 // pred_check
          %p372 = pneg %p237
        $region38: #{tpu_custom_call.1} parent=11 // pred_check_branch
          %374 = sbr.rel (%p372) target = $region40
        $region39: #{tpu_custom_call.1} parent=11 // pred_region
          _
        $region40: #{tpu_custom_call.1} parent=11 // pred_fallthru
          _
        // Predicated region
        $region41: #{tpu_custom_call.1} parent=11 // pred_check
          %p375 = pneg %p258
        $region42: #{tpu_custom_call.1} parent=11 // pred_check_branch
          %377 = sbr.rel (%p375) target = $region44
        $region43: #{tpu_custom_call.1} parent=11 // pred_region
          _
        $region44: #{tpu_custom_call.1} parent=11 // pred_fallthru
          _
        // Predicated region
        $region45: #{tpu_custom_call.1} parent=11 // pred_check
          %p378 = pneg %p279
        $region46: #{tpu_custom_call.1} parent=11 // pred_check_branch
          %380 = sbr.rel (%p378) target = $region48
        $region47: #{tpu_custom_call.1} parent=11 // pred_region
          _
        $region48: #{tpu_custom_call.1} parent=11 // pred_fallthru
          _
        // Predicated region
        $region49: #{tpu_custom_call.1} parent=11 // pred_check
          %p381 = pneg %p300
        $region50: #{tpu_custom_call.1} parent=11 // pred_check_branch
          %383 = sbr.rel (%p381) target = $region52
        $region51: #{tpu_custom_call.1} parent=11 // pred_region
          _
        $region52: #{tpu_custom_call.1} parent=11 // pred_fallthru
          _
      $region12: #{tpu_custom_call.1} parent=5 // pred_fallthru
        _
      %p384 = scmp.lt.s32.totalorder %s22, 4
      // Predicated region
      $region53: #{tpu_custom_call.1} parent=5 // pred_check
        %p385 = pneg %p384
      $region54: #{tpu_custom_call.1} parent=5 // pred_check_branch
        %387 = sbr.rel (%p385) target = $region56
      $region55: #{tpu_custom_call.1} parent=5 // pred_region
        // Predicated region
        $region57: #{tpu_custom_call.1} parent=55 // pred_check
          %p388 = pneg %p56
        $region58: #{tpu_custom_call.1} parent=55 // pred_check_branch
          %390 = sbr.rel (%p388) target = $region60
        $region59: #{tpu_custom_call.1} parent=55 // pred_region
          %p391 = scmp.lt.s32.totalorder %s29, 1
          %s392 = scalar_select %p391, %s29, 1
          %p393 = scmp.lt.s32.totalorder %s30, 1
          %s394 = scalar_select %p393, %s30, 1
          %s395 = smul.addr %s394, 3
          %s396 = smul.addr %s392, 6
          %s397 = sadd.s32 %s395, %s396
          %s398 = smul.addr %s397, 8
          %s399 = scalar_lea.vmem %s0, %s398
        $region60: #{tpu_custom_call.1} parent=55 // pred_fallthru
          _
        // Predicated region
        $region61: #{tpu_custom_call.1} parent=55 // pred_check
          %p400 = pneg %p84
        $region62: #{tpu_custom_call.1} parent=55 // pred_check_branch
          %402 = sbr.rel (%p400) target = $region64
        $region63: #{tpu_custom_call.1} parent=55 // pred_region
          %p403 = scmp.lt.s32.totalorder %s29, 1
          %s404 = scalar_select %p403, %s29, 1
          %p405 = scmp.lt.s32.totalorder %s30, 1
          %s406 = scalar_select %p405, %s30, 1
          %s407 = smul.addr %s406, 3
          %s408 = smul.addr %s404, 6
          %s409 = sadd.s32 %s407, %s408
          %s410 = smul.addr %s409, 8
          %s411 = scalar_lea.vmem %s1, %s410
        $region64: #{tpu_custom_call.1} parent=55 // pred_fallthru
          _
      $region56: #{tpu_custom_call.1} parent=5 // pred_fallthru
        _
      %p412 = scmp.le.s32.totalorder 1, %s22
      %p413 = scmp.lt.s32.totalorder %s22, 5
      %p414 = pnand %p412, %p413
      %p415 = pneg %p414
      // Predicated region
      $region65: #{tpu_custom_call.1} parent=5 // pred_check
        _
      $region66: #{tpu_custom_call.1} parent=5 // pred_check_branch
        %417 = sbr.rel (%p414) target = $region68
      $region67: #{tpu_custom_call.1} parent=5 // pred_region
        %s418 = ssub.s32 %s22, 1
        // Predicated region
        $region69: #{tpu_custom_call.1} parent=67 // pred_check
          %p419 = pneg %p153
        $region70: #{tpu_custom_call.1} parent=67 // pred_check_branch
          %421 = sbr.rel (%p419) target = $region72
        $region71: #{tpu_custom_call.1} parent=67 // pred_region
          %423 = dma.done [#allocation4], 4608
        $region72: #{tpu_custom_call.1} parent=67 // pred_fallthru
          _
        %p424 = scmp.lt.s32.totalorder %s31, 1
        %s425 = scalar_select %p424, %s31, 1
        %p426 = scmp.lt.s32.totalorder %s32, 1
        %s427 = scalar_select %p426, %s32, 1
        %s428 = smul.addr %s427, 3
        %s429 = smul.addr %s425, 6
        %s430 = sadd.s32 %s428, %s429
        %s431 = smul.addr %s430, 8
        %s432 = scalar_lea.vmem %s0, %s431
        %p433 = pneg %p62
        %p434 = pneg %p59
        %p435 = scmp.lt.s32.totalorder %s31, 1
        %s436 = scalar_select %p435, %s31, 1
        %p437 = scmp.lt.s32.totalorder %s32, 1
        %s438 = scalar_select %p437, %s32, 1
        %s439 = smul.addr %s438, 3
        %s440 = smul.addr %s436, 6
        %s441 = sadd.s32 %s439, %s440
        %s442 = smul.addr %s441, 8
        %s443 = scalar_lea.vmem %s1, %s442
        %p444 = pneg %p90
        %p445 = pneg %p87
        %p446 = pneg %p111
        %p447 = pneg %p108
        %p448 = pneg %p132
        %p449 = pneg %p129
        %p450 = pneg %p153
        %p451 = pneg %p150
        %p452 = pneg %p174
        %p453 = pneg %p171
        %p454 = pneg %p195
        %p455 = pneg %p192
        %p456 = pneg %p216
        %p457 = pneg %p213
        %p458 = pneg %p237
        %p459 = pneg %p234
        %p460 = pneg %p258
        %p461 = pneg %p255
        %p462 = pneg %p279
        %p463 = pneg %p276
        %p464 = pneg %p300
        %p465 = pneg %p297
        %p466 = pneg %p328
        %p467 = pneg %p325
        %s468 = sand.u32 %s315, 1
        %s469 = scalar_lea.sflag [#allocation5], %s468
        %s470 = sand.u32 %s315, 1
        %s471 = smul.addr %s470, 8
        %s472 = scalar_lea.vmem [#allocation6], %s471
        %p473 = scmp.lt.s32.totalorder %s31, 1
        %s474 = scalar_select %p473, %s31, 1
        %p475 = scmp.lt.s32.totalorder %s32, 1
        %s476 = scalar_select %p475, %s32, 1
        %s477 = smul.addr %s476, 3
        %s478 = smul.addr %s474, 6
        %s479 = sadd.s32 %s477, %s478
        %s480 = smul.addr %s479, 8
        %s481 = scalar_lea.vmem %s0, %s480
        %p482 = scmp.lt.s32.totalorder %s31, 1
        %s483 = scalar_select %p482, %s31, 1
        %p484 = scmp.lt.s32.totalorder %s32, 1
        %s485 = scalar_select %p484, %s32, 1
        %s486 = smul.addr %s485, 3
        %s487 = smul.addr %s483, 6
        %s488 = sadd.s32 %s486, %s487
        %s489 = smul.addr %s488, 8
        %s490 = scalar_lea.vmem %s1, %s489
        %v491 = vld [vmem:[%s481] sm:$0xff]
        %v492 = vld [vmem:[%s481 + $0x8] sm:$0xff]
        %v493 = vld [vmem:[%s481 + $0x10] sm:$0xff]
        %v494 = vld [vmem:[%s490] sm:$0xff]
        %v495 = vld [vmem:[%s490 + $0x8] sm:$0xff]
        %v496 = vld [vmem:[%s490 + $0x10] sm:$0xff]
        %vm497 = vcmask 253952
        %498 = vst.msk [vmem:[#allocation2] sm:$0x1] %vm497, 0.0
        %499 = vst.msk [vmem:[#allocation2 + $0x19] sm:$0x1] %vm497, 0.0
        %v500 = vld [vmem:[%s2] sm:$0x3]
        %v501 = vld [vmem:[%s3] sm:$0x1]
        %v503 = vperm.slane %v501, 0
        %vm505 = vcmask 15360
        %v507 = vsel %vm505, %v491, 0
        %v510 = vsel %vm505, %v492, 0
        %v513 = vsel %vm505, %v493, 0
        %vm515 = vcmask 1041408
        %v517 = vsel %vm515, %v500, 0
        %519 = vmatpush.msra.mxu0 0.0
        %520 = vmatpush.msra.mxu0 0.0
        %521 = vmatpush.msra.mxu0 0.0
        %522 = vmatpush.msra.mxu0 0.0
        %523 = vmatpush.msra.mxu0 0.0
        %524 = vmatpush.msra.mxu0 0.0
        %525 = vmatpush.msra.mxu0 0.0
        %526 = vmatpush.msra.mxu0 0.0
        %527 = vmatpush.msra.mxu0 0.0
        %528 = vmatpush.msra.mxu0 0.0
        %529 = vmatpush.msra.mxu0 0.0
        %530 = vmatpush.msra.mxu0 0.0
        %531 = vmatpush.msra.mxu0 0.0
        %532 = vmatpush.msra.mxu0 0.0
        %533 = vmatpush.msra.mxu0 0.0
        %534 = vmatpush.msra.mxu0 %v517
        %535 = vmatmul.f32.gmra.mxu0 %v507
        %v536 = vpop.f32.mrf.mxu0
        %v537 = vadd.f32 %v503, %v536
        %538 = vmatmul.f32.gmra.mxu0 %v510
        %v539 = vpop.f32.mrf.mxu0
        %v540 = vadd.f32 %v503, %v539
        %541 = vmatmul.f32.gmra.mxu0 %v513
        %v542 = vpop.f32.mrf.mxu0
        %v543 = vadd.f32 %v503, %v542
        %544 = vdwg.mxu0
        %546 = vset.pattern.permute.xlu0 0
        %547 = vperm.xlu0 %546, %v494
        %v548 = vpop.permute.xlu0 %547
        %551 = vset.pattern.permute.xlu0 0
        %552 = vperm.xlu0 %551, %v495
        %v553 = vpop.permute.xlu0 %552
        %556 = vset.pattern.permute.xlu0 0
        %557 = vperm.xlu0 %556, %v496
        %v558 = vpop.permute.xlu0 %557
        %v560 = vmul.f32 %v537, %v548
        %v561 = vmul.f32 %v540, %v553
        %v562 = vmul.f32 %v543, %v558
        %vm563 = vcmask 261120
        %564 = vst.msk [vmem:[#allocation2 + $0x1] sm:$0xff] %vm563, %v560
        %565 = vst.msk [vmem:[#allocation2 + $0x9] sm:$0xff] %vm563, %v561
        %566 = vst.msk [vmem:[#allocation2 + $0x11] sm:$0xff] %vm563, %v562
        %v567 = vld [vmem:[#allocation2] sm:$0xff]
        %v568 = vld [vmem:[#allocation2 + $0x8] sm:$0xff]
        %v569 = vld [vmem:[#allocation2 + $0x10] sm:$0xff]
        %v570 = vld [vmem:[#allocation3] sm:$0xff]
        %v571 = vld [vmem:[#allocation3 + $0x8] sm:$0xff]
        %v572 = vld [vmem:[#allocation3 + $0x10] sm:$0xff]
        %v573 = vld [vmem:[#allocation3 + $0x18] sm:$0xff]
        %v574 = vld [vmem:[#allocation2 + $0x1] sm:$0xff]
        %v575 = vld [vmem:[#allocation2 + $0x9] sm:$0xff]
        %v576 = vld [vmem:[#allocation2 + $0x11] sm:$0xff]
        %s577 = scalar_lea.vmem [#allocation3], 32
        %v578 = vld [vmem:[%s577] sm:$0xff]
        %v579 = vld [vmem:[%s577 + $0x8] sm:$0xff]
        %v580 = vld [vmem:[%s577 + $0x10] sm:$0xff]
        %v581 = vld [vmem:[%s577 + $0x18] sm:$0xff]
        %v583 = vsel %vm563, %v574, 0
        %v586 = vsel %vm563, %v575, 0
        %v589 = vsel %vm563, %v576, 0
        %591 = vmatpush.msra.mxu0 0.0
        %592 = vmatpush.msra.mxu0 0.0
        %593 = vmatpush.msra.mxu0 0.0
        %594 = vmatpush.msra.mxu0 0.0
        %595 = vmatpush.msra.mxu0 0.0
        %596 = vmatpush.msra.mxu0 0.0
        %597 = vmatpush.msra.mxu0 0.0
        %598 = vmatpush.msra.mxu0 0.0
        %599 = vmatpush.msra.mxu0 0.0
        %600 = vmatpush.msra.mxu0 0.0
        %601 = vmatpush.msra.mxu0 0.0
        %602 = vmatpush.msra.mxu0 0.0
        %603 = vmatpush.msra.mxu0 %v581
        %604 = vmatpush.msra.mxu0 %v580
        %605 = vmatpush.msra.mxu0 %v579
        %606 = vmatpush.msra.mxu0 %v578
        %607 = vmatmul.f32.gmra.mxu0 %v583
        %v608 = vpop.f32.mrf.mxu0
        %v609 = vadd.f32 0.0, %v608
        %610 = vmatmul.f32.gmra.mxu0 %v586
        %v611 = vpop.f32.mrf.mxu0
        %v612 = vadd.f32 0.0, %v611
        %613 = vmatmul.f32.gmra.mxu0 %v589
        %v614 = vpop.f32.mrf.mxu0
        %v615 = vadd.f32 0.0, %v614
        %616 = vdwg.mxu0
        %v618 = vsel %vm563, %v567, 0
        %v621 = vsel %vm563, %v568, 0
        %v624 = vsel %vm563, %v569, 0
        %626 = vmatpush.msra.mxu0 0.0
        %627 = vmatpush.msra.mxu0 0.0
        %628 = vmatpush.msra.mxu0 0.0
        %629 = vmatpush.msra.mxu0 0.0
        %630 = vmatpush.msra.mxu0 0.0
        %631 = vmatpush.msra.mxu0 0.0
        %632 = vmatpush.msra.mxu0 0.0
        %633 = vmatpush.msra.mxu0 0.0
        %634 = vmatpush.msra.mxu0 0.0
        %635 = vmatpush.msra.mxu0 0.0
        %636 = vmatpush.msra.mxu0 0.0
        %637 = vmatpush.msra.mxu0 0.0
        %638 = vmatpush.msra.mxu0 %v573
        %639 = vmatpush.msra.mxu0 %v572
        %640 = vmatpush.msra.mxu0 %v571
        %641 = vmatpush.msra.mxu0 %v570
        %642 = vmatmul.f32.gmra.mxu0 %v618
        %v643 = vpop.f32.mrf.mxu0
        %v644 = vadd.f32 %v609, %v643
        %645 = vmatmul.f32.gmra.mxu0 %v621
        %v646 = vpop.f32.mrf.mxu0
        %v647 = vadd.f32 %v612, %v646
        %648 = vmatmul.f32.gmra.mxu0 %v624
        %v649 = vpop.f32.mrf.mxu0
        %v650 = vadd.f32 %v615, %v649
        %651 = vdwg.mxu0
        %v652 = vld [vmem:[#allocation2 + $0x2] sm:$0xff]
        %v653 = vld [vmem:[#allocation2 + $0xa] sm:$0xff]
        %v654 = vld [vmem:[#allocation2 + $0x12] sm:$0xff]
        %s655 = scalar_lea.vmem [#allocation3], 64
        %v656 = vld [vmem:[%s655] sm:$0xff]
        %v657 = vld [vmem:[%s655 + $0x8] sm:$0xff]
        %v658 = vld [vmem:[%s655 + $0x10] sm:$0xff]
        %v659 = vld [vmem:[%s655 + $0x18] sm:$0xff]
        %v661 = vsel %vm563, %v652, 0
        %v664 = vsel %vm563, %v653, 0
        %v667 = vsel %vm563, %v654, 0
        %669 = vmatpush.msra.mxu0 0.0
        %670 = vmatpush.msra.mxu0 0.0
        %671 = vmatpush.msra.mxu0 0.0
        %672 = vmatpush.msra.mxu0 0.0
        %673 = vmatpush.msra.mxu0 0.0
        %674 = vmatpush.msra.mxu0 0.0
        %675 = vmatpush.msra.mxu0 0.0
        %676 = vmatpush.msra.mxu0 0.0
        %677 = vmatpush.msra.mxu0 0.0
        %678 = vmatpush.msra.mxu0 0.0
        %679 = vmatpush.msra.mxu0 0.0
        %680 = vmatpush.msra.mxu0 0.0
        %681 = vmatpush.msra.mxu0 %v659
        %682 = vmatpush.msra.mxu0 %v658
        %683 = vmatpush.msra.mxu0 %v657
        %684 = vmatpush.msra.mxu0 %v656
        %685 = vmatmul.f32.gmra.mxu0 %v661
        %v686 = vpop.f32.mrf.mxu0
        %v687 = vadd.f32 0.0, %v686
        %688 = vmatmul.f32.gmra.mxu0 %v664
        %v689 = vpop.f32.mrf.mxu0
        %v690 = vadd.f32 0.0, %v689
        %691 = vmatmul.f32.gmra.mxu0 %v667
        %v692 = vpop.f32.mrf.mxu0
        %v693 = vadd.f32 0.0, %v692
        %694 = vdwg.mxu0
        %v695 = vadd.f32 %v644, %v687
        %v696 = vadd.f32 %v647, %v690
        %v697 = vadd.f32 %v650, %v693
        %v698 = vld [vmem:[%s5] sm:$0x1]
        %v700 = vperm.slane %v698, 0
        %v702 = vadd.f32 %v695, %v700
        %v703 = vadd.f32 %v696, %v700
        %v704 = vadd.f32 %v697, %v700
        %v705 = vtanh.pop %v702
        %v706 = vtanh.pop %v703
        %v707 = vtanh.pop %v704
        %v708 = vxor.u32 %v702, 2147483648
        %v709 = vxor.u32 %v703, 2147483648
        %v710 = vxor.u32 %v704, 2147483648
        %v711 = vmul.f32 %v708, 1.442695
        %v712 = vpow.pop %v711
        %v713 = vmul.f32 %v709, 1.442695
        %v714 = vpow.pop %v713
        %v715 = vmul.f32 %v710, 1.442695
        %v716 = vpow.pop %v715
        %v717 = vadd.f32 %v712, 1.0
        %v718 = vadd.f32 %v714, 1.0
        %v719 = vadd.f32 %v716, 1.0
        %v720 = vrcp.pop %v717
        %v721 = vmul.f32 %v717, %v720
        %v722 = vsub.f32 1.0, %v721
        %v723 = vmul.f32 %v720, %v722
        %v724 = vadd.f32 %v720, %v723
        %vm725 = vweird.f32 %v717
        %vm726 = vweird.f32 %v720
        %vm727 = vmor %vm725, %vm726
        %v728 = vsel %vm727, %v720, %v724
        %v729 = vand.u32 2147483647, %v717
        %vm730 = vcmp.eq.f32.partialorder %v729, 8.507059e+37
        %v731 = vand.u32 %v717, 2147483648
        %v732 = vor.u32 1.1754944e-38, %v731
        %v733 = vsel %vm730, %v732, %v728
        %v734 = vmul.f32 1.0, %v733
        %v735 = vrcp.pop %v718
        %v736 = vmul.f32 %v718, %v735
        %v737 = vsub.f32 1.0, %v736
        %v738 = vmul.f32 %v735, %v737
        %v739 = vadd.f32 %v735, %v738
        %vm740 = vweird.f32 %v718
        %vm741 = vweird.f32 %v735
        %vm742 = vmor %vm740, %vm741
        %v743 = vsel %vm742, %v735, %v739
        %v744 = vand.u32 2147483647, %v718
        %vm745 = vcmp.eq.f32.partialorder %v744, 8.507059e+37
        %v746 = vand.u32 %v718, 2147483648
        %v747 = vor.u32 1.1754944e-38, %v746
        %v748 = vsel %vm745, %v747, %v743
        %v749 = vmul.f32 1.0, %v748
        %v750 = vrcp.pop %v719
        %v751 = vmul.f32 %v719, %v750
        %v752 = vsub.f32 1.0, %v751
        %v753 = vmul.f32 %v750, %v752
        %v754 = vadd.f32 %v750, %v753
        %vm755 = vweird.f32 %v719
        %vm756 = vweird.f32 %v750
        %vm757 = vmor %vm755, %vm756
        %v758 = vsel %vm757, %v750, %v754
        %v759 = vand.u32 2147483647, %v719
        %vm760 = vcmp.eq.f32.partialorder %v759, 8.507059e+37
        %v761 = vand.u32 %v719, 2147483648
        %v762 = vor.u32 1.1754944e-38, %v761
        %v763 = vsel %vm760, %v762, %v758
        %v764 = vmul.f32 1.0, %v763
        %768 = vrot.lane.b32.xlu0 %v734, 96
        %v769 = vpop.permute.xlu0 %768
        %770 = vrot.lane.b32.xlu0 %v749, 96
        %v771 = vpop.permute.xlu0 %770
        %772 = vrot.lane.b32.xlu0 %v764, 96
        %v773 = vpop.permute.xlu0 %772
        %v777 = vmul.f32 %v705, %v769
        %v778 = vmul.f32 %v706, %v771
        %v779 = vmul.f32 %v707, %v773
        %v780 = vld [vmem:[%s6] sm:$0xff]
        %v781 = vld [vmem:[%s6 + $0x8] sm:$0xff]
        %v782 = vld [vmem:[%s6 + $0x10] sm:$0xff]
        %v783 = vld [vmem:[%s6 + $0x18] sm:$0xff]
        %v784 = vld [vmem:[%s7] sm:$0x1]
        %v786 = vperm.slane %v784, 0
        %v789 = vsel %vm563, %v777, 0
        %v792 = vsel %vm563, %v778, 0
        %v795 = vsel %vm563, %v779, 0
        %797 = vmatpush.msra.mxu0 0.0
        %798 = vmatpush.msra.mxu0 0.0
        %799 = vmatpush.msra.mxu0 0.0
        %800 = vmatpush.msra.mxu0 0.0
        %801 = vmatpush.msra.mxu0 0.0
        %802 = vmatpush.msra.mxu0 0.0
        %803 = vmatpush.msra.mxu0 0.0
        %804 = vmatpush.msra.mxu0 0.0
        %805 = vmatpush.msra.mxu0 0.0
        %806 = vmatpush.msra.mxu0 0.0
        %807 = vmatpush.msra.mxu0 0.0
        %808 = vmatpush.msra.mxu0 0.0
        %809 = vmatpush.msra.mxu0 %v783
        %810 = vmatpush.msra.mxu0 %v782
        %811 = vmatpush.msra.mxu0 %v781
        %812 = vmatpush.msra.mxu0 %v780
        %813 = vmatmul.f32.gmra.mxu0 %v789
        %v814 = vpop.f32.mrf.mxu0
        %v815 = vadd.f32 %v786, %v814
        %816 = vmatmul.f32.gmra.mxu0 %v792
        %v817 = vpop.f32.mrf.mxu0
        %v818 = vadd.f32 %v786, %v817
        %819 = vmatmul.f32.gmra.mxu0 %v795
        %v820 = vpop.f32.mrf.mxu0
        %v821 = vadd.f32 %v786, %v820
        %822 = vdwg.mxu0
        %v823 = vadd.f32 %v560, %v815
        %v824 = vadd.f32 %v561, %v818
        %v825 = vadd.f32 %v562, %v821
        %v826 = vmul.f32 %v823, %v548
        %v827 = vmul.f32 %v824, %v553
        %v828 = vmul.f32 %v825, %v558
        %v829 = vadd.f32 %v818, 0.0
        %830 = vst.msk [vmem:[#allocation2 + $0x1] sm:$0xff] %vm563, %v826
        %831 = vst.msk [vmem:[#allocation2 + $0x9] sm:$0xff] %vm563, %v827
        %832 = vst.msk [vmem:[#allocation2 + $0x11] sm:$0xff] %vm563, %v828
        %v833 = vld [vmem:[#allocation2] sm:$0xff]
        %v834 = vld [vmem:[#allocation2 + $0x8] sm:$0xff]
        %v835 = vld [vmem:[#allocation2 + $0x10] sm:$0xff]
        %s836 = scalar_lea.vmem [#allocation3], 96
        %v837 = vld [vmem:[%s836] sm:$0xff]
        %v838 = vld [vmem:[%s836 + $0x8] sm:$0xff]
        %v839 = vld [vmem:[%s836 + $0x10] sm:$0xff]
        %v840 = vld [vmem:[%s836 + $0x18] sm:$0xff]
        %v841 = vld [vmem:[#allocation2 + $0x1] sm:$0xff]
        %v842 = vld [vmem:[#allocation2 + $0x9] sm:$0xff]
        %v843 = vld [vmem:[#allocation2 + $0x11] sm:$0xff]
        %s844 = scalar_lea.vmem [#allocation3], 128
        %v845 = vld [vmem:[%s844] sm:$0xff]
        %v846 = vld [vmem:[%s844 + $0x8] sm:$0xff]
        %v847 = vld [vmem:[%s844 + $0x10] sm:$0xff]
        %v848 = vld [vmem:[%s844 + $0x18] sm:$0xff]
        %v850 = vsel %vm563, %v841, 0
        %v853 = vsel %vm563, %v842, 0
        %v856 = vsel %vm563, %v843, 0
        %858 = vmatpush.msra.mxu0 0.0
        %859 = vmatpush.msra.mxu0 0.0
        %860 = vmatpush.msra.mxu0 0.0
        %861 = vmatpush.msra.mxu0 0.0
        %862 = vmatpush.msra.mxu0 0.0
        %863 = vmatpush.msra.mxu0 0.0
        %864 = vmatpush.msra.mxu0 0.0
        %865 = vmatpush.msra.mxu0 0.0
        %866 = vmatpush.msra.mxu0 0.0
        %867 = vmatpush.msra.mxu0 0.0
        %868 = vmatpush.msra.mxu0 0.0
        %869 = vmatpush.msra.mxu0 0.0
        %870 = vmatpush.msra.mxu0 %v848
        %871 = vmatpush.msra.mxu0 %v847
        %872 = vmatpush.msra.mxu0 %v846
        %873 = vmatpush.msra.mxu0 %v845
        %874 = vmatmul.f32.gmra.mxu0 %v850
        %v875 = vpop.f32.mrf.mxu0
        %v876 = vadd.f32 0.0, %v875
        %877 = vmatmul.f32.gmra.mxu0 %v853
        %v878 = vpop.f32.mrf.mxu0
        %v879 = vadd.f32 0.0, %v878
        %880 = vmatmul.f32.gmra.mxu0 %v856
        %v881 = vpop.f32.mrf.mxu0
        %v882 = vadd.f32 0.0, %v881
        %883 = vdwg.mxu0
        %v885 = vsel %vm563, %v833, 0
        %v888 = vsel %vm563, %v834, 0
        %v891 = vsel %vm563, %v835, 0
        %893 = vmatpush.msra.mxu0 0.0
        %894 = vmatpush.msra.mxu0 0.0
        %895 = vmatpush.msra.mxu0 0.0
        %896 = vmatpush.msra.mxu0 0.0
        %897 = vmatpush.msra.mxu0 0.0
        %898 = vmatpush.msra.mxu0 0.0
        %899 = vmatpush.msra.mxu0 0.0
        %900 = vmatpush.msra.mxu0 0.0
        %901 = vmatpush.msra.mxu0 0.0
        %902 = vmatpush.msra.mxu0 0.0
        %903 = vmatpush.msra.mxu0 0.0
        %904 = vmatpush.msra.mxu0 0.0
        %905 = vmatpush.msra.mxu0 %v840
        %906 = vmatpush.msra.mxu0 %v839
        %907 = vmatpush.msra.mxu0 %v838
        %908 = vmatpush.msra.mxu0 %v837
        %909 = vmatmul.f32.gmra.mxu0 %v885
        %v910 = vpop.f32.mrf.mxu0
        %v911 = vadd.f32 %v876, %v910
        %912 = vmatmul.f32.gmra.mxu0 %v888
        %v913 = vpop.f32.mrf.mxu0
        %v914 = vadd.f32 %v879, %v913
        %915 = vmatmul.f32.gmra.mxu0 %v891
        %v916 = vpop.f32.mrf.mxu0
        %v917 = vadd.f32 %v882, %v916
        %918 = vdwg.mxu0
        %v919 = vld [vmem:[#allocation2 + $0x2] sm:$0xff]
        %v920 = vld [vmem:[#allocation2 + $0xa] sm:$0xff]
        %v921 = vld [vmem:[#allocation2 + $0x12] sm:$0xff]
        %s922 = scalar_lea.vmem [#allocation3], 160
        %v923 = vld [vmem:[%s922] sm:$0xff]
        %v924 = vld [vmem:[%s922 + $0x8] sm:$0xff]
        %v925 = vld [vmem:[%s922 + $0x10] sm:$0xff]
        %v926 = vld [vmem:[%s922 + $0x18] sm:$0xff]
        %v928 = vsel %vm563, %v919, 0
        %v931 = vsel %vm563, %v920, 0
        %v934 = vsel %vm563, %v921, 0
        %936 = vmatpush.msra.mxu0 0.0
        %937 = vmatpush.msra.mxu0 0.0
        %938 = vmatpush.msra.mxu0 0.0
        %939 = vmatpush.msra.mxu0 0.0
        %940 = vmatpush.msra.mxu0 0.0
        %941 = vmatpush.msra.mxu0 0.0
        %942 = vmatpush.msra.mxu0 0.0
        %943 = vmatpush.msra.mxu0 0.0
        %944 = vmatpush.msra.mxu0 0.0
        %945 = vmatpush.msra.mxu0 0.0
        %946 = vmatpush.msra.mxu0 0.0
        %947 = vmatpush.msra.mxu0 0.0
        %948 = vmatpush.msra.mxu0 %v926
        %949 = vmatpush.msra.mxu0 %v925
        %950 = vmatpush.msra.mxu0 %v924
        %951 = vmatpush.msra.mxu0 %v923
        %952 = vmatmul.f32.gmra.mxu0 %v928
        %v953 = vpop.f32.mrf.mxu0
        %v954 = vadd.f32 0.0, %v953
        %955 = vmatmul.f32.gmra.mxu0 %v931
        %v956 = vpop.f32.mrf.mxu0
        %v957 = vadd.f32 0.0, %v956
        %958 = vmatmul.f32.gmra.mxu0 %v934
        %v959 = vpop.f32.mrf.mxu0
        %v960 = vadd.f32 0.0, %v959
        %961 = vdwg.mxu0
        %v962 = vadd.f32 %v911, %v954
        %v963 = vadd.f32 %v914, %v957
        %v964 = vadd.f32 %v917, %v960
        %s965 = scalar_lea.vmem %s5, 1
        %v966 = vld [vmem:[%s965] sm:$0x1]
        %v968 = vperm.slane %v966, 0
        %v970 = vadd.f32 %v962, %v968
        %v971 = vadd.f32 %v963, %v968
        %v972 = vadd.f32 %v964, %v968
        %v973 = vtanh.pop %v970
        %v974 = vtanh.pop %v971
        %v975 = vtanh.pop %v972
        %v976 = vxor.u32 %v970, 2147483648
        %v977 = vxor.u32 %v971, 2147483648
        %v978 = vxor.u32 %v972, 2147483648
        %v979 = vmul.f32 %v976, 1.442695
        %v980 = vpow.pop %v979
        %v981 = vmul.f32 %v977, 1.442695
        %v982 = vpow.pop %v981
        %v983 = vmul.f32 %v978, 1.442695
        %v984 = vpow.pop %v983
        %v985 = vadd.f32 %v980, 1.0
        %v986 = vadd.f32 %v982, 1.0
        %v987 = vadd.f32 %v984, 1.0
        %v988 = vrcp.pop %v985
        %v989 = vmul.f32 %v985, %v988
        %v990 = vsub.f32 1.0, %v989
        %v991 = vmul.f32 %v988, %v990
        %v992 = vadd.f32 %v988, %v991
        %vm993 = vweird.f32 %v985
        %vm994 = vweird.f32 %v988
        %vm995 = vmor %vm993, %vm994
        %v996 = vsel %vm995, %v988, %v992
        %v997 = vand.u32 2147483647, %v985
        %vm998 = vcmp.eq.f32.partialorder %v997, 8.507059e+37
        %v999 = vand.u32 %v985, 2147483648
        %v1000 = vor.u32 1.1754944e-38, %v999
        %v1001 = vsel %vm998, %v1000, %v996
        %v1002 = vmul.f32 1.0, %v1001
        %v1003 = vrcp.pop %v986
        %v1004 = vmul.f32 %v986, %v1003
        %v1005 = vsub.f32 1.0, %v1004
        %v1006 = vmul.f32 %v1003, %v1005
        %v1007 = vadd.f32 %v1003, %v1006
        %vm1008 = vweird.f32 %v986
        %vm1009 = vweird.f32 %v1003
        %vm1010 = vmor %vm1008, %vm1009
        %v1011 = vsel %vm1010, %v1003, %v1007
        %v1012 = vand.u32 2147483647, %v986
        %vm1013 = vcmp.eq.f32.partialorder %v1012, 8.507059e+37
        %v1014 = vand.u32 %v986, 2147483648
        %v1015 = vor.u32 1.1754944e-38, %v1014
        %v1016 = vsel %vm1013, %v1015, %v1011
        %v1017 = vmul.f32 1.0, %v1016
        %v1018 = vrcp.pop %v987
        %v1019 = vmul.f32 %v987, %v1018
        %v1020 = vsub.f32 1.0, %v1019
        %v1021 = vmul.f32 %v1018, %v1020
        %v1022 = vadd.f32 %v1018, %v1021
        %vm1023 = vweird.f32 %v987
        %vm1024 = vweird.f32 %v1018
        %vm1025 = vmor %vm1023, %vm1024
        %v1026 = vsel %vm1025, %v1018, %v1022
        %v1027 = vand.u32 2147483647, %v987
        %vm1028 = vcmp.eq.f32.partialorder %v1027, 8.507059e+37
        %v1029 = vand.u32 %v987, 2147483648
        %v1030 = vor.u32 1.1754944e-38, %v1029
        %v1031 = vsel %vm1028, %v1030, %v1026
        %v1032 = vmul.f32 1.0, %v1031
        %1036 = vrot.lane.b32.xlu0 %v1002, 96
        %v1037 = vpop.permute.xlu0 %1036
        %1038 = vrot.lane.b32.xlu0 %v1017, 96
        %v1039 = vpop.permute.xlu0 %1038
        %1040 = vrot.lane.b32.xlu0 %v1032, 96
        %v1041 = vpop.permute.xlu0 %1040
        %v1045 = vmul.f32 %v973, %v1037
        %v1046 = vmul.f32 %v974, %v1039
        %v1047 = vmul.f32 %v975, %v1041
        %s1048 = scalar_lea.vmem %s6, 32
        %v1049 = vld [vmem:[%s1048] sm:$0xff]
        %v1050 = vld [vmem:[%s1048 + $0x8] sm:$0xff]
        %v1051 = vld [vmem:[%s1048 + $0x10] sm:$0xff]
        %v1052 = vld [vmem:[%s1048 + $0x18] sm:$0xff]
        %s1053 = scalar_lea.vmem %s7, 1
        %v1054 = vld [vmem:[%s1053] sm:$0x1]
        %v1056 = vperm.slane %v1054, 0
        %v1059 = vsel %vm563, %v1045, 0
        %v1062 = vsel %vm563, %v1046, 0
        %v1065 = vsel %vm563, %v1047, 0
        %1067 = vmatpush.msra.mxu0 0.0
        %1068 = vmatpush.msra.mxu0 0.0
        %1069 = vmatpush.msra.mxu0 0.0
        %1070 = vmatpush.msra.mxu0 0.0
        %1071 = vmatpush.msra.mxu0 0.0
        %1072 = vmatpush.msra.mxu0 0.0
        %1073 = vmatpush.msra.mxu0 0.0
        %1074 = vmatpush.msra.mxu0 0.0
        %1075 = vmatpush.msra.mxu0 0.0
        %1076 = vmatpush.msra.mxu0 0.0
        %1077 = vmatpush.msra.mxu0 0.0
        %1078 = vmatpush.msra.mxu0 0.0
        %1079 = vmatpush.msra.mxu0 %v1052
        %1080 = vmatpush.msra.mxu0 %v1051
        %1081 = vmatpush.msra.mxu0 %v1050
        %1082 = vmatpush.msra.mxu0 %v1049
        %1083 = vmatmul.f32.gmra.mxu0 %v1059
        %v1084 = vpop.f32.mrf.mxu0
        %v1085 = vadd.f32 %v1056, %v1084
        %1086 = vmatmul.f32.gmra.mxu0 %v1062
        %v1087 = vpop.f32.mrf.mxu0
        %v1088 = vadd.f32 %v1056, %v1087
        %1089 = vmatmul.f32.gmra.mxu0 %v1065
        %v1090 = vpop.f32.mrf.mxu0
        %v1091 = vadd.f32 %v1056, %v1090
        %1092 = vdwg.mxu0
        %v1093 = vadd.f32 %v826, %v1085
        %v1094 = vadd.f32 %v827, %v1088
        %v1095 = vadd.f32 %v828, %v1091
        %v1096 = vmul.f32 %v1093, %v548
        %v1097 = vmul.f32 %v1094, %v553
        %v1098 = vmul.f32 %v1095, %v558
        %v1099 = vadd.f32 %v829, %v1088
        %1100 = vst.msk [vmem:[#allocation2 + $0x1] sm:$0xff] %vm563, %v1096
        %1101 = vst.msk [vmem:[#allocation2 + $0x9] sm:$0xff] %vm563, %v1097
        %1102 = vst.msk [vmem:[#allocation2 + $0x11] sm:$0xff] %vm563, %v1098
        %v1103 = vld [vmem:[#allocation2] sm:$0xff]
        %v1104 = vld [vmem:[#allocation2 + $0x8] sm:$0xff]
        %v1105 = vld [vmem:[#allocation2 + $0x10] sm:$0xff]
        %s1106 = scalar_lea.vmem [#allocation3], 192
        %v1107 = vld [vmem:[%s1106] sm:$0xff]
        %v1108 = vld [vmem:[%s1106 + $0x8] sm:$0xff]
        %v1109 = vld [vmem:[%s1106 + $0x10] sm:$0xff]
        %v1110 = vld [vmem:[%s1106 + $0x18] sm:$0xff]
        %v1111 = vld [vmem:[#allocation2 + $0x1] sm:$0xff]
        %v1112 = vld [vmem:[#allocation2 + $0x9] sm:$0xff]
        %v1113 = vld [vmem:[#allocation2 + $0x11] sm:$0xff]
        %s1114 = scalar_lea.vmem [#allocation3], 224
        %v1115 = vld [vmem:[%s1114] sm:$0xff]
        %v1116 = vld [vmem:[%s1114 + $0x8] sm:$0xff]
        %v1117 = vld [vmem:[%s1114 + $0x10] sm:$0xff]
        %v1118 = vld [vmem:[%s1114 + $0x18] sm:$0xff]
        %v1120 = vsel %vm563, %v1111, 0
        %v1123 = vsel %vm563, %v1112, 0
        %v1126 = vsel %vm563, %v1113, 0
        %1128 = vmatpush.msra.mxu0 0.0
        %1129 = vmatpush.msra.mxu0 0.0
        %1130 = vmatpush.msra.mxu0 0.0
        %1131 = vmatpush.msra.mxu0 0.0
        %1132 = vmatpush.msra.mxu0 0.0
        %1133 = vmatpush.msra.mxu0 0.0
        %1134 = vmatpush.msra.mxu0 0.0
        %1135 = vmatpush.msra.mxu0 0.0
        %1136 = vmatpush.msra.mxu0 0.0
        %1137 = vmatpush.msra.mxu0 0.0
        %1138 = vmatpush.msra.mxu0 0.0
        %1139 = vmatpush.msra.mxu0 0.0
        %1140 = vmatpush.msra.mxu0 %v1118
        %1141 = vmatpush.msra.mxu0 %v1117
        %1142 = vmatpush.msra.mxu0 %v1116
        %1143 = vmatpush.msra.mxu0 %v1115
        %1144 = vmatmul.f32.gmra.mxu0 %v1120
        %v1145 = vpop.f32.mrf.mxu0
        %1146 = vmatmul.f32.gmra.mxu0 %v1123
        %v1147 = vpop.f32.mrf.mxu0
        %v1148 = vadd.f32 0.0, %v1147
        %1149 = vmatmul.f32.gmra.mxu0 %v1126
        %v1150 = vpop.f32.mrf.mxu0
        %1151 = vdwg.mxu0
        %v1153 = vsel %vm563, %v1103, 0
        %v1156 = vsel %vm563, %v1104, 0
        %v1159 = vsel %vm563, %v1105, 0
        %1161 = vmatpush.msra.mxu0 0.0
        %1162 = vmatpush.msra.mxu0 0.0
        %1163 = vmatpush.msra.mxu0 0.0
        %1164 = vmatpush.msra.mxu0 0.0
        %1165 = vmatpush.msra.mxu0 0.0
        %1166 = vmatpush.msra.mxu0 0.0
        %1167 = vmatpush.msra.mxu0 0.0
        %1168 = vmatpush.msra.mxu0 0.0
        %1169 = vmatpush.msra.mxu0 0.0
        %1170 = vmatpush.msra.mxu0 0.0
        %1171 = vmatpush.msra.mxu0 0.0
        %1172 = vmatpush.msra.mxu0 0.0
        %1173 = vmatpush.msra.mxu0 %v1110
        %1174 = vmatpush.msra.mxu0 %v1109
        %1175 = vmatpush.msra.mxu0 %v1108
        %1176 = vmatpush.msra.mxu0 %v1107
        %1177 = vmatmul.f32.gmra.mxu0 %v1153
        %v1178 = vpop.f32.mrf.mxu0
        %1179 = vmatmul.f32.gmra.mxu0 %v1156
        %v1180 = vpop.f32.mrf.mxu0
        %v1181 = vadd.f32 %v1148, %v1180
        %1182 = vmatmul.f32.gmra.mxu0 %v1159
        %v1183 = vpop.f32.mrf.mxu0
        %1184 = vdwg.mxu0
        %v1185 = vld [vmem:[#allocation2 + $0x2] sm:$0xff]
        %v1186 = vld [vmem:[#allocation2 + $0xa] sm:$0xff]
        %v1187 = vld [vmem:[#allocation2 + $0x12] sm:$0xff]
        %s1188 = scalar_lea.vmem [#allocation3], 256
        %v1189 = vld [vmem:[%s1188] sm:$0xff]
        %v1190 = vld [vmem:[%s1188 + $0x8] sm:$0xff]
        %v1191 = vld [vmem:[%s1188 + $0x10] sm:$0xff]
        %v1192 = vld [vmem:[%s1188 + $0x18] sm:$0xff]
        %v1194 = vsel %vm563, %v1185, 0
        %v1197 = vsel %vm563, %v1186, 0
        %v1200 = vsel %vm563, %v1187, 0
        %1202 = vmatpush.msra.mxu0 0.0
        %1203 = vmatpush.msra.mxu0 0.0
        %1204 = vmatpush.msra.mxu0 0.0
        %1205 = vmatpush.msra.mxu0 0.0
        %1206 = vmatpush.msra.mxu0 0.0
        %1207 = vmatpush.msra.mxu0 0.0
        %1208 = vmatpush.msra.mxu0 0.0
        %1209 = vmatpush.msra.mxu0 0.0
        %1210 = vmatpush.msra.mxu0 0.0
        %1211 = vmatpush.msra.mxu0 0.0
        %1212 = vmatpush.msra.mxu0 0.0
        %1213 = vmatpush.msra.mxu0 0.0
        %1214 = vmatpush.msra.mxu0 %v1192
        %1215 = vmatpush.msra.mxu0 %v1191
        %1216 = vmatpush.msra.mxu0 %v1190
        %1217 = vmatpush.msra.mxu0 %v1189
        %1218 = vmatmul.f32.gmra.mxu0 %v1194
        %v1219 = vpop.f32.mrf.mxu0
        %1220 = vmatmul.f32.gmra.mxu0 %v1197
        %v1221 = vpop.f32.mrf.mxu0
        %v1222 = vadd.f32 0.0, %v1221
        %1223 = vmatmul.f32.gmra.mxu0 %v1200
        %v1224 = vpop.f32.mrf.mxu0
        %1225 = vdwg.mxu0
        %v1226 = vadd.f32 %v1181, %v1222
        %s1227 = scalar_lea.vmem %s5, 2
        %v1228 = vld [vmem:[%s1227] sm:$0x1]
        %v1230 = vperm.slane %v1228, 0
        %v1232 = vadd.f32 %v1226, %v1230
        %v1233 = vtanh.pop %v1232
        %v1234 = vxor.u32 %v1232, 2147483648
        %v1235 = vmul.f32 %v1234, 1.442695
        %v1236 = vpow.pop %v1235
        %v1237 = vadd.f32 %v1236, 1.0
        %v1238 = vrcp.pop %v1237
        %v1239 = vmul.f32 %v1237, %v1238
        %v1240 = vsub.f32 1.0, %v1239
        %v1241 = vmul.f32 %v1238, %v1240
        %v1242 = vadd.f32 %v1238, %v1241
        %vm1243 = vweird.f32 %v1237
        %vm1244 = vweird.f32 %v1238
        %vm1245 = vmor %vm1243, %vm1244
        %v1246 = vsel %vm1245, %v1238, %v1242
        %v1247 = vand.u32 2147483647, %v1237
        %vm1248 = vcmp.eq.f32.partialorder %v1247, 8.507059e+37
        %v1249 = vand.u32 %v1237, 2147483648
        %v1250 = vor.u32 1.1754944e-38, %v1249
        %v1251 = vsel %vm1248, %v1250, %v1246
        %v1252 = vmul.f32 1.0, %v1251
        %1254 = vrot.lane.b32.xlu0 %v1252, 96
        %v1255 = vpop.permute.xlu0 %1254
        %v1257 = vmul.f32 %v1233, %v1255
        %v1258 = vld [vmem:[%s8] sm:$0xff]
        %v1259 = vld [vmem:[%s8 + $0x8] sm:$0xff]
        %v1260 = vld [vmem:[%s8 + $0x10] sm:$0xff]
        %v1261 = vld [vmem:[%s8 + $0x18] sm:$0xff]
        %v1262 = vld [vmem:[%s9] sm:$0x1]
        %v1264 = vperm.slane %v1262, 0
        %v1267 = vsel %vm563, %v1257, 0
        %1269 = vmatpush.msra.mxu0 0.0
        %1270 = vmatpush.msra.mxu0 0.0
        %1271 = vmatpush.msra.mxu0 0.0
        %1272 = vmatpush.msra.mxu0 0.0
        %1273 = vmatpush.msra.mxu0 0.0
        %1274 = vmatpush.msra.mxu0 0.0
        %1275 = vmatpush.msra.mxu0 0.0
        %1276 = vmatpush.msra.mxu0 0.0
        %1277 = vmatpush.msra.mxu0 0.0
        %1278 = vmatpush.msra.mxu0 0.0
        %1279 = vmatpush.msra.mxu0 0.0
        %1280 = vmatpush.msra.mxu0 0.0
        %1281 = vmatpush.msra.mxu0 %v1261
        %1282 = vmatpush.msra.mxu0 %v1260
        %1283 = vmatpush.msra.mxu0 %v1259
        %1284 = vmatpush.msra.mxu0 %v1258
        %1285 = vmatmul.f32.gmra.mxu0 %v1267
        %v1286 = vpop.f32.mrf.mxu0
        %v1287 = vadd.f32 %v1264, %v1286
        %1288 = vdwg.mxu0
        %1290 = vrot.lane.b32.xlu0 %v1287, 32
        %v1291 = vpop.permute.xlu0 %1290
        %v1293 = vadd.f32 %v1099, %v1291
        %v1294 = vmul.f32 %v1293, %v553
        %v1295 = vld [vmem:[%s10] sm:$0xff]
        %v1296 = vld [vmem:[%s10 + $0x8] sm:$0xff]
        %v1297 = vld [vmem:[%s10 + $0x10] sm:$0xff]
        %v1298 = vld [vmem:[%s10 + $0x18] sm:$0xff]
        %v1299 = vld [vmem:[%s11] sm:$0x1]
        %v1301 = vperm.slane %v1299, 0
        %1304 = vrot.lane.b32.xlu0 %v1294, 96
        %v1305 = vpop.permute.xlu0 %1304
        %v1306 = vsel %vm563, %v1305, 0
        %1308 = vmatpush.msra.mxu0 0.0
        %1309 = vmatpush.msra.mxu0 0.0
        %1310 = vmatpush.msra.mxu0 0.0
        %1311 = vmatpush.msra.mxu0 0.0
        %1312 = vmatpush.msra.mxu0 0.0
        %1313 = vmatpush.msra.mxu0 0.0
        %1314 = vmatpush.msra.mxu0 0.0
        %1315 = vmatpush.msra.mxu0 0.0
        %1316 = vmatpush.msra.mxu0 0.0
        %1317 = vmatpush.msra.mxu0 0.0
        %1318 = vmatpush.msra.mxu0 0.0
        %1319 = vmatpush.msra.mxu0 0.0
        %1320 = vmatpush.msra.mxu0 %v1298
        %1321 = vmatpush.msra.mxu0 %v1297
        %1322 = vmatpush.msra.mxu0 %v1296
        %1323 = vmatpush.msra.mxu0 %v1295
        %1324 = vmatmul.f32.gmra.mxu0 %v1306
        %v1325 = vpop.f32.mrf.mxu0
        %v1326 = vadd.f32 %v1301, %v1325
        %1327 = vdwg.mxu0
        %v1328 = vmul.f32 %v1326, %v553
        %v1329 = vmul.f32 %v1328, 1.442695
        %v1330 = vpow.pop %v1329
        %v1331 = vmul.f32 %v492, %v1330
        %v1332 = vmul.f32 %v1331, %v553
        %1334 = vrot.lane.b32.xlu0 %v1332, 126
        %v1335 = vpop.permute.xlu0 %1334
        %v1337 = vsel %vm505, %v1335, 0.0
        %v1338 = vadd.f32 %v1328, %v1337
        %1339 = vst [vmem:[%s472] sm:$0xff] %v1338
        %s1340 = sand.u32 %s315, 1
        %s1341 = scalar_lea.sflag [#allocation5], %s1340
        %s1342 = sand.u32 %s315, 1
        %s1343 = smul.addr %s1342, 8
        %s1344 = scalar_lea.vmem [#allocation6], %s1343
        // Predicated region
        $region73: #{tpu_custom_call.1} parent=67 // pred_check
          %p1345 = pneg %p325
        $region74: #{tpu_custom_call.1} parent=67 // pred_check_branch
          %1347 = sbr.rel (%p1345) target = $region76
        $region75: #{tpu_custom_call.1} parent=67 // pred_region
          %1349 = vsyncadd %s1341, 0
          %s1350 = smul.addr %s31, 2
          %s1351 = sadd.s32 %s32, %s1350
          %s1352 = smul.addr %s1351, 8
          %s1353 = scalar_lea.hbm %s12, %s1352
          %s1355 = sshll.u32 %s1344, 4
          %s1356 = int_to_ptr.vmem [resolvable:$true] %s1355
          %s1357 = sshll.u32 %s1353, 4
          %s1358 = int_to_ptr.hbm [resolvable:$true] %s1357
          %1360 = dma.vmem_to_hbm [thread:$0]  %s1356, 128, %s1358, %s1341
        $region76: #{tpu_custom_call.1} parent=67 // pred_fallthru
          _
      $region68: #{tpu_custom_call.1} parent=5 // pred_fallthru
        _
      %p1361 = scmp.le.s32.totalorder 2, %s22
      // Predicated region
      $region77: #{tpu_custom_call.1} parent=5 // pred_check
        %p1362 = pneg %p1361
      $region78: #{tpu_custom_call.1} parent=5 // pred_check_branch
        %1364 = sbr.rel (%p1362) target = $region80
      $region79: #{tpu_custom_call.1} parent=5 // pred_region
        %s1365 = ssub.s32 %s22, 2
        // Predicated region
        $region81: #{tpu_custom_call.1} parent=79 // pred_check
          %p1366 = pneg %p331
        $region82: #{tpu_custom_call.1} parent=79 // pred_check_branch
          %1368 = sbr.rel (%p1366) target = $region84
        $region83: #{tpu_custom_call.1} parent=79 // pred_region
          %s1369 = sand.u32 %s316, 1
          %s1370 = scalar_lea.sflag [#allocation5], %s1369
          %s1371 = sand.u32 %s316, 1
          %s1372 = smul.addr %s1371, 8
          %s1373 = scalar_lea.vmem [#allocation6], %s1372
          %1375 = dma.done %s1370, 128
        $region84: #{tpu_custom_call.1} parent=79 // pred_fallthru
          _
      $region80: #{tpu_custom_call.1} parent=5 // pred_fallthru
        _
    $region6: #{tpu_custom_call.1} parent=1 // loop_footer
      %s26 = sadd.s32 1, %s22
    $region7: #{tpu_custom_call.1} parent=1 // loop_footer_branch
      %21 = sbr.rel target = $region3
    $region8: #{tpu_custom_call.1} parent=1 // loop_exit
      _
    %1376 = vsyncpa [#allocation4], 1
    %s1377 = scalar_lea.sflag [#allocation4], 1
    %1378 = vsyncpa %s1377, 1
    %1379 = vsyncpa [#allocation5], 1
    %s1380 = scalar_lea.sflag [#allocation5], 1
    %1381 = vsyncpa %s1380, 1

</llo_original>
